<compile_context>
chip_gen: v7x
topology: tpu7x:2x2x1
jax: 0.10.0
libtpu: 0.0.40
codegen_flags: <defaults>
</compile_context>

<pallas_src>
import functools
import math

import jax
import jax.numpy as jnp
from jax import lax
from jax.experimental import pallas as pl
from jax.experimental.pallas import tpu as pltpu

_EPS = 1e-5
_VMEM_LIMIT = 48 * 1024 * 1024   # < 64 MiB physical on v7x, ample on v5e/v6e


def _round_up(n, m):
    return ((n + m - 1) // m) * m


def _choose_tile(n, cap):
    """Largest multiple-of-8 tile <= cap; returns (tile, padded_n)."""
    t = min(cap, _round_up(n, 8))
    return t, _round_up(n, t)


def _conv_chain(x, weights, affines):
    """x @ w0, then for each (a, c), w: relu(h*a + c) (folded BN) -> bf16 -> @ w.

    All matmuls run on the MXU in bf16 with f32 accumulation; biases feeding
    training-mode BN are omitted (they cancel exactly through the mean).
    """
    h = jnp.dot(x, weights[0], preferred_element_type=jnp.float32)
    for (a, c), w in zip(affines, weights[1:]):
        r = jnp.maximum(h * a + c, 0.0).astype(jnp.bfloat16)
        h = jnp.dot(r, w, preferred_element_type=jnp.float32)
    return h


# --------------------------------------------------------------------------
# Pass 1 / 2: stats-only conv layers over flattened (B*N) rows.
# --------------------------------------------------------------------------
def _stats_kernel(*refs, n_weights, rows_real, tile_rows):
    it = iter(refs)
    x_ref = next(it)
    w_refs = [next(it)]
    aff_refs = []
    for _ in range(n_weights - 1):
        a = next(it); c = next(it); w = next(it)
        aff_refs.append((a, c))
        w_refs.append(w)
    sum_ref = next(it)
    sq_ref = next(it)

    h = _conv_chain(x_ref[...],
                    [w[...] for w in w_refs],
                    [(a[...], c[...]) for a, c in aff_refs])

    # mask padded rows out of the single-pass BN statistics
    start = pl.program_id(0) * tile_rows
    rows = lax.broadcasted_iota(jnp.int32, (tile_rows, 1), 0) + start
    mask = rows < rows_real
    hm = jnp.where(mask, h, 0.0)
    sum_ref[0] = jnp.sum(hm, axis=0, keepdims=True)
    sq_ref[0] = jnp.sum(hm * hm, axis=0, keepdims=True)


def _stats_pass(x_rows, weights, affines, *, rows_real, tile_rows):
    """x_rows: (R_pad, Cin) bf16 flattened rows; emits (n_t, 1, Cout) partials."""
    R_pad, _ = x_rows.shape
    cout = weights[-1].shape[1]
    n_t = R_pad // tile_rows

    in_specs = [pl.BlockSpec((tile_rows, x_rows.shape[1]), lambda t: (t, 0)),
                pl.BlockSpec(weights[0].shape, lambda t: (0, 0))]
    inputs = [x_rows, weights[0]]
    for (a, c), w in zip(affines, weights[1:]):
        in_specs += [pl.BlockSpec(a.shape, lambda t: (0, 0)),
                     pl.BlockSpec(c.shape, lambda t: (0, 0)),
                     pl.BlockSpec(w.shape, lambda t: (0, 0))]
        inputs += [a, c, w]

    stat_shape = jax.ShapeDtypeStruct((n_t, 1, cout), jnp.float32)
    stat_spec = pl.BlockSpec((1, 1, cout), lambda t: (t, 0, 0))

    kernel = functools.partial(_stats_kernel, n_weights=len(weights),
                               rows_real=rows_real, tile_rows=tile_rows)
    return pl.pallas_call(
        kernel,
        grid=(n_t,),
        in_specs=in_specs,
        out_specs=(stat_spec, stat_spec),
        out_shape=(stat_shape, stat_shape),
        compiler_params=pltpu.CompilerParams(
            dimension_semantics=("parallel",),
            vmem_limit_bytes=_VMEM_LIMIT),
    )(*inputs)


# --------------------------------------------------------------------------
# Pass 3: conv3 with per-batch max/min (never materialises the 1024-wide act).
# --------------------------------------------------------------------------
def _conv3_kernel(x_ref, w1_ref, a1_ref, c1_ref, w2_ref, a2_ref, c2_ref, w3_ref,
                  sum_ref, sq_ref, mx_ref, mn_ref, *, n_real, tile_n):
    h = _conv_chain(x_ref[0],
                    [w1_ref[...], w2_ref[...], w3_ref[...]],
                    [(a1_ref[...], c1_ref[...]), (a2_ref[...], c2_ref[...])])

    start = pl.program_id(1) * tile_n
    rows = lax.broadcasted_iota(jnp.int32, (tile_n, 1), 0) + start
    mask = rows < n_real
    hm = jnp.where(mask, h, 0.0)
    sum_ref[0, 0] = jnp.sum(hm, axis=0, keepdims=True)
    sq_ref[0, 0] = jnp.sum(hm * hm, axis=0, keepdims=True)
    mx_ref[0, 0] = jnp.max(jnp.where(mask, h, -jnp.inf), axis=0, keepdims=True)
    mn_ref[0, 0] = jnp.min(jnp.where(mask, h, jnp.inf), axis=0, keepdims=True)


def _conv3_pass(x_bnc, w1, a1, c1, w2, a2, c2, w3, *, n_real, tile_n):
    B, N_pad, k = x_bnc.shape
    cout = w3.shape[1]
    n_t = N_pad // tile_n

    def const_spec(shape):
        return pl.BlockSpec(shape, lambda b, t: (0,) * len(shape))

    in_specs = [pl.BlockSpec((1, tile_n, k), lambda b, t: (b, t, 0)),
                const_spec(w1.shape), const_spec(a1.shape), const_spec(c1.shape),
                const_spec(w2.shape), const_spec(a2.shape), const_spec(c2.shape),
                const_spec(w3.shape)]
    inputs = [x_bnc, w1, a1, c1, w2, a2, c2, w3]

    stat_shape = jax.ShapeDtypeStruct((B, n_t, 1, cout), jnp.float32)
    stat_spec = pl.BlockSpec((1, 1, 1, cout), lambda b, t: (b, t, 0, 0))

    kernel = functools.partial(_conv3_kernel, n_real=n_real, tile_n=tile_n)
    return pl.pallas_call(
        kernel,
        grid=(B, n_t),
        in_specs=in_specs,
        out_specs=(stat_spec,) * 4,
        out_shape=(stat_shape,) * 4,
        compiler_params=pltpu.CompilerParams(
            dimension_semantics=("parallel", "parallel"),
            vmem_limit_bytes=_VMEM_LIMIT),
    )(*inputs)


# --------------------------------------------------------------------------
# Small FC head (1024->512->256->k^2), VMEM-resident.
# --------------------------------------------------------------------------
def _fc_kernel(maxh_ref, minh_ref, a3_ref, c3_ref,
               wf1_ref, g4_ref, be4_ref,
               wf2_ref, g5_ref, be5_ref,
               wf3_ref, bf3_ref, out_ref):
    a3 = a3_ref[...]
    c3 = c3_ref[...]
    # max_n relu(a*h + c) == relu(a * (max h if a>=0 else min h) + c)
    pre = jnp.where(a3 >= 0.0, maxh_ref[...], minh_ref[...])
    pooled = jnp.maximum(pre * a3 + c3, 0.0)                  # (B, 1024) f32

    def fc_bn_relu(h, w_ref, g_ref, be_ref):
        # fc bias feeding training-mode BN cancels exactly -> omitted
        f = jnp.dot(h.astype(jnp.bfloat16), w_ref[...],
                    preferred_element_type=jnp.float32)
        mean = jnp.mean(f, axis=0, keepdims=True)
        var = jnp.maximum(jnp.mean(f * f, axis=0, keepdims=True) - mean * mean, 0.0)
        a = g_ref[...] * lax.rsqrt(var + _EPS)
        c = be_ref[...] - mean * a
        return jnp.maximum(f * a + c, 0.0)

    f = fc_bn_relu(pooled, wf1_ref, g4_ref, be4_ref)
    f = fc_bn_relu(f, wf2_ref, g5_ref, be5_ref)
    out_ref[...] = (jnp.dot(f, wf3_ref[...], preferred_element_type=jnp.float32)
                    + bf3_ref[...])


def _fold_bn(sum_part, sq_part, gamma, beta, count):
    """Fold training-mode BN (biased stats) into per-channel a, c of shape (1, C)."""
    red = tuple(range(sum_part.ndim - 2))
    s = jnp.sum(sum_part, axis=red)
    q = jnp.sum(sq_part, axis=red)
    mean = s / count
    var = jnp.maximum(q / count - mean * mean, 0.0)   # single-pass variance
    a = gamma * lax.rsqrt(var + _EPS)
    c = beta - mean * a
    return a, c


# --------------------------------------------------------------------------
# Forward
# --------------------------------------------------------------------------
def tnet_forward(x, params, *, conv3_tile=512, row_tile=2048):
    """x: (B, k, N) float32, NCW like the PyTorch module. Returns (B, k, k)."""
    (w1, b1, g1, be1, w2, b2, g2, be2, w3, b3, g3, be3,
     wf1, bf1, g4, be4, wf2, bf2, g5, be5, wf3, bf3) = params
    del b1, b2, b3, bf1, bf2   # biases before training-mode BN cancel exactly
    B, k, N = x.shape
    cnt = float(B * N)

    w1b = w1.astype(jnp.bfloat16)
    w2b = w2.astype(jnp.bfloat16)
    w3b = w3.astype(jnp.bfloat16)

    x_bnc_f32 = jnp.transpose(x, (0, 2, 1))                  # (B, N, k), channels-last

    # flattened-row layout for the pointwise conv1/conv2 stat passes
    R = B * N
    tile_r, R_pad = _choose_tile(R, row_tile)
    x_rows = x_bnc_f32.reshape(R, k)
    if R_pad != R:
        x_rows = jnp.pad(x_rows, ((0, R_pad - R), (0, 0)))
    x_rows = x_rows.astype(jnp.bfloat16)

    # per-batch padded layout for conv3 (max-pool needs per-batch rows)
    tile_n, N_pad = _choose_tile(N, conv3_tile)
    x_bnc = x_bnc_f32
    if N_pad != N:
        x_bnc = jnp.pad(x_bnc, ((0, 0), (0, N_pad - N), (0, 0)))
    x_bnc = x_bnc.astype(jnp.bfloat16)

    # pass 1: conv1 (k -> 64) BN stats only (h1 never hits HBM)
    s1, q1 = _stats_pass(x_rows, [w1b], [], rows_real=R, tile_rows=tile_r)
    a1, c1 = _fold_bn(s1, q1, g1, be1, cnt)

    # pass 2: recompute conv1 + BN1 + ReLU, conv2 (64 -> 128) BN stats only
    s2, q2 = _stats_pass(x_rows, [w1b, w2b], [(a1, c1)],
                         rows_real=R, tile_rows=tile_r)
    a2, c2 = _fold_bn(s2, q2, g2, be2, cnt)

    # pass 3: recompute conv1->conv2 chain, conv3 (128 -> 1024) stats + max/min
    s3, q3, mx3, mn3 = _conv3_pass(x_bnc, w1b, a1, c1, w2b, a2, c2, w3b,
                                   n_real=N, tile_n=tile_n)
    a3, c3 = _fold_bn(s3, q3, g3, be3, cnt)
    maxh = jnp.max(mx3[:, :, 0, :], axis=1)                  # (B, 1024)
    minh = jnp.min(mn3[:, :, 0, :], axis=1)                  # (B, 1024)

    # FC head (negligible FLOPs) -> one small VMEM-resident kernel
    vspec = pl.BlockSpec(memory_space=pltpu.MemorySpace.VMEM)
    fc_inputs = [maxh, minh, a3, c3,
                 wf1.astype(jnp.bfloat16), g4, be4,
                 wf2.astype(jnp.bfloat16), g5, be5,
                 wf3, bf3]
    f = pl.pallas_call(
        _fc_kernel,
        out_shape=jax.ShapeDtypeStruct((B, k * k), jnp.float32),
        in_specs=[vspec] * len(fc_inputs),
        out_specs=vspec,
        compiler_params=pltpu.CompilerParams(vmem_limit_bytes=_VMEM_LIMIT),
    )(*fc_inputs)

    # identity add hoisted out of the kernel epilogue
    f = f + jnp.eye(k, dtype=jnp.float32).reshape(1, k * k)
    return f.reshape(B, k, k)


# --------------------------------------------------------------------------
# Parameters + pure-JAX reference
# --------------------------------------------------------------------------
def init_params(key, k):
    """Deterministic synthetic parameters (PyTorch-style uniform init).
    Weights stored as (C_in, C_out) so kernels can matmul directly."""
    ks = jax.random.split(key, 12)

    def u(kk, shape, fan_in):
        b = 1.0 / math.sqrt(fan_in)
        return jax.random.uniform(kk, shape, jnp.float32, -b, b)

    def ones(c):
        return jnp.ones((1, c), jnp.float32)

    def zeros(c):
        return jnp.zeros((1, c), jnp.float32)

    return [
        # conv1 (k -> 64), bn1
        u(ks[0], (k, 64), k), u(ks[1], (1, 64), k), ones(64), zeros(64),
        # conv2 (64 -> 128), bn2
        u(ks[2], (64, 128), 64), u(ks[3], (1, 128), 64), ones(128), zeros(128),
        # conv3 (128 -> 1024), bn3
        u(ks[4], (128, 1024), 128), u(ks[5], (1, 1024), 128), ones(1024), zeros(1024),
        # fc1 (1024 -> 512), bn4
        u(ks[6], (1024, 512), 1024), u(ks[7], (1, 512), 1024), ones(512), zeros(512),
        # fc2 (512 -> 256), bn5
        u(ks[8], (512, 256), 512), u(ks[9], (1, 256), 512), ones(256), zeros(256),
        # fc3 (256 -> k*k)
        u(ks[10], (256, k * k), 256), u(ks[11], (1, k * k), 256),
    ]


def tnet_reference(x, params):
    """Pure-JAX f32 reference mirroring the PyTorch forward (training-mode BN)."""
    (w1, b1, g1, be1, w2, b2, g2, be2, w3, b3, g3, be3,
     wf1, bf1, g4, be4, wf2, bf2, g5, be5, wf3, bf3) = params
    B, k, N = x.shape

    def bn_relu(h, g, b):
        mean = jnp.mean(h, axis=0, keepdims=True)
        var = jnp.mean((h - mean) ** 2, axis=0, keepdims=True)
        return jnp.maximum((h - mean) / jnp.sqrt(var + _EPS) * g + b, 0.0)

    h = jnp.transpose(x, (0, 2, 1)).reshape(B * N, k)
    h = bn_relu(h @ w1 + b1, g1, be1)
    h = bn_relu(h @ w2 + b2, g2, be2)
    h = bn_relu(h @ w3 + b3, g3, be3)
    pooled = jnp.max(h.reshape(B, N, -1), axis=1)
    f = bn_relu(pooled @ wf1 + bf1, g4, be4)
    f = bn_relu(f @ wf2 + bf2, g5, be5)
    f = f @ wf3 + bf3
    f = f + jnp.eye(k, dtype=jnp.float32).reshape(1, k * k)
    return f.reshape(B, k, k)


if __name__ == "__main__":
    # B=4, k=4 (input-transform T-Net), N=36 points (exercises the padded /
    # masked non-divisible-N path).
    B, k, N = 4, 4, 36
    key = jax.random.PRNGKey(0)
    kx, kp = jax.random.split(key)
    x = jax.random.normal(kx, (B, k, N), dtype=jnp.float32)
    params = init_params(kp, k)

    fwd = jax.jit(tnet_forward)
    out = jax.block_until_ready(fwd(x, params))
    ref = tnet_reference(x, params)

    assert out.shape == (B, k, k), out.shape
    max_err = float(jnp.max(jnp.abs(out - ref)))
    assert jnp.allclose(out, ref, rtol=5e-2, atol=5e-2), max_err

    print("KERNEL_OK")
</pallas_src>

<mosaic_0001>
module attributes {stable_mosaic.version = 11 : i64} {
  func.func @_stats_kernel(%arg0: i32, %arg1: memref<144x4xbf16, #tpu.memory_space<vmem>>, %arg2: memref<4x64xbf16, #tpu.memory_space<vmem>>, %arg3: memref<1x1x64xf32, #tpu.memory_space<vmem>>, %arg4: memref<1x1x64xf32, #tpu.memory_space<vmem>>) attributes {dimension_semantics = [#tpu.dimension_semantics<parallel>], iteration_bounds = array<i64: 1>, scalar_prefetch = 0 : i64, scratch_operands = 0 : i64, tpu.core_type = #tpu.core_type<tc>, window_params = [{transform_indices = @transform_0, window_bounds = array<i64: 144, 4>}, {pipeline_mode = #tpu.pipeline_mode<synchronous>, transform_indices = @transform_1, window_bounds = array<i64: 4, 64>}, {transform_indices = @transform_2, window_bounds = array<i64: 1, 1, 64>}, {transform_indices = @transform_3, window_bounds = array<i64: 1, 1, 64>}]} {
    %c0 = arith.constant 0 : index
    %c0_0 = arith.constant 0 : index
    %0 = vector.load %arg1[%c0, %c0_0] : memref<144x4xbf16, #tpu.memory_space<vmem>>, vector<144x4xbf16>
    %c0_1 = arith.constant 0 : index
    %c0_2 = arith.constant 0 : index
    %1 = vector.load %arg2[%c0_1, %c0_2] : memref<4x64xbf16, #tpu.memory_space<vmem>>, vector<4x64xbf16>
    %cst = arith.constant dense<0.000000e+00> : vector<144x64xf32>
    %2 = tpu.matmul %0, %1, %cst {dimension_numbers = #tpu.dot_dimension_numbers<[1], [0], [0], [1], [0, 0, 1, 1], [], []>} : vector<144x4xbf16>, vector<4x64xbf16>, vector<144x64xf32> -> vector<144x64xf32>
    %c144_i32 = arith.constant 144 : i32
    %3 = arith.muli %arg0, %c144_i32 : i32
    %4 = tpu.iota {dimensions = array<i32: 0>} : vector<144x1xi32>
    %5 = vector.broadcast %3 : i32 to vector<144x1xi32>
    %6 = arith.addi %4, %5 : vector<144x1xi32>
    %c144_i32_3 = arith.constant 144 : i32
    %7 = vector.broadcast %c144_i32_3 : i32 to vector<144x1xi32>
    %8 = arith.cmpi slt, %6, %7 : vector<144x1xi32>
    %cst_4 = arith.constant 0.000000e+00 : f32
    %9 = vector.shape_cast %8 : vector<144x1xi1> to vector<144x1xi1>
    %10 = vector.broadcast %9 : vector<144x1xi1> to vector<144x64xi1>
    %11 = vector.broadcast %cst_4 : f32 to vector<144x64xf32>
    %12 = arith.select %10, %2, %11 : vector<144x64xi1>, vector<144x64xf32>
    %cst_5 = arith.constant dense<0.000000e+00> : vector<64xf32>
    %13 = vector.multi_reduction <add>, %12, %cst_5 [0] : vector<144x64xf32> to vector<64xf32>
    %14 = vector.shape_cast %13 : vector<64xf32> to vector<1x64xf32>
    %c0_6 = arith.constant 0 : index
    %c0_7 = arith.constant 0 : index
    %c0_8 = arith.constant 0 : index
    %15 = vector.load %arg3[%c0_6, %c0_7, %c0_8] : memref<1x1x64xf32, #tpu.memory_space<vmem>>, vector<1x1x64xf32>
    %16 = vector.shape_cast %15 : vector<1x1x64xf32> to vector<1x64xf32>
    %17 = vector.shape_cast %14 : vector<1x64xf32> to vector<1x1x64xf32>
    tpu.vector_store %arg3[%c0_6, %c0_7, %c0_8], %17 {strides = array<i32>} : memref<1x1x64xf32, #tpu.memory_space<vmem>>, vector<1x1x64xf32>,
    %18 = arith.mulf %12, %12 : vector<144x64xf32>
    %cst_9 = arith.constant dense<0.000000e+00> : vector<64xf32>
    %19 = vector.multi_reduction <add>, %18, %cst_9 [0] : vector<144x64xf32> to vector<64xf32>
    %20 = vector.shape_cast %19 : vector<64xf32> to vector<1x64xf32>
    %c0_10 = arith.constant 0 : index
    %c0_11 = arith.constant 0 : index
    %c0_12 = arith.constant 0 : index
    %21 = vector.load %arg4[%c0_10, %c0_11, %c0_12] : memref<1x1x64xf32, #tpu.memory_space<vmem>>, vector<1x1x64xf32>
    %22 = vector.shape_cast %21 : vector<1x1x64xf32> to vector<1x64xf32>
    %23 = vector.shape_cast %20 : vector<1x64xf32> to vector<1x1x64xf32>
    tpu.vector_store %arg4[%c0_10, %c0_11, %c0_12], %23 {strides = array<i32>} : memref<1x1x64xf32, #tpu.memory_space<vmem>>, vector<1x1x64xf32>,
    return
  }
  func.func @transform_0(%arg0: i32) -> (i32, i32) {
    %c0_i32 = arith.constant 0 : i32
    %c0_i32_0 = arith.constant 0 : i32
    return %arg0, %c0_i32 : i32, i32
  }
  func.func @transform_1(%arg0: i32) -> (i32, i32) {
    %c0_i32 = arith.constant 0 : i32
    %c0_i32_0 = arith.constant 0 : i32
    %c0_i32_1 = arith.constant 0 : i32
    return %c0_i32, %c0_i32_0 : i32, i32
  }
  func.func @transform_2(%arg0: i32) -> (i32, i32, i32) {
    %c0_i32 = arith.constant 0 : i32
    %c0_i32_0 = arith.constant 0 : i32
    %c0_i32_1 = arith.constant 0 : i32
    return %arg0, %c0_i32, %c0_i32_0 : i32, i32, i32
  }
  func.func @transform_3(%arg0: i32) -> (i32, i32, i32) {
    %c0_i32 = arith.constant 0 : i32
    %c0_i32_0 = arith.constant 0 : i32
    %c0_i32_1 = arith.constant 0 : i32
    return %arg0, %c0_i32, %c0_i32_0 : i32, i32, i32
  }
}

module attributes {stable_mosaic.version = 11 : i64} {
  func.func @_stats_kernel(%arg0: i32, %arg1: memref<144x4xbf16, #tpu.memory_space<vmem>>, %arg2: memref<4x64xbf16, #tpu.memory_space<vmem>>, %arg3: memref<1x64xf32, #tpu.memory_space<vmem>>, %arg4: memref<1x64xf32, #tpu.memory_space<vmem>>, %arg5: memref<64x128xbf16, #tpu.memory_space<vmem>>, %arg6: memref<1x1x128xf32, #tpu.memory_space<vmem>>, %arg7: memref<1x1x128xf32, #tpu.memory_space<vmem>>) attributes {dimension_semantics = [#tpu.dimension_semantics<parallel>], iteration_bounds = array<i64: 1>, scalar_prefetch = 0 : i64, scratch_operands = 0 : i64, tpu.core_type = #tpu.core_type<tc>, window_params = [{transform_indices = @transform_0, window_bounds = array<i64: 144, 4>}, {pipeline_mode = #tpu.pipeline_mode<synchronous>, transform_indices = @transform_1, window_bounds = array<i64: 4, 64>}, {pipeline_mode = #tpu.pipeline_mode<synchronous>, transform_indices = @transform_2, window_bounds = array<i64: 1, 64>}, {pipeline_mode = #tpu.pipeline_mode<synchronous>, transform_indices = @transform_3, window_bounds = array<i64: 1, 64>}, {pipeline_mode = #tpu.pipeline_mode<synchronous>, transform_indices = @transform_4, window_bounds = array<i64: 64, 128>}, {transform_indices = @transform_5, window_bounds = array<i64: 1, 1, 128>}, {transform_indices = @transform_6, window_bounds = array<i64: 1, 1, 128>}]} {
    %c0 = arith.constant 0 : index
    %c0_0 = arith.constant 0 : index
    %0 = vector.load %arg1[%c0, %c0_0] : memref<144x4xbf16, #tpu.memory_space<vmem>>, vector<144x4xbf16>
    %c0_1 = arith.constant 0 : index
    %c0_2 = arith.constant 0 : index
    %1 = vector.load %arg2[%c0_1, %c0_2] : memref<4x64xbf16, #tpu.memory_space<vmem>>, vector<4x64xbf16>
    %c0_3 = arith.constant 0 : index
    %c0_4 = arith.constant 0 : index
    %2 = vector.load %arg5[%c0_3, %c0_4] : memref<64x128xbf16, #tpu.memory_space<vmem>>, vector<64x128xbf16>
    %c0_5 = arith.constant 0 : index
    %c0_6 = arith.constant 0 : index
    %3 = vector.load %arg3[%c0_5, %c0_6] : memref<1x64xf32, #tpu.memory_space<vmem>>, vector<1x64xf32>
    %c0_7 = arith.constant 0 : index
    %c0_8 = arith.constant 0 : index
    %4 = vector.load %arg4[%c0_7, %c0_8] : memref<1x64xf32, #tpu.memory_space<vmem>>, vector<1x64xf32>
    %cst = arith.constant dense<0.000000e+00> : vector<144x64xf32>
    %5 = tpu.matmul %0, %1, %cst {dimension_numbers = #tpu.dot_dimension_numbers<[1], [0], [0], [1], [0, 0, 1, 1], [], []>} : vector<144x4xbf16>, vector<4x64xbf16>, vector<144x64xf32> -> vector<144x64xf32>
    %6 = vector.broadcast %3 : vector<1x64xf32> to vector<144x64xf32>
    %7 = arith.mulf %5, %6 : vector<144x64xf32>
    %8 = vector.broadcast %4 : vector<1x64xf32> to vector<144x64xf32>
    %9 = arith.addf %7, %8 : vector<144x64xf32>
    %cst_9 = arith.constant 0.000000e+00 : f32
    %10 = vector.broadcast %cst_9 : f32 to vector<144x64xf32>
    %11 = arith.maximumf %9, %10 : vector<144x64xf32>
    %12 = arith.truncf %11 : vector<144x64xf32> to vector<144x64xbf16>
    %cst_10 = arith.constant dense<0.000000e+00> : vector<144x128xf32>
    %13 = tpu.matmul %12, %2, %cst_10 {dimension_numbers = #tpu.dot_dimension_numbers<[1], [0], [0], [1], [0, 0, 1, 1], [], []>} : vector<144x64xbf16>, vector<64x128xbf16>, vector<144x128xf32> -> vector<144x128xf32>
    %c144_i32 = arith.constant 144 : i32
    %14 = arith.muli %arg0, %c144_i32 : i32
    %15 = tpu.iota {dimensions = array<i32: 0>} : vector<144x1xi32>
    %16 = vector.broadcast %14 : i32 to vector<144x1xi32>
    %17 = arith.addi %15, %16 : vector<144x1xi32>
    %c144_i32_11 = arith.constant 144 : i32
    %18 = vector.broadcast %c144_i32_11 : i32 to vector<144x1xi32>
    %19 = arith.cmpi slt, %17, %18 : vector<144x1xi32>
    %cst_12 = arith.constant 0.000000e+00 : f32
    %20 = vector.shape_cast %19 : vector<144x1xi1> to vector<144x1xi1>
    %21 = vector.broadcast %20 : vector<144x1xi1> to vector<144x128xi1>
    %22 = vector.broadcast %cst_12 : f32 to vector<144x128xf32>
    %23 = arith.select %21, %13, %22 : vector<144x128xi1>, vector<144x128xf32>
    %cst_13 = arith.constant dense<0.000000e+00> : vector<128xf32>
    %24 = vector.multi_reduction <add>, %23, %cst_13 [0] : vector<144x128xf32> to vector<128xf32>
    %25 = vector.shape_cast %24 : vector<128xf32> to vector<1x128xf32>
    %c0_14 = arith.constant 0 : index
    %c0_15 = arith.constant 0 : index
    %c0_16 = arith.constant 0 : index
    %26 = vector.load %arg6[%c0_14, %c0_15, %c0_16] : memref<1x1x128xf32, #tpu.memory_space<vmem>>, vector<1x1x128xf32>
    %27 = vector.shape_cast %26 : vector<1x1x128xf32> to vector<1x128xf32>
    %28 = vector.shape_cast %25 : vector<1x128xf32> to vector<1x1x128xf32>
    tpu.vector_store %arg6[%c0_14, %c0_15, %c0_16], %28 {strides = array<i32>} : memref<1x1x128xf32, #tpu.memory_space<vmem>>, vector<1x1x128xf32>,
    %29 = arith.mulf %23, %23 : vector<144x128xf32>
    %cst_17 = arith.constant dense<0.000000e+00> : vector<128xf32>
    %30 = vector.multi_reduction <add>, %29, %cst_17 [0] : vector<144x128xf32> to vector<128xf32>
    %31 = vector.shape_cast %30 : vector<128xf32> to vector<1x128xf32>
    %c0_18 = arith.constant 0 : index
    %c0_19 = arith.constant 0 : index
    %c0_20 = arith.constant 0 : index
    %32 = vector.load %arg7[%c0_18, %c0_19, %c0_20] : memref<1x1x128xf32, #tpu.memory_space<vmem>>, vector<1x1x128xf32>
    %33 = vector.shape_cast %32 : vector<1x1x128xf32> to vector<1x128xf32>
    %34 = vector.shape_cast %31 : vector<1x128xf32> to vector<1x1x128xf32>
    tpu.vector_store %arg7[%c0_18, %c0_19, %c0_20], %34 {strides = array<i32>} : memref<1x1x128xf32, #tpu.memory_space<vmem>>, vector<1x1x128xf32>,
    return
  }
  func.func @transform_0(%arg0: i32) -> (i32, i32) {
    %c0_i32 = arith.constant 0 : i32
    %c0_i32_0 = arith.constant 0 : i32
    return %arg0, %c0_i32 : i32, i32
  }
  func.func @transform_1(%arg0: i32) -> (i32, i32) {
    %c0_i32 = arith.constant 0 : i32
    %c0_i32_0 = arith.constant 0 : i32
    %c0_i32_1 = arith.constant 0 : i32
    return %c0_i32, %c0_i32_0 : i32, i32
  }
  func.func @transform_2(%arg0: i32) -> (i32, i32) {
    %c0_i32 = arith.constant 0 : i32
    %c0_i32_0 = arith.constant 0 : i32
    %c0_i32_1 = arith.constant 0 : i32
    return %c0_i32, %c0_i32_0 : i32, i32
  }
  func.func @transform_3(%arg0: i32) -> (i32, i32) {
    %c0_i32 = arith.constant 0 : i32
    %c0_i32_0 = arith.constant 0 : i32
    %c0_i32_1 = arith.constant 0 : i32
    return %c0_i32, %c0_i32_0 : i32, i32
  }
  func.func @transform_4(%arg0: i32) -> (i32, i32) {
    %c0_i32 = arith.constant 0 : i32
    %c0_i32_0 = arith.constant 0 : i32
    %c0_i32_1 = arith.constant 0 : i32
    return %c0_i32, %c0_i32_0 : i32, i32
  }
  func.func @transform_5(%arg0: i32) -> (i32, i32, i32) {
    %c0_i32 = arith.constant 0 : i32
    %c0_i32_0 = arith.constant 0 : i32
    %c0_i32_1 = arith.constant 0 : i32
    return %arg0, %c0_i32, %c0_i32_0 : i32, i32, i32
  }
  func.func @transform_6(%arg0: i32) -> (i32, i32, i32) {
    %c0_i32 = arith.constant 0 : i32
    %c0_i32_0 = arith.constant 0 : i32
    %c0_i32_1 = arith.constant 0 : i32
    return %arg0, %c0_i32, %c0_i32_0 : i32, i32, i32
  }
}

module attributes {stable_mosaic.version = 11 : i64} {
  func.func @_conv3_kernel(%arg0: i32, %arg1: i32, %arg2: memref<1x40x4xbf16, #tpu.memory_space<vmem>>, %arg3: memref<4x64xbf16, #tpu.memory_space<vmem>>, %arg4: memref<1x64xf32, #tpu.memory_space<vmem>>, %arg5: memref<1x64xf32, #tpu.memory_space<vmem>>, %arg6: memref<64x128xbf16, #tpu.memory_space<vmem>>, %arg7: memref<1x128xf32, #tpu.memory_space<vmem>>, %arg8: memref<1x128xf32, #tpu.memory_space<vmem>>, %arg9: memref<128x1024xbf16, #tpu.memory_space<vmem>>, %arg10: memref<1x1x1x1024xf32, #tpu.memory_space<vmem>>, %arg11: memref<1x1x1x1024xf32, #tpu.memory_space<vmem>>, %arg12: memref<1x1x1x1024xf32, #tpu.memory_space<vmem>>, %arg13: memref<1x1x1x1024xf32, #tpu.memory_space<vmem>>) attributes {dimension_semantics = [#tpu.dimension_semantics<parallel>, #tpu.dimension_semantics<parallel>], iteration_bounds = array<i64: 4, 1>, scalar_prefetch = 0 : i64, scratch_operands = 0 : i64, tpu.core_type = #tpu.core_type<tc>, window_params = [{transform_indices = @transform_0, window_bounds = array<i64: 1, 40, 4>}, {pipeline_mode = #tpu.pipeline_mode<synchronous>, transform_indices = @transform_1, window_bounds = array<i64: 4, 64>}, {pipeline_mode = #tpu.pipeline_mode<synchronous>, transform_indices = @transform_2, window_bounds = array<i64: 1, 64>}, {pipeline_mode = #tpu.pipeline_mode<synchronous>, transform_indices = @transform_3, window_bounds = array<i64: 1, 64>}, {pipeline_mode = #tpu.pipeline_mode<synchronous>, transform_indices = @transform_4, window_bounds = array<i64: 64, 128>}, {pipeline_mode = #tpu.pipeline_mode<synchronous>, transform_indices = @transform_5, window_bounds = array<i64: 1, 128>}, {pipeline_mode = #tpu.pipeline_mode<synchronous>, transform_indices = @transform_6, window_bounds = array<i64: 1, 128>}, {pipeline_mode = #tpu.pipeline_mode<synchronous>, transform_indices = @transform_7, window_bounds = array<i64: 128, 1024>}, {transform_indices = @transform_8, window_bounds = array<i64: 1, 1, 1, 1024>}, {transform_indices = @transform_9, window_bounds = array<i64: 1, 1, 1, 1024>}, {transform_indices = @transform_10, window_bounds = array<i64: 1, 1, 1, 1024>}, {transform_indices = @transform_11, window_bounds = array<i64: 1, 1, 1, 1024>}]} {
    %c0 = arith.constant 0 : index
    %c0_0 = arith.constant 0 : index
    %c0_1 = arith.constant 0 : index
    %0 = vector.load %arg2[%c0, %c0_0, %c0_1] : memref<1x40x4xbf16, #tpu.memory_space<vmem>>, vector<1x40x4xbf16>
    %1 = vector.shape_cast %0 : vector<1x40x4xbf16> to vector<40x4xbf16>
    %c0_2 = arith.constant 0 : index
    %c0_3 = arith.constant 0 : index
    %2 = vector.load %arg3[%c0_2, %c0_3] : memref<4x64xbf16, #tpu.memory_space<vmem>>, vector<4x64xbf16>
    %c0_4 = arith.constant 0 : index
    %c0_5 = arith.constant 0 : index
    %3 = vector.load %arg6[%c0_4, %c0_5] : memref<64x128xbf16, #tpu.memory_space<vmem>>, vector<64x128xbf16>
    %c0_6 = arith.constant 0 : index
    %c0_7 = arith.constant 0 : index
    %4 = vector.load %arg9[%c0_6, %c0_7] : memref<128x1024xbf16, #tpu.memory_space<vmem>>, vector<128x1024xbf16>
    %c0_8 = arith.constant 0 : index
    %c0_9 = arith.constant 0 : index
    %5 = vector.load %arg4[%c0_8, %c0_9] : memref<1x64xf32, #tpu.memory_space<vmem>>, vector<1x64xf32>
    %c0_10 = arith.constant 0 : index
    %c0_11 = arith.constant 0 : index
    %6 = vector.load %arg5[%c0_10, %c0_11] : memref<1x64xf32, #tpu.memory_space<vmem>>, vector<1x64xf32>
    %c0_12 = arith.constant 0 : index
    %c0_13 = arith.constant 0 : index
    %7 = vector.load %arg7[%c0_12, %c0_13] : memref<1x128xf32, #tpu.memory_space<vmem>>, vector<1x128xf32>
    %c0_14 = arith.constant 0 : index
    %c0_15 = arith.constant 0 : index
    %8 = vector.load %arg8[%c0_14, %c0_15] : memref<1x128xf32, #tpu.memory_space<vmem>>, vector<1x128xf32>
    %cst = arith.constant dense<0.000000e+00> : vector<40x64xf32>
    %9 = tpu.matmul %1, %2, %cst {dimension_numbers = #tpu.dot_dimension_numbers<[1], [0], [0], [1], [0, 0, 1, 1], [], []>} : vector<40x4xbf16>, vector<4x64xbf16>, vector<40x64xf32> -> vector<40x64xf32>
    %10 = vector.broadcast %5 : vector<1x64xf32> to vector<40x64xf32>
    %11 = arith.mulf %9, %10 : vector<40x64xf32>
    %12 = vector.broadcast %6 : vector<1x64xf32> to vector<40x64xf32>
    %13 = arith.addf %11, %12 : vector<40x64xf32>
    %cst_16 = arith.constant 0.000000e+00 : f32
    %14 = vector.broadcast %cst_16 : f32 to vector<40x64xf32>
    %15 = arith.maximumf %13, %14 : vector<40x64xf32>
    %16 = arith.truncf %15 : vector<40x64xf32> to vector<40x64xbf16>
    %cst_17 = arith.constant dense<0.000000e+00> : vector<40x128xf32>
    %17 = tpu.matmul %16, %3, %cst_17 {dimension_numbers = #tpu.dot_dimension_numbers<[1], [0], [0], [1], [0, 0, 1, 1], [], []>} : vector<40x64xbf16>, vector<64x128xbf16>, vector<40x128xf32> -> vector<40x128xf32>
    %18 = vector.broadcast %7 : vector<1x128xf32> to vector<40x128xf32>
    %19 = arith.mulf %17, %18 : vector<40x128xf32>
    %20 = vector.broadcast %8 : vector<1x128xf32> to vector<40x128xf32>
    %21 = arith.addf %19, %20 : vector<40x128xf32>
    %cst_18 = arith.constant 0.000000e+00 : f32
    %22 = vector.broadcast %cst_18 : f32 to vector<40x128xf32>
    %23 = arith.maximumf %21, %22 : vector<40x128xf32>
    %24 = arith.truncf %23 : vector<40x128xf32> to vector<40x128xbf16>
    %cst_19 = arith.constant dense<0.000000e+00> : vector<40x1024xf32>
    %25 = tpu.matmul %24, %4, %cst_19 {dimension_numbers = #tpu.dot_dimension_numbers<[1], [0], [0], [1], [0, 0, 1, 1], [], []>} : vector<40x128xbf16>, vector<128x1024xbf16>, vector<40x1024xf32> -> vector<40x1024xf32>
    %c40_i32 = arith.constant 40 : i32
    %26 = arith.muli %arg1, %c40_i32 : i32
    %27 = tpu.iota {dimensions = array<i32: 0>} : vector<40x1xi32>
    %28 = vector.broadcast %26 : i32 to vector<40x1xi32>
    %29 = arith.addi %27, %28 : vector<40x1xi32>
    %c36_i32 = arith.constant 36 : i32
    %30 = vector.broadcast %c36_i32 : i32 to vector<40x1xi32>
    %31 = arith.cmpi slt, %29, %30 : vector<40x1xi32>
    %cst_20 = arith.constant 0.000000e+00 : f32
    %32 = vector.shape_cast %31 : vector<40x1xi1> to vector<40x1xi1>
    %33 = vector.broadcast %32 : vector<40x1xi1> to vector<40x1024xi1>
    %34 = vector.broadcast %cst_20 : f32 to vector<40x1024xf32>
    %35 = arith.select %33, %25, %34 : vector<40x1024xi1>, vector<40x1024xf32>
    %cst_21 = arith.constant dense<0.000000e+00> : vector<1024xf32>
    %36 = vector.multi_reduction <add>, %35, %cst_21 [0] : vector<40x1024xf32> to vector<1024xf32>
    %37 = vector.shape_cast %36 : vector<1024xf32> to vector<1x1024xf32>
    %c0_22 = arith.constant 0 : index
    %c0_23 = arith.constant 0 : index
    %c0_24 = arith.constant 0 : index
    %c0_25 = arith.constant 0 : index
    %38 = vector.load %arg10[%c0_22, %c0_23, %c0_24, %c0_25] : memref<1x1x1x1024xf32, #tpu.memory_space<vmem>>, vector<1x1x1x1024xf32>
    %39 = vector.shape_cast %38 : vector<1x1x1x1024xf32> to vector<1x1024xf32>
    %40 = vector.shape_cast %37 : vector<1x1024xf32> to vector<1x1x1x1024xf32>
    tpu.vector_store %arg10[%c0_22, %c0_23, %c0_24, %c0_25], %40 {strides = array<i32>} : memref<1x1x1x1024xf32, #tpu.memory_space<vmem>>, vector<1x1x1x1024xf32>,
    %41 = arith.mulf %35, %35 : vector<40x1024xf32>
    %cst_26 = arith.constant dense<0.000000e+00> : vector<1024xf32>
    %42 = vector.multi_reduction <add>, %41, %cst_26 [0] : vector<40x1024xf32> to vector<1024xf32>
    %43 = vector.shape_cast %42 : vector<1024xf32> to vector<1x1024xf32>
    %c0_27 = arith.constant 0 : index
    %c0_28 = arith.constant 0 : index
    %c0_29 = arith.constant 0 : index
    %c0_30 = arith.constant 0 : index
    %44 = vector.load %arg11[%c0_27, %c0_28, %c0_29, %c0_30] : memref<1x1x1x1024xf32, #tpu.memory_space<vmem>>, vector<1x1x1x1024xf32>
    %45 = vector.shape_cast %44 : vector<1x1x1x1024xf32> to vector<1x1024xf32>
    %46 = vector.shape_cast %43 : vector<1x1024xf32> to vector<1x1x1x1024xf32>
    tpu.vector_store %arg11[%c0_27, %c0_28, %c0_29, %c0_30], %46 {strides = array<i32>} : memref<1x1x1x1024xf32, #tpu.memory_space<vmem>>, vector<1x1x1x1024xf32>,
    %cst_31 = arith.constant 0xFF800000 : f32
    %47 = vector.shape_cast %31 : vector<40x1xi1> to vector<40x1xi1>
    %48 = vector.broadcast %47 : vector<40x1xi1> to vector<40x1024xi1>
    %49 = vector.broadcast %cst_31 : f32 to vector<40x1024xf32>
    %50 = arith.select %48, %25, %49 : vector<40x1024xi1>, vector<40x1024xf32>
    %cst_32 = arith.constant dense<0xFF800000> : vector<1024xf32>
    %51 = vector.multi_reduction <maximumf>, %50, %cst_32 [0] : vector<40x1024xf32> to vector<1024xf32>
    %52 = vector.shape_cast %51 : vector<1024xf32> to vector<1x1024xf32>
    %c0_33 = arith.constant 0 : index
    %c0_34 = arith.constant 0 : index
    %c0_35 = arith.constant 0 : index
    %c0_36 = arith.constant 0 : index
    %53 = vector.load %arg12[%c0_33, %c0_34, %c0_35, %c0_36] : memref<1x1x1x1024xf32, #tpu.memory_space<vmem>>, vector<1x1x1x1024xf32>
    %54 = vector.shape_cast %53 : vector<1x1x1x1024xf32> to vector<1x1024xf32>
    %55 = vector.shape_cast %52 : vector<1x1024xf32> to vector<1x1x1x1024xf32>
    tpu.vector_store %arg12[%c0_33, %c0_34, %c0_35, %c0_36], %55 {strides = array<i32>} : memref<1x1x1x1024xf32, #tpu.memory_space<vmem>>, vector<1x1x1x1024xf32>,
    %cst_37 = arith.constant 0x7F800000 : f32
    %56 = vector.shape_cast %31 : vector<40x1xi1> to vector<40x1xi1>
    %57 = vector.broadcast %56 : vector<40x1xi1> to vector<40x1024xi1>
    %58 = vector.broadcast %cst_37 : f32 to vector<40x1024xf32>
    %59 = arith.select %57, %25, %58 : vector<40x1024xi1>, vector<40x1024xf32>
    %cst_38 = arith.constant dense<0x7F800000> : vector<1024xf32>
    %60 = vector.multi_reduction <minimumf>, %59, %cst_38 [0] : vector<40x1024xf32> to vector<1024xf32>
    %61 = vector.shape_cast %60 : vector<1024xf32> to vector<1x1024xf32>
    %c0_39 = arith.constant 0 : index
    %c0_40 = arith.constant 0 : index
    %c0_41 = arith.constant 0 : index
    %c0_42 = arith.constant 0 : index
    %62 = vector.load %arg13[%c0_39, %c0_40, %c0_41, %c0_42] : memref<1x1x1x1024xf32, #tpu.memory_space<vmem>>, vector<1x1x1x1024xf32>
    %63 = vector.shape_cast %62 : vector<1x1x1x1024xf32> to vector<1x1024xf32>
    %64 = vector.shape_cast %61 : vector<1x1024xf32> to vector<1x1x1x1024xf32>
    tpu.vector_store %arg13[%c0_39, %c0_40, %c0_41, %c0_42], %64 {strides = array<i32>} : memref<1x1x1x1024xf32, #tpu.memory_space<vmem>>, vector<1x1x1x1024xf32>,
    return
  }
  func.func @transform_0(%arg0: i32, %arg1: i32) -> (i32, i32, i32) {
    %c0_i32 = arith.constant 0 : i32
    %c0_i32_0 = arith.constant 0 : i32
    return %arg0, %arg1, %c0_i32 : i32, i32, i32
  }
  func.func @transform_1(%arg0: i32, %arg1: i32) -> (i32, i32) {
    %c0_i32 = arith.constant 0 : i32
    %c0_i32_0 = arith.constant 0 : i32
    %c0_i32_1 = arith.constant 0 : i32
    return %c0_i32, %c0_i32_0 : i32, i32
  }
  func.func @transform_2(%arg0: i32, %arg1: i32) -> (i32, i32) {
    %c0_i32 = arith.constant 0 : i32
    %c0_i32_0 = arith.constant 0 : i32
    %c0_i32_1 = arith.constant 0 : i32
    return %c0_i32, %c0_i32_0 : i32, i32
  }
  func.func @transform_3(%arg0: i32, %arg1: i32) -> (i32, i32) {
    %c0_i32 = arith.constant 0 : i32
    %c0_i32_0 = arith.constant 0 : i32
    %c0_i32_1 = arith.constant 0 : i32
    return %c0_i32, %c0_i32_0 : i32, i32
  }
  func.func @transform_4(%arg0: i32, %arg1: i32) -> (i32, i32) {
    %c0_i32 = arith.constant 0 : i32
    %c0_i32_0 = arith.constant 0 : i32
    %c0_i32_1 = arith.constant 0 : i32
    return %c0_i32, %c0_i32_0 : i32, i32
  }
  func.func @transform_5(%arg0: i32, %arg1: i32) -> (i32, i32) {
    %c0_i32 = arith.constant 0 : i32
    %c0_i32_0 = arith.constant 0 : i32
    %c0_i32_1 = arith.constant 0 : i32
    return %c0_i32, %c0_i32_0 : i32, i32
  }
  func.func @transform_6(%arg0: i32, %arg1: i32) -> (i32, i32) {
    %c0_i32 = arith.constant 0 : i32
    %c0_i32_0 = arith.constant 0 : i32
    %c0_i32_1 = arith.constant 0 : i32
    return %c0_i32, %c0_i32_0 : i32, i32
  }
  func.func @transform_7(%arg0: i32, %arg1: i32) -> (i32, i32) {
    %c0_i32 = arith.constant 0 : i32
    %c0_i32_0 = arith.constant 0 : i32
    %c0_i32_1 = arith.constant 0 : i32
    return %c0_i32, %c0_i32_0 : i32, i32
  }
  func.func @transform_8(%arg0: i32, %arg1: i32) -> (i32, i32, i32, i32) {
    %c0_i32 = arith.constant 0 : i32
    %c0_i32_0 = arith.constant 0 : i32
    %c0_i32_1 = arith.constant 0 : i32
    return %arg0, %arg1, %c0_i32, %c0_i32_0 : i32, i32, i32, i32
  }
  func.func @transform_9(%arg0: i32, %arg1: i32) -> (i32, i32, i32, i32) {
    %c0_i32 = arith.constant 0 : i32
    %c0_i32_0 = arith.constant 0 : i32
    %c0_i32_1 = arith.constant 0 : i32
    return %arg0, %arg1, %c0_i32, %c0_i32_0 : i32, i32, i32, i32
  }
  func.func @transform_10(%arg0: i32, %arg1: i32) -> (i32, i32, i32, i32) {
    %c0_i32 = arith.constant 0 : i32
    %c0_i32_0 = arith.constant 0 : i32
    %c0_i32_1 = arith.constant 0 : i32
    return %arg0, %arg1, %c0_i32, %c0_i32_0 : i32, i32, i32, i32
  }
  func.func @transform_11(%arg0: i32, %arg1: i32) -> (i32, i32, i32, i32) {
    %c0_i32 = arith.constant 0 : i32
    %c0_i32_0 = arith.constant 0 : i32
    %c0_i32_1 = arith.constant 0 : i32
    return %arg0, %arg1, %c0_i32, %c0_i32_0 : i32, i32, i32, i32
  }
}

module attributes {stable_mosaic.version = 11 : i64} {
  func.func @_fc_kernel(%arg0: memref<4x1024xf32, #tpu.memory_space<vmem>>, %arg1: memref<4x1024xf32, #tpu.memory_space<vmem>>, %arg2: memref<1x1024xf32, #tpu.memory_space<vmem>>, %arg3: memref<1x1024xf32, #tpu.memory_space<vmem>>, %arg4: memref<1024x512xbf16, #tpu.memory_space<vmem>>, %arg5: memref<1x512xf32, #tpu.memory_space<vmem>>, %arg6: memref<1x512xf32, #tpu.memory_space<vmem>>, %arg7: memref<512x256xbf16, #tpu.memory_space<vmem>>, %arg8: memref<1x256xf32, #tpu.memory_space<vmem>>, %arg9: memref<1x256xf32, #tpu.memory_space<vmem>>, %arg10: memref<256x16xf32, #tpu.memory_space<vmem>>, %arg11: memref<1x16xf32, #tpu.memory_space<vmem>>, %arg12: memref<4x16xf32, #tpu.memory_space<vmem>>) attributes {dimension_semantics = [], scalar_prefetch = 0 : i64, scratch_operands = 0 : i64, tpu.core_type = #tpu.core_type<tc>} {
    %c0 = arith.constant 0 : index
    %c0_0 = arith.constant 0 : index
    %0 = vector.load %arg2[%c0, %c0_0] : memref<1x1024xf32, #tpu.memory_space<vmem>>, vector<1x1024xf32>
    %c0_1 = arith.constant 0 : index
    %c0_2 = arith.constant 0 : index
    %1 = vector.load %arg3[%c0_1, %c0_2] : memref<1x1024xf32, #tpu.memory_space<vmem>>, vector<1x1024xf32>
    %cst = arith.constant 0.000000e+00 : f32
    %2 = vector.broadcast %cst : f32 to vector<1x1024xf32>
    %3 = arith.cmpf oge, %0, %2 : vector<1x1024xf32>
    %c0_3 = arith.constant 0 : index
    %c0_4 = arith.constant 0 : index
    %4 = vector.load %arg0[%c0_3, %c0_4] : memref<4x1024xf32, #tpu.memory_space<vmem>>, vector<4x1024xf32>
    %c0_5 = arith.constant 0 : index
    %c0_6 = arith.constant 0 : index
    %5 = vector.load %arg1[%c0_5, %c0_6] : memref<4x1024xf32, #tpu.memory_space<vmem>>, vector<4x1024xf32>
    %6 = vector.shape_cast %3 : vector<1x1024xi1> to vector<1x1024xi1>
    %7 = vector.broadcast %6 : vector<1x1024xi1> to vector<4x1024xi1>
    %8 = arith.select %7, %4, %5 : vector<4x1024xi1>, vector<4x1024xf32>
    %9 = vector.broadcast %0 : vector<1x1024xf32> to vector<4x1024xf32>
    %10 = arith.mulf %8, %9 : vector<4x1024xf32>
    %11 = vector.broadcast %1 : vector<1x1024xf32> to vector<4x1024xf32>
    %12 = arith.addf %10, %11 : vector<4x1024xf32>
    %cst_7 = arith.constant 0.000000e+00 : f32
    %13 = vector.broadcast %cst_7 : f32 to vector<4x1024xf32>
    %14 = arith.maximumf %12, %13 : vector<4x1024xf32>
    %15 = arith.truncf %14 : vector<4x1024xf32> to vector<4x1024xbf16>
    %c0_8 = arith.constant 0 : index
    %c0_9 = arith.constant 0 : index
    %16 = vector.load %arg4[%c0_8, %c0_9] : memref<1024x512xbf16, #tpu.memory_space<vmem>>, vector<1024x512xbf16>
    %cst_10 = arith.constant dense<0.000000e+00> : vector<4x512xf32>
    %17 = tpu.matmul %15, %16, %cst_10 {dimension_numbers = #tpu.dot_dimension_numbers<[1], [0], [0], [1], [0, 0, 1, 1], [], []>} : vector<4x1024xbf16>, vector<1024x512xbf16>, vector<4x512xf32> -> vector<4x512xf32>
    %cst_11 = arith.constant dense<0.000000e+00> : vector<512xf32>
    %18 = vector.multi_reduction <add>, %17, %cst_11 [0] : vector<4x512xf32> to vector<512xf32>
    %19 = vector.shape_cast %18 : vector<512xf32> to vector<1x512xf32>
    %cst_12 = arith.constant 4.000000e+00 : f32
    %20 = vector.broadcast %cst_12 : f32 to vector<1x512xf32>
    %21 = arith.divf %19, %20 : vector<1x512xf32>
    %22 = arith.mulf %17, %17 : vector<4x512xf32>
    %cst_13 = arith.constant dense<0.000000e+00> : vector<512xf32>
    %23 = vector.multi_reduction <add>, %22, %cst_13 [0] : vector<4x512xf32> to vector<512xf32>
    %24 = vector.shape_cast %23 : vector<512xf32> to vector<1x512xf32>
    %cst_14 = arith.constant 4.000000e+00 : f32
    %25 = vector.broadcast %cst_14 : f32 to vector<1x512xf32>
    %26 = arith.divf %24, %25 : vector<1x512xf32>
    %27 = arith.mulf %21, %21 : vector<1x512xf32>
    %28 = arith.subf %26, %27 : vector<1x512xf32>
    %cst_15 = arith.constant 0.000000e+00 : f32
    %29 = vector.broadcast %cst_15 : f32 to vector<1x512xf32>
    %30 = arith.maximumf %28, %29 : vector<1x512xf32>
    %c0_16 = arith.constant 0 : index
    %c0_17 = arith.constant 0 : index
    %31 = vector.load %arg5[%c0_16, %c0_17] : memref<1x512xf32, #tpu.memory_space<vmem>>, vector<1x512xf32>
    %cst_18 = arith.constant 9.99999974E-6 : f32
    %32 = vector.broadcast %cst_18 : f32 to vector<1x512xf32>
    %33 = arith.addf %30, %32 : vector<1x512xf32>
    %34 = math.rsqrt %33 : vector<1x512xf32>
    %35 = arith.mulf %31, %34 : vector<1x512xf32>
    %c0_19 = arith.constant 0 : index
    %c0_20 = arith.constant 0 : index
    %36 = vector.load %arg6[%c0_19, %c0_20] : memref<1x512xf32, #tpu.memory_space<vmem>>, vector<1x512xf32>
    %37 = arith.mulf %21, %35 : vector<1x512xf32>
    %38 = arith.subf %36, %37 : vector<1x512xf32>
    %39 = vector.broadcast %35 : vector<1x512xf32> to vector<4x512xf32>
    %40 = arith.mulf %17, %39 : vector<4x512xf32>
    %41 = vector.broadcast %38 : vector<1x512xf32> to vector<4x512xf32>
    %42 = arith.addf %40, %41 : vector<4x512xf32>
    %cst_21 = arith.constant 0.000000e+00 : f32
    %43 = vector.broadcast %cst_21 : f32 to vector<4x512xf32>
    %44 = arith.maximumf %42, %43 : vector<4x512xf32>
    %45 = arith.truncf %44 : vector<4x512xf32> to vector<4x512xbf16>
    %c0_22 = arith.constant 0 : index
    %c0_23 = arith.constant 0 : index
    %46 = vector.load %arg7[%c0_22, %c0_23] : memref<512x256xbf16, #tpu.memory_space<vmem>>, vector<512x256xbf16>
    %cst_24 = arith.constant dense<0.000000e+00> : vector<4x256xf32>
    %47 = tpu.matmul %45, %46, %cst_24 {dimension_numbers = #tpu.dot_dimension_numbers<[1], [0], [0], [1], [0, 0, 1, 1], [], []>} : vector<4x512xbf16>, vector<512x256xbf16>, vector<4x256xf32> -> vector<4x256xf32>
    %cst_25 = arith.constant dense<0.000000e+00> : vector<256xf32>
    %48 = vector.multi_reduction <add>, %47, %cst_25 [0] : vector<4x256xf32> to vector<256xf32>
    %49 = vector.shape_cast %48 : vector<256xf32> to vector<1x256xf32>
    %cst_26 = arith.constant 4.000000e+00 : f32
    %50 = vector.broadcast %cst_26 : f32 to vector<1x256xf32>
    %51 = arith.divf %49, %50 : vector<1x256xf32>
    %52 = arith.mulf %47, %47 : vector<4x256xf32>
    %cst_27 = arith.constant dense<0.000000e+00> : vector<256xf32>
    %53 = vector.multi_reduction <add>, %52, %cst_27 [0] : vector<4x256xf32> to vector<256xf32>
    %54 = vector.shape_cast %53 : vector<256xf32> to vector<1x256xf32>
    %cst_28 = arith.constant 4.000000e+00 : f32
    %55 = vector.broadcast %cst_28 : f32 to vector<1x256xf32>
    %56 = arith.divf %54, %55 : vector<1x256xf32>
    %57 = arith.mulf %51, %51 : vector<1x256xf32>
    %58 = arith.subf %56, %57 : vector<1x256xf32>
    %cst_29 = arith.constant 0.000000e+00 : f32
    %59 = vector.broadcast %cst_29 : f32 to vector<1x256xf32>
    %60 = arith.maximumf %58, %59 : vector<1x256xf32>
    %c0_30 = arith.constant 0 : index
    %c0_31 = arith.constant 0 : index
    %61 = vector.load %arg8[%c0_30, %c0_31] : memref<1x256xf32, #tpu.memory_space<vmem>>, vector<1x256xf32>
    %cst_32 = arith.constant 9.99999974E-6 : f32
    %62 = vector.broadcast %cst_32 : f32 to vector<1x256xf32>
    %63 = arith.addf %60, %62 : vector<1x256xf32>
    %64 = math.rsqrt %63 : vector<1x256xf32>
    %65 = arith.mulf %61, %64 : vector<1x256xf32>
    %c0_33 = arith.constant 0 : index
    %c0_34 = arith.constant 0 : index
    %66 = vector.load %arg9[%c0_33, %c0_34] : memref<1x256xf32, #tpu.memory_space<vmem>>, vector<1x256xf32>
    %67 = arith.mulf %51, %65 : vector<1x256xf32>
    %68 = arith.subf %66, %67 : vector<1x256xf32>
    %69 = vector.broadcast %65 : vector<1x256xf32> to vector<4x256xf32>
    %70 = arith.mulf %47, %69 : vector<4x256xf32>
    %71 = vector.broadcast %68 : vector<1x256xf32> to vector<4x256xf32>
    %72 = arith.addf %70, %71 : vector<4x256xf32>
    %cst_35 = arith.constant 0.000000e+00 : f32
    %73 = vector.broadcast %cst_35 : f32 to vector<4x256xf32>
    %74 = arith.maximumf %72, %73 : vector<4x256xf32>
    %c0_36 = arith.constant 0 : index
    %c0_37 = arith.constant 0 : index
    %75 = vector.load %arg10[%c0_36, %c0_37] : memref<256x16xf32, #tpu.memory_space<vmem>>, vector<256x16xf32>
    %cst_38 = arith.constant dense<0.000000e+00> : vector<4x16xf32>
    %76 = tpu.matmul %74, %75, %cst_38 {dimension_numbers = #tpu.dot_dimension_numbers<[1], [0], [0], [1], [0, 0, 1, 1], [], []>} : vector<4x256xf32>, vector<256x16xf32>, vector<4x16xf32> -> vector<4x16xf32>
    %c0_39 = arith.constant 0 : index
    %c0_40 = arith.constant 0 : index
    %77 = vector.load %arg11[%c0_39, %c0_40] : memref<1x16xf32, #tpu.memory_space<vmem>>, vector<1x16xf32>
    %78 = vector.broadcast %77 : vector<1x16xf32> to vector<4x16xf32>
    %79 = arith.addf %76, %78 : vector<4x16xf32>
    %c0_41 = arith.constant 0 : index
    %c0_42 = arith.constant 0 : index
    %80 = vector.load %arg12[%c0_41, %c0_42] : memref<4x16xf32, #tpu.memory_space<vmem>>, vector<4x16xf32>
    tpu.vector_store %arg12[%c0_41, %c0_42], %79 {strides = array<i32>} : memref<4x16xf32, #tpu.memory_space<vmem>>, vector<4x16xf32>,
    return
  }
}

</mosaic_0001>

<llo_original>
// kernel: tnet_forward.4
$region0: #{tnet_forward.4}
  #allocation0 [shape = 'u32[]', space=smem, size = 0x4, offset = 0x4, fixed_abs, tag = 'smem constant byte address 0x4 - core index']
  #allocation1 [shape = 'u32[144,128]{1,0:T(1,128)}', space=vmem, size = 0x12000, scoped, tag = 'internal scratch']
  %s0 = inlined_call_operand.vmem [shape: bf16[144,4], index: 0, kind: input, shape index: {}]
  %s1 = inlined_call_operand.vmem [shape: bf16[4,64], index: 1, kind: input, shape index: {}]
  %s2 = inlined_call_operand.vmem [shape: f32[1,1,64], index: 2, kind: output, shape index: {0}]
  %s3 = inlined_call_operand.vmem [shape: f32[1,1,64], index: 3, kind: output, shape index: {1}]
  %4 = xla_tuple %s2, %s3
  %s5 = sld [smem:[#allocation0]]
  $region26: #{tnet_forward.4} parent=0
    _
  %s7 = ssub.s32 1, %s5
  %s8 = scalar_select 0, %s7, %s5
  // Predicated region
  $region2: #{tnet_forward.4} parent=0 // pred_check
    _
  $region3: #{tnet_forward.4} parent=0 // pred_check_branch
    %10 = sbr.rel (0) target = $region5
  $region4: #{tnet_forward.4} parent=0 // pred_region
    _
  $region5: #{tnet_forward.4} parent=0 // pred_fallthru
    _
  // Predicated region
  $region6: #{tnet_forward.4} parent=0 // pred_check
    _
  $region7: #{tnet_forward.4} parent=0 // pred_check_branch
    %12 = sbr.rel (0) target = $region9
  $region8: #{tnet_forward.4} parent=0 // pred_region
    _
  $region9: #{tnet_forward.4} parent=0 // pred_fallthru
    _
  %v14 = vld [vmem:[%s0] sm:$0xf]
  %v15 = vld [vmem:[%s0 + $0x4] sm:$0xf]
  %v16 = vld [vmem:[%s0 + $0x8] sm:$0xf]
  %v17 = vld [vmem:[%s0 + $0xc] sm:$0xf]
  %v18 = vld [vmem:[%s0 + $0x10] sm:$0xf]
  %v19 = vld [vmem:[%s0 + $0x14] sm:$0xf]
  %v20 = vld [vmem:[%s0 + $0x18] sm:$0xf]
  %v21 = vld [vmem:[%s0 + $0x1c] sm:$0xf]
  %v22 = vld [vmem:[%s0 + $0x20] sm:$0xf]
  %v23 = vld [vmem:[%s0 + $0x24] sm:$0xf]
  %v24 = vld [vmem:[%s0 + $0x28] sm:$0xf]
  %v25 = vld [vmem:[%s0 + $0x2c] sm:$0xf]
  %v26 = vld [vmem:[%s0 + $0x30] sm:$0xf]
  %v27 = vld [vmem:[%s0 + $0x34] sm:$0xf]
  %v28 = vld [vmem:[%s0 + $0x38] sm:$0xf]
  %v29 = vld [vmem:[%s0 + $0x3c] sm:$0xf]
  %v30 = vld [vmem:[%s0 + $0x40] sm:$0xf]
  %v31 = vld [vmem:[%s0 + $0x44] sm:$0xf]
  %v32 = vld [vmem:[%s1] sm:$0x3]
  %v51 = vunpack.c.l.b16 %v14
  %v52 = vunpack.c.l.b16 %v15
  %v53 = vunpack.c.l.b16 %v16
  %v54 = vunpack.c.l.b16 %v17
  %v55 = vunpack.c.l.b16 %v18
  %v56 = vunpack.c.l.b16 %v19
  %v57 = vunpack.c.l.b16 %v20
  %v58 = vunpack.c.l.b16 %v21
  %v59 = vunpack.c.l.b16 %v22
  %v60 = vunpack.c.l.b16 %v23
  %v61 = vunpack.c.l.b16 %v24
  %v62 = vunpack.c.l.b16 %v25
  %v63 = vunpack.c.l.b16 %v26
  %v64 = vunpack.c.l.b16 %v27
  %v65 = vunpack.c.l.b16 %v28
  %v66 = vunpack.c.l.b16 %v29
  %v67 = vunpack.c.l.b16 %v30
  %v68 = vunpack.c.l.b16 %v31
  %v69 = vpack.c.b16 %v52, %v51
  %v70 = vpack.c.b16 %v54, %v53
  %v71 = vpack.c.b16 %v56, %v55
  %v72 = vpack.c.b16 %v58, %v57
  %v73 = vpack.c.b16 %v60, %v59
  %v74 = vpack.c.b16 %v62, %v61
  %v75 = vpack.c.b16 %v64, %v63
  %v76 = vpack.c.b16 %v66, %v65
  %v77 = vpack.c.b16 %v68, %v67
  %vm78 = vcmask 31744
  %v80 = vsel %vm78, %v69, 0
  %v83 = vsel %vm78, %v70, 0
  %v86 = vsel %vm78, %v71, 0
  %v89 = vsel %vm78, %v72, 0
  %v92 = vsel %vm78, %v73, 0
  %v95 = vsel %vm78, %v74, 0
  %v98 = vsel %vm78, %v75, 0
  %v101 = vsel %vm78, %v76, 0
  %v104 = vsel %vm78, %v77, 0
  %vm106 = vcmask 1041408
  %v108 = vsel %vm106, %v32, 0
  %110 = vmatprep.subr.bf16.mxu0 0
  %111 = vmatpush1.bf16.msra.mxu0 %v108
  %112 = vmatprep.subr.bf16.mxu0 0
  %113 = vmatpush1.bf16.msra.mxu0 0
  %114 = vmatprep.subr.bf16.mxu0 0
  %115 = vmatpush1.bf16.msra.mxu0 0
  %116 = vmatprep.subr.bf16.mxu0 0
  %117 = vmatpush1.bf16.msra.mxu0 0
  %118 = vmatprep.subr.bf16.mxu0 0
  %119 = vmatpush1.bf16.msra.mxu0 0
  %120 = vmatprep.subr.bf16.mxu0 0
  %121 = vmatpush1.bf16.msra.mxu0 0
  %122 = vmatprep.subr.bf16.mxu0 0
  %123 = vmatpush1.bf16.msra.mxu0 0
  %124 = vmatprep.subr.bf16.mxu0 0
  %125 = vmatpush1.bf16.msra.mxu0 0
  %126 = vmatprep.subr.bf16.mxu0 0
  %127 = vmatpush1.bf16.msra.mxu0 0
  %128 = vmatprep.subr.bf16.mxu0 0
  %129 = vmatpush1.bf16.msra.mxu0 0
  %130 = vmatprep.subr.bf16.mxu0 0
  %131 = vmatpush1.bf16.msra.mxu0 0
  %132 = vmatprep.subr.bf16.mxu0 0
  %133 = vmatpush1.bf16.msra.mxu0 0
  %134 = vmatprep.subr.bf16.mxu0 0
  %135 = vmatpush1.bf16.msra.mxu0 0
  %136 = vmatprep.subr.bf16.mxu0 0
  %137 = vmatpush1.bf16.msra.mxu0 0
  %138 = vmatprep.subr.bf16.mxu0 0
  %139 = vmatpush1.bf16.msra.mxu0 0
  %140 = vmatprep.subr.bf16.mxu0 0
  %141 = vmatpush1.bf16.msra.mxu0 0
  %142 = vmatprep.mubr.bf16.mxu0 0
  %143 = vmatmul.mubr.bf16.gmra.mrb[0].mxu0 %v80
  %v144 = vpop.f32.mrb[0].mxu0
  %v145 = vadd.f32 0.0, %v144
  %v146 = vpop.f32.mrb[0].mxu0
  %v147 = vpop.f32.mrb[0].mxu0
  %v148 = vadd.f32 0.0, %v147
  %v149 = vpop.f32.mrb[0].mxu0
  %150 = vmatprep.mubr.bf16.mxu0 0
  %151 = vmatmul.mubr.bf16.gmra.mrb[0].mxu0 %v83
  %v152 = vpop.f32.mrb[0].mxu0
  %v153 = vadd.f32 0.0, %v152
  %v154 = vpop.f32.mrb[0].mxu0
  %v155 = vpop.f32.mrb[0].mxu0
  %v156 = vadd.f32 0.0, %v155
  %v157 = vpop.f32.mrb[0].mxu0
  %158 = vmatprep.mubr.bf16.mxu0 0
  %159 = vmatmul.mubr.bf16.gmra.mrb[0].mxu0 %v86
  %v160 = vpop.f32.mrb[0].mxu0
  %v161 = vadd.f32 0.0, %v160
  %v162 = vpop.f32.mrb[0].mxu0
  %v163 = vpop.f32.mrb[0].mxu0
  %v164 = vadd.f32 0.0, %v163
  %v165 = vpop.f32.mrb[0].mxu0
  %166 = vmatprep.mubr.bf16.mxu0 0
  %167 = vmatmul.mubr.bf16.gmra.mrb[0].mxu0 %v89
  %v168 = vpop.f32.mrb[0].mxu0
  %v169 = vadd.f32 0.0, %v168
  %v170 = vpop.f32.mrb[0].mxu0
  %v171 = vpop.f32.mrb[0].mxu0
  %v172 = vadd.f32 0.0, %v171
  %v173 = vpop.f32.mrb[0].mxu0
  %174 = vmatprep.mubr.bf16.mxu0 0
  %175 = vmatmul.mubr.bf16.gmra.mrb[0].mxu0 %v92
  %v176 = vpop.f32.mrb[0].mxu0
  %v177 = vadd.f32 0.0, %v176
  %v178 = vpop.f32.mrb[0].mxu0
  %v179 = vpop.f32.mrb[0].mxu0
  %v180 = vadd.f32 0.0, %v179
  %v181 = vpop.f32.mrb[0].mxu0
  %182 = vmatprep.mubr.bf16.mxu0 0
  %183 = vmatmul.mubr.bf16.gmra.mrb[0].mxu0 %v95
  %v184 = vpop.f32.mrb[0].mxu0
  %v185 = vadd.f32 0.0, %v184
  %v186 = vpop.f32.mrb[0].mxu0
  %v187 = vpop.f32.mrb[0].mxu0
  %v188 = vadd.f32 0.0, %v187
  %v189 = vpop.f32.mrb[0].mxu0
  %190 = vmatprep.mubr.bf16.mxu0 0
  %191 = vmatmul.mubr.bf16.gmra.mrb[0].mxu0 %v98
  %v192 = vpop.f32.mrb[0].mxu0
  %v193 = vadd.f32 0.0, %v192
  %v194 = vpop.f32.mrb[0].mxu0
  %v195 = vpop.f32.mrb[0].mxu0
  %v196 = vadd.f32 0.0, %v195
  %v197 = vpop.f32.mrb[0].mxu0
  %198 = vmatprep.mubr.bf16.mxu0 0
  %199 = vmatmul.mubr.bf16.gmra.mrb[0].mxu0 %v101
  %v200 = vpop.f32.mrb[0].mxu0
  %v201 = vadd.f32 0.0, %v200
  %v202 = vpop.f32.mrb[0].mxu0
  %v203 = vpop.f32.mrb[0].mxu0
  %v204 = vadd.f32 0.0, %v203
  %v205 = vpop.f32.mrb[0].mxu0
  %206 = vmatprep.mubr.bf16.mxu0 0
  %207 = vmatmul.mubr.bf16.gmra.mrb[0].mxu0 %v104
  %v208 = vpop.f32.mrb[0].mxu0
  %v209 = vadd.f32 0.0, %v208
  %v210 = vpop.f32.mrb[0].mxu0
  %v211 = vpop.f32.mrb[0].mxu0
  %v212 = vadd.f32 0.0, %v211
  %v213 = vpop.f32.mrb[0].mxu0
  %214 = vdwg.mxu0
  %s215 = smul.u32 0, 144
  %v216 = vlaneseq
  %v217 = vshrl.u32 %v216, 7
  %v218 = vadd.s32 %v217, 8
  %v219 = vadd.s32 %v217, 16
  %v220 = vadd.s32 %v217, 24
  %v221 = vadd.s32 %v217, 32
  %v222 = vadd.s32 %v217, 40
  %v223 = vadd.s32 %v217, 48
  %v224 = vadd.s32 %v217, 56
  %v225 = vadd.s32 %v217, 64
  %v226 = vadd.s32 %v217, 72
  %v227 = vadd.s32 %v217, 80
  %v228 = vadd.s32 %v217, 88
  %v229 = vadd.s32 %v217, 96
  %v230 = vadd.s32 %v217, 104
  %v231 = vadd.s32 %v217, 112
  %v232 = vadd.s32 %v217, 120
  %v233 = vadd.s32 %v217, 128
  %v234 = vadd.s32 %v217, 136
  %v235 = vstv %s215
  %v236 = vadd.s32 %v217, %v235
  %v237 = vadd.s32 %v218, %v235
  %v238 = vadd.s32 %v219, %v235
  %v239 = vadd.s32 %v220, %v235
  %v240 = vadd.s32 %v221, %v235
  %v241 = vadd.s32 %v222, %v235
  %v242 = vadd.s32 %v223, %v235
  %v243 = vadd.s32 %v224, %v235
  %v244 = vadd.s32 %v225, %v235
  %v245 = vadd.s32 %v226, %v235
  %v246 = vadd.s32 %v227, %v235
  %v247 = vadd.s32 %v228, %v235
  %v248 = vadd.s32 %v229, %v235
  %v249 = vadd.s32 %v230, %v235
  %v250 = vadd.s32 %v231, %v235
  %v251 = vadd.s32 %v232, %v235
  %v252 = vadd.s32 %v233, %v235
  %v253 = vadd.s32 %v234, %v235
  %vm254 = vcmp.lt.s32.totalorder %v236, 144
  %vm255 = vcmp.lt.s32.totalorder %v237, 144
  %vm256 = vcmp.lt.s32.totalorder %v238, 144
  %vm257 = vcmp.lt.s32.totalorder %v239, 144
  %vm258 = vcmp.lt.s32.totalorder %v240, 144
  %vm259 = vcmp.lt.s32.totalorder %v241, 144
  %vm260 = vcmp.lt.s32.totalorder %v242, 144
  %vm261 = vcmp.lt.s32.totalorder %v243, 144
  %vm262 = vcmp.lt.s32.totalorder %v244, 144
  %vm263 = vcmp.lt.s32.totalorder %v245, 144
  %vm264 = vcmp.lt.s32.totalorder %v246, 144
  %vm265 = vcmp.lt.s32.totalorder %v247, 144
  %vm266 = vcmp.lt.s32.totalorder %v248, 144
  %vm267 = vcmp.lt.s32.totalorder %v249, 144
  %vm268 = vcmp.lt.s32.totalorder %v250, 144
  %vm269 = vcmp.lt.s32.totalorder %v251, 144
  %vm270 = vcmp.lt.s32.totalorder %v252, 144
  %vm271 = vcmp.lt.s32.totalorder %v253, 144
  %v272 = vsel %vm254, 1, 0
  %v273 = vsel %vm255, 1, 0
  %v274 = vsel %vm256, 1, 0
  %v275 = vsel %vm257, 1, 0
  %v276 = vsel %vm258, 1, 0
  %v277 = vsel %vm259, 1, 0
  %v278 = vsel %vm260, 1, 0
  %v279 = vsel %vm261, 1, 0
  %v280 = vsel %vm262, 1, 0
  %v281 = vsel %vm263, 1, 0
  %v282 = vsel %vm264, 1, 0
  %v283 = vsel %vm265, 1, 0
  %v284 = vsel %vm266, 1, 0
  %v285 = vsel %vm267, 1, 0
  %v286 = vsel %vm268, 1, 0
  %v287 = vsel %vm269, 1, 0
  %v288 = vsel %vm270, 1, 0
  %v289 = vsel %vm271, 1, 0
  %vm290 = vcmp.eq.s32.totalorder %v272, 1
  %vm291 = vcmp.eq.s32.totalorder %v273, 1
  %vm292 = vcmp.eq.s32.totalorder %v274, 1
  %vm293 = vcmp.eq.s32.totalorder %v275, 1
  %vm294 = vcmp.eq.s32.totalorder %v276, 1
  %vm295 = vcmp.eq.s32.totalorder %v277, 1
  %vm296 = vcmp.eq.s32.totalorder %v278, 1
  %vm297 = vcmp.eq.s32.totalorder %v279, 1
  %vm298 = vcmp.eq.s32.totalorder %v280, 1
  %vm299 = vcmp.eq.s32.totalorder %v281, 1
  %vm300 = vcmp.eq.s32.totalorder %v282, 1
  %vm301 = vcmp.eq.s32.totalorder %v283, 1
  %vm302 = vcmp.eq.s32.totalorder %v284, 1
  %vm303 = vcmp.eq.s32.totalorder %v285, 1
  %vm304 = vcmp.eq.s32.totalorder %v286, 1
  %vm305 = vcmp.eq.s32.totalorder %v287, 1
  %vm306 = vcmp.eq.s32.totalorder %v288, 1
  %vm307 = vcmp.eq.s32.totalorder %v289, 1
  %v308 = vsel %vm290, %v145, 0.0
  %v309 = vsel %vm291, %v148, 0.0
  %v310 = vsel %vm292, %v153, 0.0
  %v311 = vsel %vm293, %v156, 0.0
  %v312 = vsel %vm294, %v161, 0.0
  %v313 = vsel %vm295, %v164, 0.0
  %v314 = vsel %vm296, %v169, 0.0
  %v315 = vsel %vm297, %v172, 0.0
  %v316 = vsel %vm298, %v177, 0.0
  %v317 = vsel %vm299, %v180, 0.0
  %v318 = vsel %vm300, %v185, 0.0
  %v319 = vsel %vm301, %v188, 0.0
  %v320 = vsel %vm302, %v193, 0.0
  %v321 = vsel %vm303, %v196, 0.0
  %v322 = vsel %vm304, %v201, 0.0
  %v323 = vsel %vm305, %v204, 0.0
  %v324 = vsel %vm306, %v209, 0.0
  %v325 = vsel %vm307, %v212, 0.0
  %vm326 = vcmask 523264
  %v327 = vsel %vm326, %v308, 0.0
  %v328 = vsel %vm326, %v309, 0.0
  %v329 = vadd.f32 %v327, %v328
  %v330 = vsel %vm326, %v310, 0.0
  %v331 = vadd.f32 %v329, %v330
  %v332 = vsel %vm326, %v311, 0.0
  %v333 = vadd.f32 %v331, %v332
  %v334 = vsel %vm326, %v312, 0.0
  %v335 = vadd.f32 %v333, %v334
  %v336 = vsel %vm326, %v313, 0.0
  %v337 = vadd.f32 %v335, %v336
  %v338 = vsel %vm326, %v314, 0.0
  %v339 = vadd.f32 %v337, %v338
  %v340 = vsel %vm326, %v315, 0.0
  %v341 = vadd.f32 %v339, %v340
  %v342 = vsel %vm326, %v316, 0.0
  %v343 = vadd.f32 %v341, %v342
  %v344 = vsel %vm326, %v317, 0.0
  %v345 = vadd.f32 %v343, %v344
  %v346 = vsel %vm326, %v318, 0.0
  %v347 = vadd.f32 %v345, %v346
  %v348 = vsel %vm326, %v319, 0.0
  %v349 = vadd.f32 %v347, %v348
  %v350 = vsel %vm326, %v320, 0.0
  %v351 = vadd.f32 %v349, %v350
  %v352 = vsel %vm326, %v321, 0.0
  %v353 = vadd.f32 %v351, %v352
  %v354 = vsel %vm326, %v322, 0.0
  %v355 = vadd.f32 %v353, %v354
  %v356 = vsel %vm326, %v323, 0.0
  %v357 = vadd.f32 %v355, %v356
  %v358 = vsel %vm326, %v324, 0.0
  %v359 = vadd.f32 %v357, %v358
  %v360 = vsel %vm326, %v325, 0.0
  %v361 = vadd.f32 %v359, %v360
  %v362 = vrot.slane %v361, 4
  %v363 = vadd.f32 %v361, %v362
  %v364 = vrot.slane %v363, 2
  %v365 = vadd.f32 %v363, %v364
  %v366 = vrot.slane %v365, 1
  %v367 = vadd.f32 %v365, %v366
  %vm368 = vcmask 516096
  %369 = vst.msk [vmem:[%s2] sm:$0x1] %vm368, %v367
  %v370 = vmul.f32 %v308, %v308
  %v371 = vmul.f32 %v309, %v309
  %v372 = vmul.f32 %v310, %v310
  %v373 = vmul.f32 %v311, %v311
  %v374 = vmul.f32 %v312, %v312
  %v375 = vmul.f32 %v313, %v313
  %v376 = vmul.f32 %v314, %v314
  %v377 = vmul.f32 %v315, %v315
  %v378 = vmul.f32 %v316, %v316
  %v379 = vmul.f32 %v317, %v317
  %v380 = vmul.f32 %v318, %v318
  %v381 = vmul.f32 %v319, %v319
  %v382 = vmul.f32 %v320, %v320
  %v383 = vmul.f32 %v321, %v321
  %v384 = vmul.f32 %v322, %v322
  %v385 = vmul.f32 %v323, %v323
  %v386 = vmul.f32 %v324, %v324
  %v387 = vmul.f32 %v325, %v325
  %v388 = vsel %vm326, %v370, 0.0
  %v389 = vsel %vm326, %v371, 0.0
  %v390 = vadd.f32 %v388, %v389
  %v391 = vsel %vm326, %v372, 0.0
  %v392 = vadd.f32 %v390, %v391
  %v393 = vsel %vm326, %v373, 0.0
  %v394 = vadd.f32 %v392, %v393
  %v395 = vsel %vm326, %v374, 0.0
  %v396 = vadd.f32 %v394, %v395
  %v397 = vsel %vm326, %v375, 0.0
  %v398 = vadd.f32 %v396, %v397
  %v399 = vsel %vm326, %v376, 0.0
  %v400 = vadd.f32 %v398, %v399
  %v401 = vsel %vm326, %v377, 0.0
  %v402 = vadd.f32 %v400, %v401
  %v403 = vsel %vm326, %v378, 0.0
  %v404 = vadd.f32 %v402, %v403
  %v405 = vsel %vm326, %v379, 0.0
  %v406 = vadd.f32 %v404, %v405
  %v407 = vsel %vm326, %v380, 0.0
  %v408 = vadd.f32 %v406, %v407
  %v409 = vsel %vm326, %v381, 0.0
  %v410 = vadd.f32 %v408, %v409
  %v411 = vsel %vm326, %v382, 0.0
  %v412 = vadd.f32 %v410, %v411
  %v413 = vsel %vm326, %v383, 0.0
  %v414 = vadd.f32 %v412, %v413
  %v415 = vsel %vm326, %v384, 0.0
  %v416 = vadd.f32 %v414, %v415
  %v417 = vsel %vm326, %v385, 0.0
  %v418 = vadd.f32 %v416, %v417
  %v419 = vsel %vm326, %v386, 0.0
  %v420 = vadd.f32 %v418, %v419
  %v421 = vsel %vm326, %v387, 0.0
  %v422 = vadd.f32 %v420, %v421
  %v423 = vrot.slane %v422, 4
  %v424 = vadd.f32 %v422, %v423
  %v425 = vrot.slane %v424, 2
  %v426 = vadd.f32 %v424, %v425
  %v427 = vrot.slane %v426, 1
  %v428 = vadd.f32 %v426, %v427
  %429 = vst.msk [vmem:[%s3] sm:$0x1] %vm368, %v428
  // Predicated region
  $region10: #{tnet_forward.4} parent=0 // pred_check
    _
  $region11: #{tnet_forward.4} parent=0 // pred_check_branch
    %431 = sbr.rel (0) target = $region13
  $region12: #{tnet_forward.4} parent=0 // pred_region
    _
  $region13: #{tnet_forward.4} parent=0 // pred_fallthru
    _
  // Predicated region
  $region14: #{tnet_forward.4} parent=0 // pred_check
    _
  $region15: #{tnet_forward.4} parent=0 // pred_check_branch
    %433 = sbr.rel (0) target = $region17
  $region16: #{tnet_forward.4} parent=0 // pred_region
    _
  $region17: #{tnet_forward.4} parent=0 // pred_fallthru
    _
  // Predicated region
  $region18: #{tnet_forward.4} parent=0 // pred_check
    _
  $region19: #{tnet_forward.4} parent=0 // pred_check_branch
    %435 = sbr.rel (0) target = $region21
  $region20: #{tnet_forward.4} parent=0 // pred_region
    _
  $region21: #{tnet_forward.4} parent=0 // pred_fallthru
    _
  // Predicated region
  $region22: #{tnet_forward.4} parent=0 // pred_check
    _
  $region23: #{tnet_forward.4} parent=0 // pred_check_branch
    %437 = sbr.rel (0) target = $region25
  $region24: #{tnet_forward.4} parent=0 // pred_region
    _
  $region25: #{tnet_forward.4} parent=0 // pred_fallthru
    _

// kernel: tnet_forward.5
$region0: #{tnet_forward.5}
  #allocation0 [shape = 'u32[]', space=smem, size = 0x4, offset = 0x4, fixed_abs, tag = 'smem constant byte address 0x4 - core index']
  #allocation1 [shape = 'u32[144,128]{1,0:T(1,128)}', space=vmem, size = 0x12000, scoped, tag = 'internal scratch']
  %s0 = inlined_call_operand.vmem [shape: bf16[144,4], index: 0, kind: input, shape index: {}]
  %s1 = inlined_call_operand.vmem [shape: bf16[4,64], index: 1, kind: input, shape index: {}]
  %s2 = inlined_call_operand.vmem [shape: f32[1,64], index: 2, kind: input, shape index: {}]
  %s3 = inlined_call_operand.vmem [shape: f32[1,64], index: 3, kind: input, shape index: {}]
  %s4 = inlined_call_operand.vmem [shape: bf16[64,128], index: 4, kind: input, shape index: {}]
  %s5 = inlined_call_operand.vmem [shape: f32[1,1,128], index: 5, kind: output, shape index: {0}]
  %s6 = inlined_call_operand.vmem [shape: f32[1,1,128], index: 6, kind: output, shape index: {1}]
  %7 = xla_tuple %s5, %s6
  %s8 = sld [smem:[#allocation0]]
  $region38: #{tnet_forward.5} parent=0
    _
  %s10 = ssub.s32 1, %s8
  %s11 = scalar_select 0, %s10, %s8
  // Predicated region
  $region2: #{tnet_forward.5} parent=0 // pred_check
    _
  $region3: #{tnet_forward.5} parent=0 // pred_check_branch
    %13 = sbr.rel (0) target = $region5
  $region4: #{tnet_forward.5} parent=0 // pred_region
    _
  $region5: #{tnet_forward.5} parent=0 // pred_fallthru
    _
  // Predicated region
  $region6: #{tnet_forward.5} parent=0 // pred_check
    _
  $region7: #{tnet_forward.5} parent=0 // pred_check_branch
    %15 = sbr.rel (0) target = $region9
  $region8: #{tnet_forward.5} parent=0 // pred_region
    _
  $region9: #{tnet_forward.5} parent=0 // pred_fallthru
    _
  // Predicated region
  $region10: #{tnet_forward.5} parent=0 // pred_check
    _
  $region11: #{tnet_forward.5} parent=0 // pred_check_branch
    %17 = sbr.rel (0) target = $region13
  $region12: #{tnet_forward.5} parent=0 // pred_region
    _
  $region13: #{tnet_forward.5} parent=0 // pred_fallthru
    _
  // Predicated region
  $region14: #{tnet_forward.5} parent=0 // pred_check
    _
  $region15: #{tnet_forward.5} parent=0 // pred_check_branch
    %19 = sbr.rel (0) target = $region17
  $region16: #{tnet_forward.5} parent=0 // pred_region
    _
  $region17: #{tnet_forward.5} parent=0 // pred_fallthru
    _
  // Predicated region
  $region18: #{tnet_forward.5} parent=0 // pred_check
    _
  $region19: #{tnet_forward.5} parent=0 // pred_check_branch
    %21 = sbr.rel (0) target = $region21
  $region20: #{tnet_forward.5} parent=0 // pred_region
    _
  $region21: #{tnet_forward.5} parent=0 // pred_fallthru
    _
  %v23 = vld [vmem:[%s0] sm:$0xf]
  %v24 = vld [vmem:[%s0 + $0x4] sm:$0xf]
  %v25 = vld [vmem:[%s0 + $0x8] sm:$0xf]
  %v26 = vld [vmem:[%s0 + $0xc] sm:$0xf]
  %v27 = vld [vmem:[%s0 + $0x10] sm:$0xf]
  %v28 = vld [vmem:[%s0 + $0x14] sm:$0xf]
  %v29 = vld [vmem:[%s0 + $0x18] sm:$0xf]
  %v30 = vld [vmem:[%s0 + $0x1c] sm:$0xf]
  %v31 = vld [vmem:[%s0 + $0x20] sm:$0xf]
  %v32 = vld [vmem:[%s0 + $0x24] sm:$0xf]
  %v33 = vld [vmem:[%s0 + $0x28] sm:$0xf]
  %v34 = vld [vmem:[%s0 + $0x2c] sm:$0xf]
  %v35 = vld [vmem:[%s0 + $0x30] sm:$0xf]
  %v36 = vld [vmem:[%s0 + $0x34] sm:$0xf]
  %v37 = vld [vmem:[%s0 + $0x38] sm:$0xf]
  %v38 = vld [vmem:[%s0 + $0x3c] sm:$0xf]
  %v39 = vld [vmem:[%s0 + $0x40] sm:$0xf]
  %v40 = vld [vmem:[%s0 + $0x44] sm:$0xf]
  %v41 = vld [vmem:[%s1] sm:$0x3]
  %v42 = vld [vmem:[%s4] sm:$0xf]
  %v43 = vld [vmem:[%s4 + $0x4] sm:$0xf]
  %v44 = vld [vmem:[%s4 + $0x8] sm:$0xf]
  %v45 = vld [vmem:[%s4 + $0xc] sm:$0xf]
  %v46 = vld [vmem:[%s4 + $0x10] sm:$0xf]
  %v47 = vld [vmem:[%s4 + $0x14] sm:$0xf]
  %v48 = vld [vmem:[%s4 + $0x18] sm:$0xf]
  %v49 = vld [vmem:[%s4 + $0x1c] sm:$0xf]
  %v50 = vld [vmem:[%s2] sm:$0x1]
  %v51 = vld [vmem:[%s3] sm:$0x1]
  %v70 = vunpack.c.l.b16 %v23
  %v71 = vunpack.c.l.b16 %v24
  %v72 = vunpack.c.l.b16 %v25
  %v73 = vunpack.c.l.b16 %v26
  %v74 = vunpack.c.l.b16 %v27
  %v75 = vunpack.c.l.b16 %v28
  %v76 = vunpack.c.l.b16 %v29
  %v77 = vunpack.c.l.b16 %v30
  %v78 = vunpack.c.l.b16 %v31
  %v79 = vunpack.c.l.b16 %v32
  %v80 = vunpack.c.l.b16 %v33
  %v81 = vunpack.c.l.b16 %v34
  %v82 = vunpack.c.l.b16 %v35
  %v83 = vunpack.c.l.b16 %v36
  %v84 = vunpack.c.l.b16 %v37
  %v85 = vunpack.c.l.b16 %v38
  %v86 = vunpack.c.l.b16 %v39
  %v87 = vunpack.c.l.b16 %v40
  %v88 = vpack.c.b16 %v71, %v70
  %v89 = vpack.c.b16 %v73, %v72
  %v90 = vpack.c.b16 %v75, %v74
  %v91 = vpack.c.b16 %v77, %v76
  %v92 = vpack.c.b16 %v79, %v78
  %v93 = vpack.c.b16 %v81, %v80
  %v94 = vpack.c.b16 %v83, %v82
  %v95 = vpack.c.b16 %v85, %v84
  %v96 = vpack.c.b16 %v87, %v86
  %vm97 = vcmask 31744
  %v99 = vsel %vm97, %v88, 0
  %v102 = vsel %vm97, %v89, 0
  %v105 = vsel %vm97, %v90, 0
  %v108 = vsel %vm97, %v91, 0
  %v111 = vsel %vm97, %v92, 0
  %v114 = vsel %vm97, %v93, 0
  %v117 = vsel %vm97, %v94, 0
  %v120 = vsel %vm97, %v95, 0
  %v123 = vsel %vm97, %v96, 0
  %vm125 = vcmask 1041408
  %v127 = vsel %vm125, %v41, 0
  %129 = vmatprep.subr.bf16.mxu0 0
  %130 = vmatpush1.bf16.msra.mxu0 %v127
  %131 = vmatprep.subr.bf16.mxu0 0
  %132 = vmatpush1.bf16.msra.mxu0 0
  %133 = vmatprep.subr.bf16.mxu0 0
  %134 = vmatpush1.bf16.msra.mxu0 0
  %135 = vmatprep.subr.bf16.mxu0 0
  %136 = vmatpush1.bf16.msra.mxu0 0
  %137 = vmatprep.subr.bf16.mxu0 0
  %138 = vmatpush1.bf16.msra.mxu0 0
  %139 = vmatprep.subr.bf16.mxu0 0
  %140 = vmatpush1.bf16.msra.mxu0 0
  %141 = vmatprep.subr.bf16.mxu0 0
  %142 = vmatpush1.bf16.msra.mxu0 0
  %143 = vmatprep.subr.bf16.mxu0 0
  %144 = vmatpush1.bf16.msra.mxu0 0
  %145 = vmatprep.subr.bf16.mxu0 0
  %146 = vmatpush1.bf16.msra.mxu0 0
  %147 = vmatprep.subr.bf16.mxu0 0
  %148 = vmatpush1.bf16.msra.mxu0 0
  %149 = vmatprep.subr.bf16.mxu0 0
  %150 = vmatpush1.bf16.msra.mxu0 0
  %151 = vmatprep.subr.bf16.mxu0 0
  %152 = vmatpush1.bf16.msra.mxu0 0
  %153 = vmatprep.subr.bf16.mxu0 0
  %154 = vmatpush1.bf16.msra.mxu0 0
  %155 = vmatprep.subr.bf16.mxu0 0
  %156 = vmatpush1.bf16.msra.mxu0 0
  %157 = vmatprep.subr.bf16.mxu0 0
  %158 = vmatpush1.bf16.msra.mxu0 0
  %159 = vmatprep.subr.bf16.mxu0 0
  %160 = vmatpush1.bf16.msra.mxu0 0
  %161 = vmatprep.mubr.bf16.mxu0 0
  %162 = vmatmul.mubr.bf16.gmra.mrb[0].mxu0 %v99
  %v163 = vpop.f32.mrb[0].mxu0
  %v164 = vadd.f32 0.0, %v163
  %v165 = vpop.f32.mrb[0].mxu0
  %v166 = vpop.f32.mrb[0].mxu0
  %v167 = vadd.f32 0.0, %v166
  %v168 = vpop.f32.mrb[0].mxu0
  %169 = vmatprep.mubr.bf16.mxu0 0
  %170 = vmatmul.mubr.bf16.gmra.mrb[0].mxu0 %v102
  %v171 = vpop.f32.mrb[0].mxu0
  %v172 = vadd.f32 0.0, %v171
  %v173 = vpop.f32.mrb[0].mxu0
  %v174 = vpop.f32.mrb[0].mxu0
  %v175 = vadd.f32 0.0, %v174
  %v176 = vpop.f32.mrb[0].mxu0
  %177 = vmatprep.mubr.bf16.mxu0 0
  %178 = vmatmul.mubr.bf16.gmra.mrb[0].mxu0 %v105
  %v179 = vpop.f32.mrb[0].mxu0
  %v180 = vadd.f32 0.0, %v179
  %v181 = vpop.f32.mrb[0].mxu0
  %v182 = vpop.f32.mrb[0].mxu0
  %v183 = vadd.f32 0.0, %v182
  %v184 = vpop.f32.mrb[0].mxu0
  %185 = vmatprep.mubr.bf16.mxu0 0
  %186 = vmatmul.mubr.bf16.gmra.mrb[0].mxu0 %v108
  %v187 = vpop.f32.mrb[0].mxu0
  %v188 = vadd.f32 0.0, %v187
  %v189 = vpop.f32.mrb[0].mxu0
  %v190 = vpop.f32.mrb[0].mxu0
  %v191 = vadd.f32 0.0, %v190
  %v192 = vpop.f32.mrb[0].mxu0
  %193 = vmatprep.mubr.bf16.mxu0 0
  %194 = vmatmul.mubr.bf16.gmra.mrb[0].mxu0 %v111
  %v195 = vpop.f32.mrb[0].mxu0
  %v196 = vadd.f32 0.0, %v195
  %v197 = vpop.f32.mrb[0].mxu0
  %v198 = vpop.f32.mrb[0].mxu0
  %v199 = vadd.f32 0.0, %v198
  %v200 = vpop.f32.mrb[0].mxu0
  %201 = vmatprep.mubr.bf16.mxu0 0
  %202 = vmatmul.mubr.bf16.gmra.mrb[0].mxu0 %v114
  %v203 = vpop.f32.mrb[0].mxu0
  %v204 = vadd.f32 0.0, %v203
  %v205 = vpop.f32.mrb[0].mxu0
  %v206 = vpop.f32.mrb[0].mxu0
  %v207 = vadd.f32 0.0, %v206
  %v208 = vpop.f32.mrb[0].mxu0
  %209 = vmatprep.mubr.bf16.mxu0 0
  %210 = vmatmul.mubr.bf16.gmra.mrb[0].mxu0 %v117
  %v211 = vpop.f32.mrb[0].mxu0
  %v212 = vadd.f32 0.0, %v211
  %v213 = vpop.f32.mrb[0].mxu0
  %v214 = vpop.f32.mrb[0].mxu0
  %v215 = vadd.f32 0.0, %v214
  %v216 = vpop.f32.mrb[0].mxu0
  %217 = vmatprep.mubr.bf16.mxu0 0
  %218 = vmatmul.mubr.bf16.gmra.mrb[0].mxu0 %v120
  %v219 = vpop.f32.mrb[0].mxu0
  %v220 = vadd.f32 0.0, %v219
  %v221 = vpop.f32.mrb[0].mxu0
  %v222 = vpop.f32.mrb[0].mxu0
  %v223 = vadd.f32 0.0, %v222
  %v224 = vpop.f32.mrb[0].mxu0
  %225 = vmatprep.mubr.bf16.mxu0 0
  %226 = vmatmul.mubr.bf16.gmra.mrb[0].mxu0 %v123
  %v227 = vpop.f32.mrb[0].mxu0
  %v228 = vadd.f32 0.0, %v227
  %v229 = vpop.f32.mrb[0].mxu0
  %v230 = vpop.f32.mrb[0].mxu0
  %v231 = vadd.f32 0.0, %v230
  %v232 = vpop.f32.mrb[0].mxu0
  %233 = vdwg.mxu0
  %v235 = vlaneseq
  %v236 = vshrl.u32 %v235, 7
  %v237 = vsub.s32 0, %v236
  %v238 = vrot.slane %v50, %v237
  %v240 = vmul.f32 %v164, %v238
  %v241 = vmul.f32 %v167, %v238
  %v242 = vmul.f32 %v172, %v238
  %v243 = vmul.f32 %v175, %v238
  %v244 = vmul.f32 %v180, %v238
  %v245 = vmul.f32 %v183, %v238
  %v246 = vmul.f32 %v188, %v238
  %v247 = vmul.f32 %v191, %v238
  %v248 = vmul.f32 %v196, %v238
  %v249 = vmul.f32 %v199, %v238
  %v250 = vmul.f32 %v204, %v238
  %v251 = vmul.f32 %v207, %v238
  %v252 = vmul.f32 %v212, %v238
  %v253 = vmul.f32 %v215, %v238
  %v254 = vmul.f32 %v220, %v238
  %v255 = vmul.f32 %v223, %v238
  %v256 = vmul.f32 %v228, %v238
  %v257 = vmul.f32 %v231, %v238
  %v259 = vlaneseq
  %v260 = vshrl.u32 %v259, 7
  %v261 = vsub.s32 0, %v260
  %v262 = vrot.slane %v51, %v261
  %v264 = vadd.f32 %v240, %v262
  %v265 = vadd.f32 %v241, %v262
  %v266 = vadd.f32 %v242, %v262
  %v267 = vadd.f32 %v243, %v262
  %v268 = vadd.f32 %v244, %v262
  %v269 = vadd.f32 %v245, %v262
  %v270 = vadd.f32 %v246, %v262
  %v271 = vadd.f32 %v247, %v262
  %v272 = vadd.f32 %v248, %v262
  %v273 = vadd.f32 %v249, %v262
  %v274 = vadd.f32 %v250, %v262
  %v275 = vadd.f32 %v251, %v262
  %v276 = vadd.f32 %v252, %v262
  %v277 = vadd.f32 %v253, %v262
  %v278 = vadd.f32 %v254, %v262
  %v279 = vadd.f32 %v255, %v262
  %v280 = vadd.f32 %v256, %v262
  %v281 = vadd.f32 %v257, %v262
  %v282 = vmax.f32 %v264, 0.0
  %v283 = vmax.f32 %v265, 0.0
  %v284 = vmax.f32 %v266, 0.0
  %v285 = vmax.f32 %v267, 0.0
  %v286 = vmax.f32 %v268, 0.0
  %v287 = vmax.f32 %v269, 0.0
  %v288 = vmax.f32 %v270, 0.0
  %v289 = vmax.f32 %v271, 0.0
  %v290 = vmax.f32 %v272, 0.0
  %v291 = vmax.f32 %v273, 0.0
  %v292 = vmax.f32 %v274, 0.0
  %v293 = vmax.f32 %v275, 0.0
  %v294 = vmax.f32 %v276, 0.0
  %v295 = vmax.f32 %v277, 0.0
  %v296 = vmax.f32 %v278, 0.0
  %v297 = vmax.f32 %v279, 0.0
  %v298 = vmax.f32 %v280, 0.0
  %v299 = vmax.f32 %v281, 0.0
  %v300 = vpack.c.bf16 %v283, %v282
  %v301 = vpack.c.bf16 %v285, %v284
  %v302 = vpack.c.bf16 %v287, %v286
  %v303 = vpack.c.bf16 %v289, %v288
  %v304 = vpack.c.bf16 %v291, %v290
  %v305 = vpack.c.bf16 %v293, %v292
  %v306 = vpack.c.bf16 %v295, %v294
  %v307 = vpack.c.bf16 %v297, %v296
  %v308 = vpack.c.bf16 %v299, %v298
  %v317 = vunpack.c.l.b16 %v42
  %v318 = vunpack.c.l.b16 %v43
  %v319 = vunpack.c.l.b16 %v44
  %v320 = vunpack.c.l.b16 %v45
  %v321 = vunpack.c.l.b16 %v46
  %v322 = vunpack.c.l.b16 %v47
  %v323 = vunpack.c.l.b16 %v48
  %v324 = vunpack.c.l.b16 %v49
  %v325 = vpack.c.b16 %v318, %v317
  %v326 = vpack.c.b16 %v320, %v319
  %v327 = vpack.c.b16 %v322, %v321
  %v328 = vpack.c.b16 %v324, %v323
  %vm333 = vcmask 523264
  %v335 = vsel %vm333, %v300, 0
  %v338 = vsel %vm333, %v301, 0
  %v341 = vsel %vm333, %v302, 0
  %v344 = vsel %vm333, %v303, 0
  %v347 = vsel %vm333, %v304, 0
  %v350 = vsel %vm333, %v305, 0
  %v353 = vsel %vm333, %v306, 0
  %v356 = vsel %vm333, %v307, 0
  %v359 = vsel %vm333, %v308, 0
  %361 = vmatprep.subr.bf16.mxu0 0
  %362 = vmatpush1.bf16.msra.mxu0 %v325
  %363 = vmatprep.subr.bf16.mxu0 0
  %364 = vmatpush1.bf16.msra.mxu0 %v326
  %365 = vmatprep.subr.bf16.mxu0 0
  %366 = vmatpush1.bf16.msra.mxu0 %v327
  %367 = vmatprep.subr.bf16.mxu0 0
  %368 = vmatpush1.bf16.msra.mxu0 %v328
  %369 = vmatprep.subr.bf16.mxu0 0
  %370 = vmatpush1.bf16.msra.mxu0 0
  %371 = vmatprep.subr.bf16.mxu0 0
  %372 = vmatpush1.bf16.msra.mxu0 0
  %373 = vmatprep.subr.bf16.mxu0 0
  %374 = vmatpush1.bf16.msra.mxu0 0
  %375 = vmatprep.subr.bf16.mxu0 0
  %376 = vmatpush1.bf16.msra.mxu0 0
  %377 = vmatprep.subr.bf16.mxu0 0
  %378 = vmatpush1.bf16.msra.mxu0 0
  %379 = vmatprep.subr.bf16.mxu0 0
  %380 = vmatpush1.bf16.msra.mxu0 0
  %381 = vmatprep.subr.bf16.mxu0 0
  %382 = vmatpush1.bf16.msra.mxu0 0
  %383 = vmatprep.subr.bf16.mxu0 0
  %384 = vmatpush1.bf16.msra.mxu0 0
  %385 = vmatprep.subr.bf16.mxu0 0
  %386 = vmatpush1.bf16.msra.mxu0 0
  %387 = vmatprep.subr.bf16.mxu0 0
  %388 = vmatpush1.bf16.msra.mxu0 0
  %389 = vmatprep.subr.bf16.mxu0 0
  %390 = vmatpush1.bf16.msra.mxu0 0
  %391 = vmatprep.subr.bf16.mxu0 0
  %392 = vmatpush1.bf16.msra.mxu0 0
  %393 = vmatprep.mubr.bf16.mxu0 0
  %394 = vmatmul.mubr.bf16.gmra.mrb[0].mxu0 %v335
  %v395 = vpop.f32.mrb[0].mxu0
  %v396 = vadd.f32 0.0, %v395
  %v397 = vpop.f32.mrb[0].mxu0
  %v398 = vpop.f32.mrb[0].mxu0
  %v399 = vadd.f32 0.0, %v398
  %v400 = vpop.f32.mrb[0].mxu0
  %401 = vmatprep.mubr.bf16.mxu0 0
  %402 = vmatmul.mubr.bf16.gmra.mrb[0].mxu0 %v338
  %v403 = vpop.f32.mrb[0].mxu0
  %v404 = vadd.f32 0.0, %v403
  %v405 = vpop.f32.mrb[0].mxu0
  %v406 = vpop.f32.mrb[0].mxu0
  %v407 = vadd.f32 0.0, %v406
  %v408 = vpop.f32.mrb[0].mxu0
  %409 = vmatprep.mubr.bf16.mxu0 0
  %410 = vmatmul.mubr.bf16.gmra.mrb[0].mxu0 %v341
  %v411 = vpop.f32.mrb[0].mxu0
  %v412 = vadd.f32 0.0, %v411
  %v413 = vpop.f32.mrb[0].mxu0
  %v414 = vpop.f32.mrb[0].mxu0
  %v415 = vadd.f32 0.0, %v414
  %v416 = vpop.f32.mrb[0].mxu0
  %417 = vmatprep.mubr.bf16.mxu0 0
  %418 = vmatmul.mubr.bf16.gmra.mrb[0].mxu0 %v344
  %v419 = vpop.f32.mrb[0].mxu0
  %v420 = vadd.f32 0.0, %v419
  %v421 = vpop.f32.mrb[0].mxu0
  %v422 = vpop.f32.mrb[0].mxu0
  %v423 = vadd.f32 0.0, %v422
  %v424 = vpop.f32.mrb[0].mxu0
  %425 = vmatprep.mubr.bf16.mxu0 0
  %426 = vmatmul.mubr.bf16.gmra.mrb[0].mxu0 %v347
  %v427 = vpop.f32.mrb[0].mxu0
  %v428 = vadd.f32 0.0, %v427
  %v429 = vpop.f32.mrb[0].mxu0
  %v430 = vpop.f32.mrb[0].mxu0
  %v431 = vadd.f32 0.0, %v430
  %v432 = vpop.f32.mrb[0].mxu0
  %433 = vmatprep.mubr.bf16.mxu0 0
  %434 = vmatmul.mubr.bf16.gmra.mrb[0].mxu0 %v350
  %v435 = vpop.f32.mrb[0].mxu0
  %v436 = vadd.f32 0.0, %v435
  %v437 = vpop.f32.mrb[0].mxu0
  %v438 = vpop.f32.mrb[0].mxu0
  %v439 = vadd.f32 0.0, %v438
  %v440 = vpop.f32.mrb[0].mxu0
  %441 = vmatprep.mubr.bf16.mxu0 0
  %442 = vmatmul.mubr.bf16.gmra.mrb[0].mxu0 %v353
  %v443 = vpop.f32.mrb[0].mxu0
  %v444 = vadd.f32 0.0, %v443
  %v445 = vpop.f32.mrb[0].mxu0
  %v446 = vpop.f32.mrb[0].mxu0
  %v447 = vadd.f32 0.0, %v446
  %v448 = vpop.f32.mrb[0].mxu0
  %449 = vmatprep.mubr.bf16.mxu0 0
  %450 = vmatmul.mubr.bf16.gmra.mrb[0].mxu0 %v356
  %v451 = vpop.f32.mrb[0].mxu0
  %v452 = vadd.f32 0.0, %v451
  %v453 = vpop.f32.mrb[0].mxu0
  %v454 = vpop.f32.mrb[0].mxu0
  %v455 = vadd.f32 0.0, %v454
  %v456 = vpop.f32.mrb[0].mxu0
  %457 = vmatprep.mubr.bf16.mxu0 0
  %458 = vmatmul.mubr.bf16.gmra.mrb[0].mxu0 %v359
  %v459 = vpop.f32.mrb[0].mxu0
  %v460 = vadd.f32 0.0, %v459
  %v461 = vpop.f32.mrb[0].mxu0
  %v462 = vpop.f32.mrb[0].mxu0
  %v463 = vadd.f32 0.0, %v462
  %v464 = vpop.f32.mrb[0].mxu0
  %465 = vdwg.mxu0
  %s466 = smul.u32 0, 144
  %v467 = vlaneseq
  %v468 = vshrl.u32 %v467, 7
  %v469 = vadd.s32 %v468, 8
  %v470 = vadd.s32 %v468, 16
  %v471 = vadd.s32 %v468, 24
  %v472 = vadd.s32 %v468, 32
  %v473 = vadd.s32 %v468, 40
  %v474 = vadd.s32 %v468, 48
  %v475 = vadd.s32 %v468, 56
  %v476 = vadd.s32 %v468, 64
  %v477 = vadd.s32 %v468, 72
  %v478 = vadd.s32 %v468, 80
  %v479 = vadd.s32 %v468, 88
  %v480 = vadd.s32 %v468, 96
  %v481 = vadd.s32 %v468, 104
  %v482 = vadd.s32 %v468, 112
  %v483 = vadd.s32 %v468, 120
  %v484 = vadd.s32 %v468, 128
  %v485 = vadd.s32 %v468, 136
  %v486 = vstv %s466
  %v487 = vadd.s32 %v468, %v486
  %v488 = vadd.s32 %v469, %v486
  %v489 = vadd.s32 %v470, %v486
  %v490 = vadd.s32 %v471, %v486
  %v491 = vadd.s32 %v472, %v486
  %v492 = vadd.s32 %v473, %v486
  %v493 = vadd.s32 %v474, %v486
  %v494 = vadd.s32 %v475, %v486
  %v495 = vadd.s32 %v476, %v486
  %v496 = vadd.s32 %v477, %v486
  %v497 = vadd.s32 %v478, %v486
  %v498 = vadd.s32 %v479, %v486
  %v499 = vadd.s32 %v480, %v486
  %v500 = vadd.s32 %v481, %v486
  %v501 = vadd.s32 %v482, %v486
  %v502 = vadd.s32 %v483, %v486
  %v503 = vadd.s32 %v484, %v486
  %v504 = vadd.s32 %v485, %v486
  %vm505 = vcmp.lt.s32.totalorder %v487, 144
  %vm506 = vcmp.lt.s32.totalorder %v488, 144
  %vm507 = vcmp.lt.s32.totalorder %v489, 144
  %vm508 = vcmp.lt.s32.totalorder %v490, 144
  %vm509 = vcmp.lt.s32.totalorder %v491, 144
  %vm510 = vcmp.lt.s32.totalorder %v492, 144
  %vm511 = vcmp.lt.s32.totalorder %v493, 144
  %vm512 = vcmp.lt.s32.totalorder %v494, 144
  %vm513 = vcmp.lt.s32.totalorder %v495, 144
  %vm514 = vcmp.lt.s32.totalorder %v496, 144
  %vm515 = vcmp.lt.s32.totalorder %v497, 144
  %vm516 = vcmp.lt.s32.totalorder %v498, 144
  %vm517 = vcmp.lt.s32.totalorder %v499, 144
  %vm518 = vcmp.lt.s32.totalorder %v500, 144
  %vm519 = vcmp.lt.s32.totalorder %v501, 144
  %vm520 = vcmp.lt.s32.totalorder %v502, 144
  %vm521 = vcmp.lt.s32.totalorder %v503, 144
  %vm522 = vcmp.lt.s32.totalorder %v504, 144
  %v523 = vsel %vm505, 1, 0
  %v524 = vsel %vm506, 1, 0
  %v525 = vsel %vm507, 1, 0
  %v526 = vsel %vm508, 1, 0
  %v527 = vsel %vm509, 1, 0
  %v528 = vsel %vm510, 1, 0
  %v529 = vsel %vm511, 1, 0
  %v530 = vsel %vm512, 1, 0
  %v531 = vsel %vm513, 1, 0
  %v532 = vsel %vm514, 1, 0
  %v533 = vsel %vm515, 1, 0
  %v534 = vsel %vm516, 1, 0
  %v535 = vsel %vm517, 1, 0
  %v536 = vsel %vm518, 1, 0
  %v537 = vsel %vm519, 1, 0
  %v538 = vsel %vm520, 1, 0
  %v539 = vsel %vm521, 1, 0
  %v540 = vsel %vm522, 1, 0
  %vm541 = vcmp.eq.s32.totalorder %v523, 1
  %vm542 = vcmp.eq.s32.totalorder %v524, 1
  %vm543 = vcmp.eq.s32.totalorder %v525, 1
  %vm544 = vcmp.eq.s32.totalorder %v526, 1
  %vm545 = vcmp.eq.s32.totalorder %v527, 1
  %vm546 = vcmp.eq.s32.totalorder %v528, 1
  %vm547 = vcmp.eq.s32.totalorder %v529, 1
  %vm548 = vcmp.eq.s32.totalorder %v530, 1
  %vm549 = vcmp.eq.s32.totalorder %v531, 1
  %vm550 = vcmp.eq.s32.totalorder %v532, 1
  %vm551 = vcmp.eq.s32.totalorder %v533, 1
  %vm552 = vcmp.eq.s32.totalorder %v534, 1
  %vm553 = vcmp.eq.s32.totalorder %v535, 1
  %vm554 = vcmp.eq.s32.totalorder %v536, 1
  %vm555 = vcmp.eq.s32.totalorder %v537, 1
  %vm556 = vcmp.eq.s32.totalorder %v538, 1
  %vm557 = vcmp.eq.s32.totalorder %v539, 1
  %vm558 = vcmp.eq.s32.totalorder %v540, 1
  %v559 = vsel %vm541, %v396, 0.0
  %v560 = vsel %vm542, %v399, 0.0
  %v561 = vsel %vm543, %v404, 0.0
  %v562 = vsel %vm544, %v407, 0.0
  %v563 = vsel %vm545, %v412, 0.0
  %v564 = vsel %vm546, %v415, 0.0
  %v565 = vsel %vm547, %v420, 0.0
  %v566 = vsel %vm548, %v423, 0.0
  %v567 = vsel %vm549, %v428, 0.0
  %v568 = vsel %vm550, %v431, 0.0
  %v569 = vsel %vm551, %v436, 0.0
  %v570 = vsel %vm552, %v439, 0.0
  %v571 = vsel %vm553, %v444, 0.0
  %v572 = vsel %vm554, %v447, 0.0
  %v573 = vsel %vm555, %v452, 0.0
  %v574 = vsel %vm556, %v455, 0.0
  %v575 = vsel %vm557, %v460, 0.0
  %v576 = vsel %vm558, %v463, 0.0
  %v577 = vadd.f32 %v559, %v560
  %v578 = vadd.f32 %v577, %v561
  %v579 = vadd.f32 %v578, %v562
  %v580 = vadd.f32 %v579, %v563
  %v581 = vadd.f32 %v580, %v564
  %v582 = vadd.f32 %v581, %v565
  %v583 = vadd.f32 %v582, %v566
  %v584 = vadd.f32 %v583, %v567
  %v585 = vadd.f32 %v584, %v568
  %v586 = vadd.f32 %v585, %v569
  %v587 = vadd.f32 %v586, %v570
  %v588 = vadd.f32 %v587, %v571
  %v589 = vadd.f32 %v588, %v572
  %v590 = vadd.f32 %v589, %v573
  %v591 = vadd.f32 %v590, %v574
  %v592 = vadd.f32 %v591, %v575
  %v593 = vadd.f32 %v592, %v576
  %v594 = vrot.slane %v593, 4
  %v595 = vadd.f32 %v593, %v594
  %v596 = vrot.slane %v595, 2
  %v597 = vadd.f32 %v595, %v596
  %v598 = vrot.slane %v597, 1
  %v599 = vadd.f32 %v597, %v598
  %600 = vst [vmem:[%s5] sm:$0x1] %v599
  %v601 = vmul.f32 %v559, %v559
  %v602 = vmul.f32 %v560, %v560
  %v603 = vmul.f32 %v561, %v561
  %v604 = vmul.f32 %v562, %v562
  %v605 = vmul.f32 %v563, %v563
  %v606 = vmul.f32 %v564, %v564
  %v607 = vmul.f32 %v565, %v565
  %v608 = vmul.f32 %v566, %v566
  %v609 = vmul.f32 %v567, %v567
  %v610 = vmul.f32 %v568, %v568
  %v611 = vmul.f32 %v569, %v569
  %v612 = vmul.f32 %v570, %v570
  %v613 = vmul.f32 %v571, %v571
  %v614 = vmul.f32 %v572, %v572
  %v615 = vmul.f32 %v573, %v573
  %v616 = vmul.f32 %v574, %v574
  %v617 = vmul.f32 %v575, %v575
  %v618 = vmul.f32 %v576, %v576
  %v619 = vadd.f32 %v601, %v602
  %v620 = vadd.f32 %v619, %v603
  %v621 = vadd.f32 %v620, %v604
  %v622 = vadd.f32 %v621, %v605
  %v623 = vadd.f32 %v622, %v606
  %v624 = vadd.f32 %v623, %v607
  %v625 = vadd.f32 %v624, %v608
  %v626 = vadd.f32 %v625, %v609
  %v627 = vadd.f32 %v626, %v610
  %v628 = vadd.f32 %v627, %v611
  %v629 = vadd.f32 %v628, %v612
  %v630 = vadd.f32 %v629, %v613
  %v631 = vadd.f32 %v630, %v614
  %v632 = vadd.f32 %v631, %v615
  %v633 = vadd.f32 %v632, %v616
  %v634 = vadd.f32 %v633, %v617
  %v635 = vadd.f32 %v634, %v618
  %v636 = vrot.slane %v635, 4
  %v637 = vadd.f32 %v635, %v636
  %v638 = vrot.slane %v637, 2
  %v639 = vadd.f32 %v637, %v638
  %v640 = vrot.slane %v639, 1
  %v641 = vadd.f32 %v639, %v640
  %642 = vst [vmem:[%s6] sm:$0x1] %v641
  // Predicated region
  $region22: #{tnet_forward.5} parent=0 // pred_check
    _
  $region23: #{tnet_forward.5} parent=0 // pred_check_branch
    %644 = sbr.rel (0) target = $region25
  $region24: #{tnet_forward.5} parent=0 // pred_region
    _
  $region25: #{tnet_forward.5} parent=0 // pred_fallthru
    _
  // Predicated region
  $region26: #{tnet_forward.5} parent=0 // pred_check
    _
  $region27: #{tnet_forward.5} parent=0 // pred_check_branch
    %646 = sbr.rel (0) target = $region29
  $region28: #{tnet_forward.5} parent=0 // pred_region
    _
  $region29: #{tnet_forward.5} parent=0 // pred_fallthru
    _
  // Predicated region
  $region30: #{tnet_forward.5} parent=0 // pred_check
    _
  $region31: #{tnet_forward.5} parent=0 // pred_check_branch
    %648 = sbr.rel (0) target = $region33
  $region32: #{tnet_forward.5} parent=0 // pred_region
    _
  $region33: #{tnet_forward.5} parent=0 // pred_fallthru
    _
  // Predicated region
  $region34: #{tnet_forward.5} parent=0 // pred_check
    _
  $region35: #{tnet_forward.5} parent=0 // pred_check_branch
    %650 = sbr.rel (0) target = $region37
  $region36: #{tnet_forward.5} parent=0 // pred_region
    _
  $region37: #{tnet_forward.5} parent=0 // pred_fallthru
    _

// kernel: tnet_forward.6
$region0: #{tnet_forward.6}
  #allocation0 [shape = 'u32[]', space=smem, size = 0x4, offset = 0x4, fixed_abs, tag = 'smem constant byte address 0x4 - core index']
  #allocation1 [shape = 'u32[144,128]{1,0:T(1,128)}', space=vmem, size = 0x12000, scoped, tag = 'internal scratch']
  %s0 = inlined_call_operand.vmem [shape: bf16[4,40,4], index: 0, kind: input, shape index: {}]
  %s1 = inlined_call_operand.vmem [shape: bf16[4,64], index: 1, kind: input, shape index: {}]
  %s2 = inlined_call_operand.vmem [shape: f32[1,64], index: 2, kind: input, shape index: {}]
  %s3 = inlined_call_operand.vmem [shape: f32[1,64], index: 3, kind: input, shape index: {}]
  %s4 = inlined_call_operand.vmem [shape: bf16[64,128], index: 4, kind: input, shape index: {}]
  %s5 = inlined_call_operand.vmem [shape: f32[1,128], index: 5, kind: input, shape index: {}]
  %s6 = inlined_call_operand.vmem [shape: f32[1,128], index: 6, kind: input, shape index: {}]
  %s7 = inlined_call_operand.vmem [shape: bf16[128,1024], index: 7, kind: input, shape index: {}]
  %s8 = inlined_call_operand.vmem [shape: f32[4,1,1,1024], index: 8, kind: output, shape index: {0}]
  %s9 = inlined_call_operand.vmem [shape: f32[4,1,1,1024], index: 9, kind: output, shape index: {1}]
  %s10 = inlined_call_operand.vmem [shape: f32[4,1,1,1024], index: 10, kind: output, shape index: {2}]
  %s11 = inlined_call_operand.vmem [shape: f32[4,1,1,1024], index: 11, kind: output, shape index: {3}]
  %12 = xla_tuple %s8, %s9, %s10, %s11
  %s13 = sld [smem:[#allocation0]]
  $region89: #{tnet_forward.6} parent=0
    _
  %s15 = ssub.s32 1, %s13
  %s16 = scalar_select 0, %s15, %s13
  loop: start=0, step=1, limit=6
  $region2: #{tnet_forward.6} parent=0 // loop_pre_header
    _
  $region3: #{tnet_forward.6} parent=0 // loop_header
    %s18 = sphi 0, %s22
    %p19 = scmp.ge.s32.totalorder %s18, 6
    %s25 = sphi 0, %s37
    %s26 = sphi 0, %s33
    %s27 = sphi 0, %s25
    %s28 = sphi 0, %s26
    %s29 = sphi 0, %s27
    %s30 = sphi 0, %s28
    %s42 = sphi 0, %s44
    %s45 = sphi 0, %s42
    %s46 = sphi 0, %s45
    %s62 = sphi 0, %s46
    %s66 = sphi 0, %s66
    %s68 = sphi 0, %s66
    %s69 = sphi 0, %s68
    %s83 = sphi 0, %s69
    %s87 = sphi 0, %s87
    %s89 = sphi 0, %s87
    %s90 = sphi 0, %s89
    %s104 = sphi 0, %s90
    %s108 = sphi 0, %s108
    %s110 = sphi 0, %s108
    %s111 = sphi 0, %s110
    %s125 = sphi 0, %s111
    %s129 = sphi 0, %s129
    %s131 = sphi 0, %s129
    %s132 = sphi 0, %s131
    %s146 = sphi 0, %s132
    %s150 = sphi 0, %s150
    %s152 = sphi 0, %s150
    %s153 = sphi 0, %s152
    %s167 = sphi 0, %s153
    %s171 = sphi 0, %s171
    %s173 = sphi 0, %s171
    %s174 = sphi 0, %s173
    %s188 = sphi 0, %s174
    %s192 = sphi 0, %s192
    %s194 = sphi 0, %s192
    %s195 = sphi 0, %s194
    %s209 = sphi 0, %s195
    %s217 = sphi 0, %s219
    %s220 = sphi 0, %s217
    %s221 = sphi 0, %s220
    %s237 = sphi 0, %s221
    %s245 = sphi 0, %s247
    %s248 = sphi 0, %s245
    %s249 = sphi 0, %s248
    %s265 = sphi 0, %s249
    %s273 = sphi 0, %s275
    %s276 = sphi 0, %s273
    %s277 = sphi 0, %s276
    %s293 = sphi 0, %s277
    %s301 = sphi 0, %s303
    %s304 = sphi 0, %s301
    %s305 = sphi 0, %s304
    %s321 = sphi 0, %s305
  $region4: #{tnet_forward.6} parent=0 // loop_header_branch
    %21 = sbr.rel (%p19) target = $region8
  $region5: #{tnet_forward.6} parent=0 // loop_body
    %s23 = ssub.s32 %s18, 1
    %s24 = ssub.s32 %s18, 2
    %s31 = sadd.s32 1, %s26
    %p32 = scmp.ge.s32.totalorder %s31, 1
    %s33 = scalar_select %p32, 0, %s31
    %s34 = sadd.s32 1, %s25
    %s35 = scalar_select %p32, %s34, %s25
    %p36 = scmp.ge.s32.totalorder %s35, 4
    %s37 = scalar_select %p36, 0, %s35
    %s38 = ssub.s32 %s25, %s37
    %s39 = ssub.s32 %s26, %s33
    %s40 = sor.u32 %s38, %s39
    %p41 = scmp.eq.s32.totalorder %s40, 0
    %s43 = sadd.s32 %s42, 1
    %s44 = scalar_select %p41, %s42, %s43
    %p47 = pneg %p41
    %p48 = scmp.eq.s32.totalorder %s18, 3
    %p49 = por %p47, %p48
    %p50 = scmp.ne.s32.totalorder %s42, %s45
    %p51 = scmp.eq.s32.totalorder %s18, 0
    %p52 = por %p50, %p51
    %p53 = scmp.ne.s32.totalorder %s42, %s45
    %p54 = scmp.eq.s32.totalorder %s23, 3
    %p55 = por %p53, %p54
    %p56 = scmp.ne.s32.totalorder %s45, %s46
    %p57 = scmp.eq.s32.totalorder %s23, 0
    %p58 = por %p56, %p57
    %p59 = scmp.ne.s32.totalorder %s45, %s46
    %p60 = scmp.eq.s32.totalorder %s24, 3
    %p61 = por %p59, %p60
    %p63 = scmp.ne.s32.totalorder %s46, %s62
    %p64 = scmp.eq.s32.totalorder %s24, 0
    %p65 = por %p63, %p64
    %s67 = sadd.s32 %s66, 1
    %p70 = scmp.eq.s32.totalorder %s18, 3
    %p71 = scmp.ne.s32.totalorder %s66, %s68
    %p72 = scmp.eq.s32.totalorder %s18, 0
    %p73 = por %p71, %p72
    %p74 = scmp.ne.s32.totalorder %s66, %s68
    %p75 = scmp.eq.s32.totalorder %s23, 3
    %p76 = por %p74, %p75
    %p77 = scmp.ne.s32.totalorder %s68, %s69
    %p78 = scmp.eq.s32.totalorder %s23, 0
    %p79 = por %p77, %p78
    %p80 = scmp.ne.s32.totalorder %s68, %s69
    %p81 = scmp.eq.s32.totalorder %s24, 3
    %p82 = por %p80, %p81
    %p84 = scmp.ne.s32.totalorder %s69, %s83
    %p85 = scmp.eq.s32.totalorder %s24, 0
    %p86 = por %p84, %p85
    %s88 = sadd.s32 %s87, 1
    %p91 = scmp.eq.s32.totalorder %s18, 3
    %p92 = scmp.ne.s32.totalorder %s87, %s89
    %p93 = scmp.eq.s32.totalorder %s18, 0
    %p94 = por %p92, %p93
    %p95 = scmp.ne.s32.totalorder %s87, %s89
    %p96 = scmp.eq.s32.totalorder %s23, 3
    %p97 = por %p95, %p96
    %p98 = scmp.ne.s32.totalorder %s89, %s90
    %p99 = scmp.eq.s32.totalorder %s23, 0
    %p100 = por %p98, %p99
    %p101 = scmp.ne.s32.totalorder %s89, %s90
    %p102 = scmp.eq.s32.totalorder %s24, 3
    %p103 = por %p101, %p102
    %p105 = scmp.ne.s32.totalorder %s90, %s104
    %p106 = scmp.eq.s32.totalorder %s24, 0
    %p107 = por %p105, %p106
    %s109 = sadd.s32 %s108, 1
    %p112 = scmp.eq.s32.totalorder %s18, 3
    %p113 = scmp.ne.s32.totalorder %s108, %s110
    %p114 = scmp.eq.s32.totalorder %s18, 0
    %p115 = por %p113, %p114
    %p116 = scmp.ne.s32.totalorder %s108, %s110
    %p117 = scmp.eq.s32.totalorder %s23, 3
    %p118 = por %p116, %p117
    %p119 = scmp.ne.s32.totalorder %s110, %s111
    %p120 = scmp.eq.s32.totalorder %s23, 0
    %p121 = por %p119, %p120
    %p122 = scmp.ne.s32.totalorder %s110, %s111
    %p123 = scmp.eq.s32.totalorder %s24, 3
    %p124 = por %p122, %p123
    %p126 = scmp.ne.s32.totalorder %s111, %s125
    %p127 = scmp.eq.s32.totalorder %s24, 0
    %p128 = por %p126, %p127
    %s130 = sadd.s32 %s129, 1
    %p133 = scmp.eq.s32.totalorder %s18, 3
    %p134 = scmp.ne.s32.totalorder %s129, %s131
    %p135 = scmp.eq.s32.totalorder %s18, 0
    %p136 = por %p134, %p135
    %p137 = scmp.ne.s32.totalorder %s129, %s131
    %p138 = scmp.eq.s32.totalorder %s23, 3
    %p139 = por %p137, %p138
    %p140 = scmp.ne.s32.totalorder %s131, %s132
    %p141 = scmp.eq.s32.totalorder %s23, 0
    %p142 = por %p140, %p141
    %p143 = scmp.ne.s32.totalorder %s131, %s132
    %p144 = scmp.eq.s32.totalorder %s24, 3
    %p145 = por %p143, %p144
    %p147 = scmp.ne.s32.totalorder %s132, %s146
    %p148 = scmp.eq.s32.totalorder %s24, 0
    %p149 = por %p147, %p148
    %s151 = sadd.s32 %s150, 1
    %p154 = scmp.eq.s32.totalorder %s18, 3
    %p155 = scmp.ne.s32.totalorder %s150, %s152
    %p156 = scmp.eq.s32.totalorder %s18, 0
    %p157 = por %p155, %p156
    %p158 = scmp.ne.s32.totalorder %s150, %s152
    %p159 = scmp.eq.s32.totalorder %s23, 3
    %p160 = por %p158, %p159
    %p161 = scmp.ne.s32.totalorder %s152, %s153
    %p162 = scmp.eq.s32.totalorder %s23, 0
    %p163 = por %p161, %p162
    %p164 = scmp.ne.s32.totalorder %s152, %s153
    %p165 = scmp.eq.s32.totalorder %s24, 3
    %p166 = por %p164, %p165
    %p168 = scmp.ne.s32.totalorder %s153, %s167
    %p169 = scmp.eq.s32.totalorder %s24, 0
    %p170 = por %p168, %p169
    %s172 = sadd.s32 %s171, 1
    %p175 = scmp.eq.s32.totalorder %s18, 3
    %p176 = scmp.ne.s32.totalorder %s171, %s173
    %p177 = scmp.eq.s32.totalorder %s18, 0
    %p178 = por %p176, %p177
    %p179 = scmp.ne.s32.totalorder %s171, %s173
    %p180 = scmp.eq.s32.totalorder %s23, 3
    %p181 = por %p179, %p180
    %p182 = scmp.ne.s32.totalorder %s173, %s174
    %p183 = scmp.eq.s32.totalorder %s23, 0
    %p184 = por %p182, %p183
    %p185 = scmp.ne.s32.totalorder %s173, %s174
    %p186 = scmp.eq.s32.totalorder %s24, 3
    %p187 = por %p185, %p186
    %p189 = scmp.ne.s32.totalorder %s174, %s188
    %p190 = scmp.eq.s32.totalorder %s24, 0
    %p191 = por %p189, %p190
    %s193 = sadd.s32 %s192, 1
    %p196 = scmp.eq.s32.totalorder %s18, 3
    %p197 = scmp.ne.s32.totalorder %s192, %s194
    %p198 = scmp.eq.s32.totalorder %s18, 0
    %p199 = por %p197, %p198
    %p200 = scmp.ne.s32.totalorder %s192, %s194
    %p201 = scmp.eq.s32.totalorder %s23, 3
    %p202 = por %p200, %p201
    %p203 = scmp.ne.s32.totalorder %s194, %s195
    %p204 = scmp.eq.s32.totalorder %s23, 0
    %p205 = por %p203, %p204
    %p206 = scmp.ne.s32.totalorder %s194, %s195
    %p207 = scmp.eq.s32.totalorder %s24, 3
    %p208 = por %p206, %p207
    %p210 = scmp.ne.s32.totalorder %s195, %s209
    %p211 = scmp.eq.s32.totalorder %s24, 0
    %p212 = por %p210, %p211
    %s213 = ssub.s32 %s25, %s37
    %s214 = ssub.s32 %s26, %s33
    %s215 = sor.u32 %s213, %s214
    %p216 = scmp.eq.s32.totalorder %s215, 0
    %s218 = sadd.s32 %s217, 1
    %s219 = scalar_select %p216, %s217, %s218
    %p222 = pneg %p216
    %p223 = scmp.eq.s32.totalorder %s18, 3
    %p224 = por %p222, %p223
    %p225 = scmp.ne.s32.totalorder %s217, %s220
    %p226 = scmp.eq.s32.totalorder %s18, 0
    %p227 = por %p225, %p226
    %p228 = scmp.ne.s32.totalorder %s217, %s220
    %p229 = scmp.eq.s32.totalorder %s23, 3
    %p230 = por %p228, %p229
    %p231 = scmp.ne.s32.totalorder %s220, %s221
    %p232 = scmp.eq.s32.totalorder %s23, 0
    %p233 = por %p231, %p232
    %p234 = scmp.ne.s32.totalorder %s220, %s221
    %p235 = scmp.eq.s32.totalorder %s24, 3
    %p236 = por %p234, %p235
    %p238 = scmp.ne.s32.totalorder %s221, %s237
    %p239 = scmp.eq.s32.totalorder %s24, 0
    %p240 = por %p238, %p239
    %s241 = ssub.s32 %s25, %s37
    %s242 = ssub.s32 %s26, %s33
    %s243 = sor.u32 %s241, %s242
    %p244 = scmp.eq.s32.totalorder %s243, 0
    %s246 = sadd.s32 %s245, 1
    %s247 = scalar_select %p244, %s245, %s246
    %p250 = pneg %p244
    %p251 = scmp.eq.s32.totalorder %s18, 3
    %p252 = por %p250, %p251
    %p253 = scmp.ne.s32.totalorder %s245, %s248
    %p254 = scmp.eq.s32.totalorder %s18, 0
    %p255 = por %p253, %p254
    %p256 = scmp.ne.s32.totalorder %s245, %s248
    %p257 = scmp.eq.s32.totalorder %s23, 3
    %p258 = por %p256, %p257
    %p259 = scmp.ne.s32.totalorder %s248, %s249
    %p260 = scmp.eq.s32.totalorder %s23, 0
    %p261 = por %p259, %p260
    %p262 = scmp.ne.s32.totalorder %s248, %s249
    %p263 = scmp.eq.s32.totalorder %s24, 3
    %p264 = por %p262, %p263
    %p266 = scmp.ne.s32.totalorder %s249, %s265
    %p267 = scmp.eq.s32.totalorder %s24, 0
    %p268 = por %p266, %p267
    %s269 = ssub.s32 %s25, %s37
    %s270 = ssub.s32 %s26, %s33
    %s271 = sor.u32 %s269, %s270
    %p272 = scmp.eq.s32.totalorder %s271, 0
    %s274 = sadd.s32 %s273, 1
    %s275 = scalar_select %p272, %s273, %s274
    %p278 = pneg %p272
    %p279 = scmp.eq.s32.totalorder %s18, 3
    %p280 = por %p278, %p279
    %p281 = scmp.ne.s32.totalorder %s273, %s276
    %p282 = scmp.eq.s32.totalorder %s18, 0
    %p283 = por %p281, %p282
    %p284 = scmp.ne.s32.totalorder %s273, %s276
    %p285 = scmp.eq.s32.totalorder %s23, 3
    %p286 = por %p284, %p285
    %p287 = scmp.ne.s32.totalorder %s276, %s277
    %p288 = scmp.eq.s32.totalorder %s23, 0
    %p289 = por %p287, %p288
    %p290 = scmp.ne.s32.totalorder %s276, %s277
    %p291 = scmp.eq.s32.totalorder %s24, 3
    %p292 = por %p290, %p291
    %p294 = scmp.ne.s32.totalorder %s277, %s293
    %p295 = scmp.eq.s32.totalorder %s24, 0
    %p296 = por %p294, %p295
    %s297 = ssub.s32 %s25, %s37
    %s298 = ssub.s32 %s26, %s33
    %s299 = sor.u32 %s297, %s298
    %p300 = scmp.eq.s32.totalorder %s299, 0
    %s302 = sadd.s32 %s301, 1
    %s303 = scalar_select %p300, %s301, %s302
    %p306 = pneg %p300
    %p307 = scmp.eq.s32.totalorder %s18, 3
    %p308 = por %p306, %p307
    %p309 = scmp.ne.s32.totalorder %s301, %s304
    %p310 = scmp.eq.s32.totalorder %s18, 0
    %p311 = por %p309, %p310
    %p312 = scmp.ne.s32.totalorder %s301, %s304
    %p313 = scmp.eq.s32.totalorder %s23, 3
    %p314 = por %p312, %p313
    %p315 = scmp.ne.s32.totalorder %s304, %s305
    %p316 = scmp.eq.s32.totalorder %s23, 0
    %p317 = por %p315, %p316
    %p318 = scmp.ne.s32.totalorder %s304, %s305
    %p319 = scmp.eq.s32.totalorder %s24, 3
    %p320 = por %p318, %p319
    %p322 = scmp.ne.s32.totalorder %s305, %s321
    %p323 = scmp.eq.s32.totalorder %s24, 0
    %p324 = por %p322, %p323
    %p325 = scmp.le.s32.totalorder 1, %s18
    %p326 = scmp.lt.s32.totalorder %s18, 5
    %p327 = pnand %p325, %p326
    %p328 = pneg %p327
    // Predicated region
    $region9: #{tnet_forward.6} parent=5 // pred_check
      _
    $region10: #{tnet_forward.6} parent=5 // pred_check_branch
      %330 = sbr.rel (%p327) target = $region12
    $region11: #{tnet_forward.6} parent=5 // pred_region
      %s331 = ssub.s32 %s18, 1
      // Predicated region
      $region13: #{tnet_forward.6} parent=11 // pred_check
        %p332 = pneg %p79
      $region14: #{tnet_forward.6} parent=11 // pred_check_branch
        %334 = sbr.rel (%p332) target = $region16
      $region15: #{tnet_forward.6} parent=11 // pred_region
        _
      $region16: #{tnet_forward.6} parent=11 // pred_fallthru
        _
      // Predicated region
      $region17: #{tnet_forward.6} parent=11 // pred_check
        %p335 = pneg %p100
      $region18: #{tnet_forward.6} parent=11 // pred_check_branch
        %337 = sbr.rel (%p335) target = $region20
      $region19: #{tnet_forward.6} parent=11 // pred_region
        _
      $region20: #{tnet_forward.6} parent=11 // pred_fallthru
        _
      // Predicated region
      $region21: #{tnet_forward.6} parent=11 // pred_check
        %p338 = pneg %p121
      $region22: #{tnet_forward.6} parent=11 // pred_check_branch
        %340 = sbr.rel (%p338) target = $region24
      $region23: #{tnet_forward.6} parent=11 // pred_region
        _
      $region24: #{tnet_forward.6} parent=11 // pred_fallthru
        _
      // Predicated region
      $region25: #{tnet_forward.6} parent=11 // pred_check
        %p341 = pneg %p142
      $region26: #{tnet_forward.6} parent=11 // pred_check_branch
        %343 = sbr.rel (%p341) target = $region28
      $region27: #{tnet_forward.6} parent=11 // pred_region
        _
      $region28: #{tnet_forward.6} parent=11 // pred_fallthru
        _
      // Predicated region
      $region29: #{tnet_forward.6} parent=11 // pred_check
        %p344 = pneg %p163
      $region30: #{tnet_forward.6} parent=11 // pred_check_branch
        %346 = sbr.rel (%p344) target = $region32
      $region31: #{tnet_forward.6} parent=11 // pred_region
        _
      $region32: #{tnet_forward.6} parent=11 // pred_fallthru
        _
      // Predicated region
      $region33: #{tnet_forward.6} parent=11 // pred_check
        %p347 = pneg %p184
      $region34: #{tnet_forward.6} parent=11 // pred_check_branch
        %349 = sbr.rel (%p347) target = $region36
      $region35: #{tnet_forward.6} parent=11 // pred_region
        _
      $region36: #{tnet_forward.6} parent=11 // pred_fallthru
        _
      // Predicated region
      $region37: #{tnet_forward.6} parent=11 // pred_check
        %p350 = pneg %p205
      $region38: #{tnet_forward.6} parent=11 // pred_check_branch
        %352 = sbr.rel (%p350) target = $region40
      $region39: #{tnet_forward.6} parent=11 // pred_region
        _
      $region40: #{tnet_forward.6} parent=11 // pred_fallthru
        _
    $region12: #{tnet_forward.6} parent=5 // pred_fallthru
      _
    %p353 = scmp.lt.s32.totalorder %s18, 4
    // Predicated region
    $region41: #{tnet_forward.6} parent=5 // pred_check
      %p354 = pneg %p353
    $region42: #{tnet_forward.6} parent=5 // pred_check_branch
      %356 = sbr.rel (%p354) target = $region44
    $region43: #{tnet_forward.6} parent=5 // pred_region
      // Predicated region
      $region45: #{tnet_forward.6} parent=43 // pred_check
        %p357 = pneg %p52
      $region46: #{tnet_forward.6} parent=43 // pred_check_branch
        %359 = sbr.rel (%p357) target = $region48
      $region47: #{tnet_forward.6} parent=43 // pred_region
        %s360 = smul.u32 5, %s26
        %p361 = scmp.lt.s32.totalorder %s25, 3
        %s362 = scalar_select %p361, %s25, 3
        %p363 = scmp.lt.s32.totalorder %s360, 4
        %s364 = scalar_select %p363, %s360, 4
        %s365 = smul.addr %s362, 5
        %s366 = sadd.s32 %s364, %s365
        %s367 = smul.addr %s366, 4
        %s368 = scalar_lea.vmem %s0, %s367
        %s369 = smul.u32 5, %s26
      $region48: #{tnet_forward.6} parent=43 // pred_fallthru
        _
    $region44: #{tnet_forward.6} parent=5 // pred_fallthru
      _
    %p370 = scmp.le.s32.totalorder 1, %s18
    %p371 = scmp.lt.s32.totalorder %s18, 5
    %p372 = pnand %p370, %p371
    %p373 = pneg %p372
    // Predicated region
    $region49: #{tnet_forward.6} parent=5 // pred_check
      _
    $region50: #{tnet_forward.6} parent=5 // pred_check_branch
      %375 = sbr.rel (%p372) target = $region52
    $region51: #{tnet_forward.6} parent=5 // pred_region
      %s376 = ssub.s32 %s18, 1
      %s377 = smul.u32 5, %s28
      %p378 = scmp.lt.s32.totalorder %s27, 3
      %s379 = scalar_select %p378, %s27, 3
      %p380 = scmp.lt.s32.totalorder %s377, 4
      %s381 = scalar_select %p380, %s377, 4
      %s382 = smul.addr %s379, 5
      %s383 = sadd.s32 %s381, %s382
      %s384 = smul.addr %s383, 4
      %s385 = scalar_lea.vmem %s0, %s384
      %p386 = pneg %p58
      %p387 = pneg %p55
      %p388 = pneg %p79
      %p389 = pneg %p76
      %p390 = pneg %p100
      %p391 = pneg %p97
      %p392 = pneg %p121
      %p393 = pneg %p118
      %p394 = pneg %p142
      %p395 = pneg %p139
      %p396 = pneg %p163
      %p397 = pneg %p160
      %p398 = pneg %p184
      %p399 = pneg %p181
      %p400 = pneg %p205
      %p401 = pneg %p202
      %p402 = pneg %p233
      %p403 = pneg %p230
      %p404 = scmp.lt.s32.totalorder %s27, 3
      %s405 = scalar_select %p404, %s27, 3
      %p406 = scmp.lt.s32.totalorder %s28, 0
      %s407 = scalar_select %p406, %s28, 0
      %s408 = smul.addr %s407, 8
      %s409 = smul.addr %s405, 8
      %s410 = sadd.s32 %s408, %s409
      %s411 = scalar_lea.vmem %s8, %s410
      %p412 = pneg %p261
      %p413 = pneg %p258
      %p414 = scmp.lt.s32.totalorder %s27, 3
      %s415 = scalar_select %p414, %s27, 3
      %p416 = scmp.lt.s32.totalorder %s28, 0
      %s417 = scalar_select %p416, %s28, 0
      %s418 = smul.addr %s417, 8
      %s419 = smul.addr %s415, 8
      %s420 = sadd.s32 %s418, %s419
      %s421 = scalar_lea.vmem %s9, %s420
      %p422 = pneg %p289
      %p423 = pneg %p286
      %p424 = scmp.lt.s32.totalorder %s27, 3
      %s425 = scalar_select %p424, %s27, 3
      %p426 = scmp.lt.s32.totalorder %s28, 0
      %s427 = scalar_select %p426, %s28, 0
      %s428 = smul.addr %s427, 8
      %s429 = smul.addr %s425, 8
      %s430 = sadd.s32 %s428, %s429
      %s431 = scalar_lea.vmem %s10, %s430
      %p432 = pneg %p317
      %p433 = pneg %p314
      %p434 = scmp.lt.s32.totalorder %s27, 3
      %s435 = scalar_select %p434, %s27, 3
      %p436 = scmp.lt.s32.totalorder %s28, 0
      %s437 = scalar_select %p436, %s28, 0
      %s438 = smul.addr %s437, 8
      %s439 = smul.addr %s435, 8
      %s440 = sadd.s32 %s438, %s439
      %s441 = scalar_lea.vmem %s11, %s440
      %s442 = smul.u32 5, %s28
      %p443 = scmp.lt.s32.totalorder %s27, 3
      %s444 = scalar_select %p443, %s27, 3
      %p445 = scmp.lt.s32.totalorder %s442, 4
      %s446 = scalar_select %p445, %s442, 4
      %s447 = smul.addr %s444, 5
      %s448 = sadd.s32 %s446, %s447
      %s449 = smul.addr %s448, 4
      %s450 = scalar_lea.vmem %s0, %s449
      %s451 = smul.u32 5, %s28
      %p452 = scmp.lt.s32.totalorder %s27, 3
      %s453 = scalar_select %p452, %s27, 3
      %p454 = scmp.lt.s32.totalorder %s28, 0
      %s455 = scalar_select %p454, %s28, 0
      %s456 = smul.addr %s455, 8
      %s457 = smul.addr %s453, 8
      %s458 = sadd.s32 %s456, %s457
      %s459 = scalar_lea.vmem %s8, %s458
      %p460 = scmp.lt.s32.totalorder %s27, 3
      %s461 = scalar_select %p460, %s27, 3
      %p462 = scmp.lt.s32.totalorder %s28, 0
      %s463 = scalar_select %p462, %s28, 0
      %s464 = smul.addr %s463, 8
      %s465 = smul.addr %s461, 8
      %s466 = sadd.s32 %s464, %s465
      %s467 = scalar_lea.vmem %s9, %s466
      %p468 = scmp.lt.s32.totalorder %s27, 3
      %s469 = scalar_select %p468, %s27, 3
      %p470 = scmp.lt.s32.totalorder %s28, 0
      %s471 = scalar_select %p470, %s28, 0
      %s472 = smul.addr %s471, 8
      %s473 = smul.addr %s469, 8
      %s474 = sadd.s32 %s472, %s473
      %s475 = scalar_lea.vmem %s10, %s474
      %p476 = scmp.lt.s32.totalorder %s27, 3
      %s477 = scalar_select %p476, %s27, 3
      %p478 = scmp.lt.s32.totalorder %s28, 0
      %s479 = scalar_select %p478, %s28, 0
      %s480 = smul.addr %s479, 8
      %s481 = smul.addr %s477, 8
      %s482 = sadd.s32 %s480, %s481
      %s483 = scalar_lea.vmem %s11, %s482
      %v485 = vld [vmem:[%s450] sm:$0xf]
      %v486 = vld [vmem:[%s450 + $0x4] sm:$0xf]
      %v487 = vld [vmem:[%s450 + $0x8] sm:$0xf]
      %v488 = vld [vmem:[%s450 + $0xc] sm:$0xf]
      %v489 = vld [vmem:[%s450 + $0x10] sm:$0xf]
      %v490 = vld [vmem:[%s1] sm:$0x3]
      %v491 = vld [vmem:[%s4] sm:$0xf]
      %v492 = vld [vmem:[%s4 + $0x4] sm:$0xf]
      %v493 = vld [vmem:[%s4 + $0x8] sm:$0xf]
      %v494 = vld [vmem:[%s4 + $0xc] sm:$0xf]
      %v495 = vld [vmem:[%s4 + $0x10] sm:$0xf]
      %v496 = vld [vmem:[%s4 + $0x14] sm:$0xf]
      %v497 = vld [vmem:[%s4 + $0x18] sm:$0xf]
      %v498 = vld [vmem:[%s4 + $0x1c] sm:$0xf]
      %v499 = vld [vmem:[%s7] sm:$0xff]
      %v500 = vld [vmem:[%s7 + $0x8] sm:$0xff]
      %v501 = vld [vmem:[%s7 + $0x10] sm:$0xff]
      %v502 = vld [vmem:[%s7 + $0x18] sm:$0xff]
      %v503 = vld [vmem:[%s7 + $0x20] sm:$0xff]
      %v504 = vld [vmem:[%s7 + $0x28] sm:$0xff]
      %v505 = vld [vmem:[%s7 + $0x30] sm:$0xff]
      %v506 = vld [vmem:[%s7 + $0x38] sm:$0xff]
      %v507 = vld [vmem:[%s7 + $0x40] sm:$0xff]
      %v508 = vld [vmem:[%s7 + $0x48] sm:$0xff]
      %v509 = vld [vmem:[%s7 + $0x50] sm:$0xff]
      %v510 = vld [vmem:[%s7 + $0x58] sm:$0xff]
      %v511 = vld [vmem:[%s7 + $0x60] sm:$0xff]
      %v512 = vld [vmem:[%s7 + $0x68] sm:$0xff]
      %v513 = vld [vmem:[%s7 + $0x70] sm:$0xff]
      %v514 = vld [vmem:[%s7 + $0x78] sm:$0xff]
      %v515 = vld [vmem:[%s7 + $0x80] sm:$0xff]
      %v516 = vld [vmem:[%s7 + $0x88] sm:$0xff]
      %v517 = vld [vmem:[%s7 + $0x90] sm:$0xff]
      %v518 = vld [vmem:[%s7 + $0x98] sm:$0xff]
      %v519 = vld [vmem:[%s7 + $0xa0] sm:$0xff]
      %v520 = vld [vmem:[%s7 + $0xa8] sm:$0xff]
      %v521 = vld [vmem:[%s7 + $0xb0] sm:$0xff]
      %v522 = vld [vmem:[%s7 + $0xb8] sm:$0xff]
      %v523 = vld [vmem:[%s7 + $0xc0] sm:$0xff]
      %v524 = vld [vmem:[%s7 + $0xc8] sm:$0xff]
      %v525 = vld [vmem:[%s7 + $0xd0] sm:$0xff]
      %v526 = vld [vmem:[%s7 + $0xd8] sm:$0xff]
      %v527 = vld [vmem:[%s7 + $0xe0] sm:$0xff]
      %v528 = vld [vmem:[%s7 + $0xe8] sm:$0xff]
      %v529 = vld [vmem:[%s7 + $0xf0] sm:$0xff]
      %v530 = vld [vmem:[%s7 + $0xf8] sm:$0xff]
      %v531 = vld [vmem:[%s7 + $0x100] sm:$0xff]
      %v532 = vld [vmem:[%s7 + $0x108] sm:$0xff]
      %v533 = vld [vmem:[%s7 + $0x110] sm:$0xff]
      %v534 = vld [vmem:[%s7 + $0x118] sm:$0xff]
      %v535 = vld [vmem:[%s7 + $0x120] sm:$0xff]
      %v536 = vld [vmem:[%s7 + $0x128] sm:$0xff]
      %v537 = vld [vmem:[%s7 + $0x130] sm:$0xff]
      %v538 = vld [vmem:[%s7 + $0x138] sm:$0xff]
      %v539 = vld [vmem:[%s7 + $0x140] sm:$0xff]
      %v540 = vld [vmem:[%s7 + $0x148] sm:$0xff]
      %v541 = vld [vmem:[%s7 + $0x150] sm:$0xff]
      %v542 = vld [vmem:[%s7 + $0x158] sm:$0xff]
      %v543 = vld [vmem:[%s7 + $0x160] sm:$0xff]
      %v544 = vld [vmem:[%s7 + $0x168] sm:$0xff]
      %v545 = vld [vmem:[%s7 + $0x170] sm:$0xff]
      %v546 = vld [vmem:[%s7 + $0x178] sm:$0xff]
      %v547 = vld [vmem:[%s7 + $0x180] sm:$0xff]
      %v548 = vld [vmem:[%s7 + $0x188] sm:$0xff]
      %v549 = vld [vmem:[%s7 + $0x190] sm:$0xff]
      %v550 = vld [vmem:[%s7 + $0x198] sm:$0xff]
      %v551 = vld [vmem:[%s7 + $0x1a0] sm:$0xff]
      %v552 = vld [vmem:[%s7 + $0x1a8] sm:$0xff]
      %v553 = vld [vmem:[%s7 + $0x1b0] sm:$0xff]
      %v554 = vld [vmem:[%s7 + $0x1b8] sm:$0xff]
      %v555 = vld [vmem:[%s7 + $0x1c0] sm:$0xff]
      %v556 = vld [vmem:[%s7 + $0x1c8] sm:$0xff]
      %v557 = vld [vmem:[%s7 + $0x1d0] sm:$0xff]
      %v558 = vld [vmem:[%s7 + $0x1d8] sm:$0xff]
      %v559 = vld [vmem:[%s7 + $0x1e0] sm:$0xff]
      %v560 = vld [vmem:[%s7 + $0x1e8] sm:$0xff]
      %v561 = vld [vmem:[%s7 + $0x1f0] sm:$0xff]
      %v562 = vld [vmem:[%s7 + $0x1f8] sm:$0xff]
      %v563 = vld [vmem:[%s2] sm:$0x1]
      %v564 = vld [vmem:[%s3] sm:$0x1]
      %v565 = vld [vmem:[%s5] sm:$0x1]
      %v566 = vld [vmem:[%s6] sm:$0x1]
      %v572 = vunpack.c.l.b16 %v485
      %v573 = vunpack.c.l.b16 %v486
      %v574 = vunpack.c.l.b16 %v487
      %v575 = vunpack.c.l.b16 %v488
      %v576 = vunpack.c.l.b16 %v489
      %v577 = vpack.c.b16 %v573, %v572
      %v578 = vpack.c.b16 %v575, %v574
      %v579 = vpack.c.b16 %v576, %v576
      %vm580 = vcmask 31744
      %v582 = vsel %vm580, %v577, 0
      %v585 = vsel %vm580, %v578, 0
      %v588 = vsel %vm580, %v579, 0
      %vm590 = vcmask 1041408
      %v592 = vsel %vm590, %v490, 0
      %594 = vmatprep.subr.bf16.mxu0 0
      %595 = vmatpush1.bf16.msra.mxu0 %v592
      %596 = vmatprep.subr.bf16.mxu0 0
      %597 = vmatpush1.bf16.msra.mxu0 0
      %598 = vmatprep.subr.bf16.mxu0 0
      %599 = vmatpush1.bf16.msra.mxu0 0
      %600 = vmatprep.subr.bf16.mxu0 0
      %601 = vmatpush1.bf16.msra.mxu0 0
      %602 = vmatprep.subr.bf16.mxu0 0
      %603 = vmatpush1.bf16.msra.mxu0 0
      %604 = vmatprep.subr.bf16.mxu0 0
      %605 = vmatpush1.bf16.msra.mxu0 0
      %606 = vmatprep.subr.bf16.mxu0 0
      %607 = vmatpush1.bf16.msra.mxu0 0
      %608 = vmatprep.subr.bf16.mxu0 0
      %609 = vmatpush1.bf16.msra.mxu0 0
      %610 = vmatprep.subr.bf16.mxu0 0
      %611 = vmatpush1.bf16.msra.mxu0 0
      %612 = vmatprep.subr.bf16.mxu0 0
      %613 = vmatpush1.bf16.msra.mxu0 0
      %614 = vmatprep.subr.bf16.mxu0 0
      %615 = vmatpush1.bf16.msra.mxu0 0
      %616 = vmatprep.subr.bf16.mxu0 0
      %617 = vmatpush1.bf16.msra.mxu0 0
      %618 = vmatprep.subr.bf16.mxu0 0
      %619 = vmatpush1.bf16.msra.mxu0 0
      %620 = vmatprep.subr.bf16.mxu0 0
      %621 = vmatpush1.bf16.msra.mxu0 0
      %622 = vmatprep.subr.bf16.mxu0 0
      %623 = vmatpush1.bf16.msra.mxu0 0
      %624 = vmatprep.subr.bf16.mxu0 0
      %625 = vmatpush1.bf16.msra.mxu0 0
      %626 = vmatprep.mubr.bf16.mxu0 0
      %627 = vmatmul.mubr.bf16.gmra.mrb[0].mxu0 %v582
      %v628 = vpop.f32.mrb[0].mxu0
      %v629 = vadd.f32 0.0, %v628
      %v630 = vpop.f32.mrb[0].mxu0
      %v631 = vpop.f32.mrb[0].mxu0
      %v632 = vadd.f32 0.0, %v631
      %v633 = vpop.f32.mrb[0].mxu0
      %634 = vmatprep.mubr.bf16.mxu0 0
      %635 = vmatmul.mubr.bf16.gmra.mrb[0].mxu0 %v585
      %v636 = vpop.f32.mrb[0].mxu0
      %v637 = vadd.f32 0.0, %v636
      %v638 = vpop.f32.mrb[0].mxu0
      %v639 = vpop.f32.mrb[0].mxu0
      %v640 = vadd.f32 0.0, %v639
      %v641 = vpop.f32.mrb[0].mxu0
      %642 = vmatprep.mubr.bf16.mxu0 0
      %643 = vmatmul.mubr.bf16.gmra.mrb[0].mxu0 %v588
      %v644 = vpop.f32.mrb[0].mxu0
      %v645 = vadd.f32 0.0, %v644
      %v646 = vpop.f32.mrb[0].mxu0
      %v647 = vpop.f32.mrb[0].mxu0
      %v648 = vpop.f32.mrb[0].mxu0
      %649 = vdwg.mxu0
      %v651 = vlaneseq
      %v652 = vshrl.u32 %v651, 7
      %v653 = vsub.s32 0, %v652
      %v654 = vrot.slane %v563, %v653
      %v656 = vmul.f32 %v629, %v654
      %v657 = vmul.f32 %v632, %v654
      %v658 = vmul.f32 %v637, %v654
      %v659 = vmul.f32 %v640, %v654
      %v660 = vmul.f32 %v645, %v654
      %v662 = vlaneseq
      %v663 = vshrl.u32 %v662, 7
      %v664 = vsub.s32 0, %v663
      %v665 = vrot.slane %v564, %v664
      %v667 = vadd.f32 %v656, %v665
      %v668 = vadd.f32 %v657, %v665
      %v669 = vadd.f32 %v658, %v665
      %v670 = vadd.f32 %v659, %v665
      %v671 = vadd.f32 %v660, %v665
      %v672 = vmax.f32 %v667, 0.0
      %v673 = vmax.f32 %v668, 0.0
      %v674 = vmax.f32 %v669, 0.0
      %v675 = vmax.f32 %v670, 0.0
      %v676 = vmax.f32 %v671, 0.0
      %v677 = vpack.c.bf16 %v673, %v672
      %v678 = vpack.c.bf16 %v675, %v674
      %v679 = vpack.c.bf16 %v676, %v676
      %v688 = vunpack.c.l.b16 %v491
      %v689 = vunpack.c.l.b16 %v492
      %v690 = vunpack.c.l.b16 %v493
      %v691 = vunpack.c.l.b16 %v494
      %v692 = vunpack.c.l.b16 %v495
      %v693 = vunpack.c.l.b16 %v496
      %v694 = vunpack.c.l.b16 %v497
      %v695 = vunpack.c.l.b16 %v498
      %v696 = vpack.c.b16 %v689, %v688
      %v697 = vpack.c.b16 %v691, %v690
      %v698 = vpack.c.b16 %v693, %v692
      %v699 = vpack.c.b16 %v695, %v694
      %vm704 = vcmask 523264
      %v706 = vsel %vm704, %v677, 0
      %v709 = vsel %vm704, %v678, 0
      %v712 = vsel %vm704, %v679, 0
      %714 = vmatprep.subr.bf16.mxu0 0
      %715 = vmatpush1.bf16.msra.mxu0 %v696
      %716 = vmatprep.subr.bf16.mxu0 0
      %717 = vmatpush1.bf16.msra.mxu0 %v697
      %718 = vmatprep.subr.bf16.mxu0 0
      %719 = vmatpush1.bf16.msra.mxu0 %v698
      %720 = vmatprep.subr.bf16.mxu0 0
      %721 = vmatpush1.bf16.msra.mxu0 %v699
      %722 = vmatprep.subr.bf16.mxu0 0
      %723 = vmatpush1.bf16.msra.mxu0 0
      %724 = vmatprep.subr.bf16.mxu0 0
      %725 = vmatpush1.bf16.msra.mxu0 0
      %726 = vmatprep.subr.bf16.mxu0 0
      %727 = vmatpush1.bf16.msra.mxu0 0
      %728 = vmatprep.subr.bf16.mxu0 0
      %729 = vmatpush1.bf16.msra.mxu0 0
      %730 = vmatprep.subr.bf16.mxu0 0
      %731 = vmatpush1.bf16.msra.mxu0 0
      %732 = vmatprep.subr.bf16.mxu0 0
      %733 = vmatpush1.bf16.msra.mxu0 0
      %734 = vmatprep.subr.bf16.mxu0 0
      %735 = vmatpush1.bf16.msra.mxu0 0
      %736 = vmatprep.subr.bf16.mxu0 0
      %737 = vmatpush1.bf16.msra.mxu0 0
      %738 = vmatprep.subr.bf16.mxu0 0
      %739 = vmatpush1.bf16.msra.mxu0 0
      %740 = vmatprep.subr.bf16.mxu0 0
      %741 = vmatpush1.bf16.msra.mxu0 0
      %742 = vmatprep.subr.bf16.mxu0 0
      %743 = vmatpush1.bf16.msra.mxu0 0
      %744 = vmatprep.subr.bf16.mxu0 0
      %745 = vmatpush1.bf16.msra.mxu0 0
      %746 = vmatprep.mubr.bf16.mxu0 0
      %747 = vmatmul.mubr.bf16.gmra.mrb[0].mxu0 %v706
      %v748 = vpop.f32.mrb[0].mxu0
      %v749 = vadd.f32 0.0, %v748
      %v750 = vpop.f32.mrb[0].mxu0
      %v751 = vpop.f32.mrb[0].mxu0
      %v752 = vadd.f32 0.0, %v751
      %v753 = vpop.f32.mrb[0].mxu0
      %754 = vmatprep.mubr.bf16.mxu0 0
      %755 = vmatmul.mubr.bf16.gmra.mrb[0].mxu0 %v709
      %v756 = vpop.f32.mrb[0].mxu0
      %v757 = vadd.f32 0.0, %v756
      %v758 = vpop.f32.mrb[0].mxu0
      %v759 = vpop.f32.mrb[0].mxu0
      %v760 = vadd.f32 0.0, %v759
      %v761 = vpop.f32.mrb[0].mxu0
      %762 = vmatprep.mubr.bf16.mxu0 0
      %763 = vmatmul.mubr.bf16.gmra.mrb[0].mxu0 %v712
      %v764 = vpop.f32.mrb[0].mxu0
      %v765 = vadd.f32 0.0, %v764
      %v766 = vpop.f32.mrb[0].mxu0
      %v767 = vpop.f32.mrb[0].mxu0
      %v768 = vpop.f32.mrb[0].mxu0
      %769 = vdwg.mxu0
      %v771 = vlaneseq
      %v772 = vshrl.u32 %v771, 7
      %v773 = vsub.s32 0, %v772
      %v774 = vrot.slane %v565, %v773
      %v776 = vmul.f32 %v749, %v774
      %v777 = vmul.f32 %v752, %v774
      %v778 = vmul.f32 %v757, %v774
      %v779 = vmul.f32 %v760, %v774
      %v780 = vmul.f32 %v765, %v774
      %v782 = vlaneseq
      %v783 = vshrl.u32 %v782, 7
      %v784 = vsub.s32 0, %v783
      %v785 = vrot.slane %v566, %v784
      %v787 = vadd.f32 %v776, %v785
      %v788 = vadd.f32 %v777, %v785
      %v789 = vadd.f32 %v778, %v785
      %v790 = vadd.f32 %v779, %v785
      %v791 = vadd.f32 %v780, %v785
      %v792 = vmax.f32 %v787, 0.0
      %v793 = vmax.f32 %v788, 0.0
      %v794 = vmax.f32 %v789, 0.0
      %v795 = vmax.f32 %v790, 0.0
      %v796 = vmax.f32 %v791, 0.0
      %v797 = vpack.c.bf16 %v793, %v792
      %v798 = vpack.c.bf16 %v795, %v794
      %v799 = vpack.c.bf16 %v796, %v796
      %v864 = vunpack.c.l.b16 %v499
      %v865 = vunpack.c.h.b16 %v499
      %v866 = vunpack.c.l.b16 %v500
      %v867 = vunpack.c.h.b16 %v500
      %v868 = vunpack.c.l.b16 %v501
      %v869 = vunpack.c.h.b16 %v501
      %v870 = vunpack.c.l.b16 %v502
      %v871 = vunpack.c.h.b16 %v502
      %v872 = vunpack.c.l.b16 %v503
      %v873 = vunpack.c.h.b16 %v503
      %v874 = vunpack.c.l.b16 %v504
      %v875 = vunpack.c.h.b16 %v504
      %v876 = vunpack.c.l.b16 %v505
      %v877 = vunpack.c.h.b16 %v505
      %v878 = vunpack.c.l.b16 %v506
      %v879 = vunpack.c.h.b16 %v506
      %v880 = vunpack.c.l.b16 %v507
      %v881 = vunpack.c.h.b16 %v507
      %v882 = vunpack.c.l.b16 %v508
      %v883 = vunpack.c.h.b16 %v508
      %v884 = vunpack.c.l.b16 %v509
      %v885 = vunpack.c.h.b16 %v509
      %v886 = vunpack.c.l.b16 %v510
      %v887 = vunpack.c.h.b16 %v510
      %v888 = vunpack.c.l.b16 %v511
      %v889 = vunpack.c.h.b16 %v511
      %v890 = vunpack.c.l.b16 %v512
      %v891 = vunpack.c.h.b16 %v512
      %v892 = vunpack.c.l.b16 %v513
      %v893 = vunpack.c.h.b16 %v513
      %v894 = vunpack.c.l.b16 %v514
      %v895 = vunpack.c.h.b16 %v514
      %v896 = vunpack.c.l.b16 %v515
      %v897 = vunpack.c.h.b16 %v515
      %v898 = vunpack.c.l.b16 %v516
      %v899 = vunpack.c.h.b16 %v516
      %v900 = vunpack.c.l.b16 %v517
      %v901 = vunpack.c.h.b16 %v517
      %v902 = vunpack.c.l.b16 %v518
      %v903 = vunpack.c.h.b16 %v518
      %v904 = vunpack.c.l.b16 %v519
      %v905 = vunpack.c.h.b16 %v519
      %v906 = vunpack.c.l.b16 %v520
      %v907 = vunpack.c.h.b16 %v520
      %v908 = vunpack.c.l.b16 %v521
      %v909 = vunpack.c.h.b16 %v521
      %v910 = vunpack.c.l.b16 %v522
      %v911 = vunpack.c.h.b16 %v522
      %v912 = vunpack.c.l.b16 %v523
      %v913 = vunpack.c.h.b16 %v523
      %v914 = vunpack.c.l.b16 %v524
      %v915 = vunpack.c.h.b16 %v524
      %v916 = vunpack.c.l.b16 %v525
      %v917 = vunpack.c.h.b16 %v525
      %v918 = vunpack.c.l.b16 %v526
      %v919 = vunpack.c.h.b16 %v526
      %v920 = vunpack.c.l.b16 %v527
      %v921 = vunpack.c.h.b16 %v527
      %v922 = vunpack.c.l.b16 %v528
      %v923 = vunpack.c.h.b16 %v528
      %v924 = vunpack.c.l.b16 %v529
      %v925 = vunpack.c.h.b16 %v529
      %v926 = vunpack.c.l.b16 %v530
      %v927 = vunpack.c.h.b16 %v530
      %v928 = vunpack.c.l.b16 %v531
      %v929 = vunpack.c.h.b16 %v531
      %v930 = vunpack.c.l.b16 %v532
      %v931 = vunpack.c.h.b16 %v532
      %v932 = vunpack.c.l.b16 %v533
      %v933 = vunpack.c.h.b16 %v533
      %v934 = vunpack.c.l.b16 %v534
      %v935 = vunpack.c.h.b16 %v534
      %v936 = vunpack.c.l.b16 %v535
      %v937 = vunpack.c.h.b16 %v535
      %v938 = vunpack.c.l.b16 %v536
      %v939 = vunpack.c.h.b16 %v536
      %v940 = vunpack.c.l.b16 %v537
      %v941 = vunpack.c.h.b16 %v537
      %v942 = vunpack.c.l.b16 %v538
      %v943 = vunpack.c.h.b16 %v538
      %v944 = vunpack.c.l.b16 %v539
      %v945 = vunpack.c.h.b16 %v539
      %v946 = vunpack.c.l.b16 %v540
      %v947 = vunpack.c.h.b16 %v540
      %v948 = vunpack.c.l.b16 %v541
      %v949 = vunpack.c.h.b16 %v541
      %v950 = vunpack.c.l.b16 %v542
      %v951 = vunpack.c.h.b16 %v542
      %v952 = vunpack.c.l.b16 %v543
      %v953 = vunpack.c.h.b16 %v543
      %v954 = vunpack.c.l.b16 %v544
      %v955 = vunpack.c.h.b16 %v544
      %v956 = vunpack.c.l.b16 %v545
      %v957 = vunpack.c.h.b16 %v545
      %v958 = vunpack.c.l.b16 %v546
      %v959 = vunpack.c.h.b16 %v546
      %v960 = vunpack.c.l.b16 %v547
      %v961 = vunpack.c.h.b16 %v547
      %v962 = vunpack.c.l.b16 %v548
      %v963 = vunpack.c.h.b16 %v548
      %v964 = vunpack.c.l.b16 %v549
      %v965 = vunpack.c.h.b16 %v549
      %v966 = vunpack.c.l.b16 %v550
      %v967 = vunpack.c.h.b16 %v550
      %v968 = vunpack.c.l.b16 %v551
      %v969 = vunpack.c.h.b16 %v551
      %v970 = vunpack.c.l.b16 %v552
      %v971 = vunpack.c.h.b16 %v552
      %v972 = vunpack.c.l.b16 %v553
      %v973 = vunpack.c.h.b16 %v553
      %v974 = vunpack.c.l.b16 %v554
      %v975 = vunpack.c.h.b16 %v554
      %v976 = vunpack.c.l.b16 %v555
      %v977 = vunpack.c.h.b16 %v555
      %v978 = vunpack.c.l.b16 %v556
      %v979 = vunpack.c.h.b16 %v556
      %v980 = vunpack.c.l.b16 %v557
      %v981 = vunpack.c.h.b16 %v557
      %v982 = vunpack.c.l.b16 %v558
      %v983 = vunpack.c.h.b16 %v558
      %v984 = vunpack.c.l.b16 %v559
      %v985 = vunpack.c.h.b16 %v559
      %v986 = vunpack.c.l.b16 %v560
      %v987 = vunpack.c.h.b16 %v560
      %v988 = vunpack.c.l.b16 %v561
      %v989 = vunpack.c.h.b16 %v561
      %v990 = vunpack.c.l.b16 %v562
      %v991 = vunpack.c.h.b16 %v562
      %v992 = vpack.c.b16 %v872, %v864
      %v993 = vpack.c.b16 %v873, %v865
      %v994 = vpack.c.b16 %v874, %v866
      %v995 = vpack.c.b16 %v875, %v867
      %v996 = vpack.c.b16 %v876, %v868
      %v997 = vpack.c.b16 %v877, %v869
      %v998 = vpack.c.b16 %v878, %v870
      %v999 = vpack.c.b16 %v879, %v871
      %v1000 = vpack.c.b16 %v888, %v880
      %v1001 = vpack.c.b16 %v889, %v881
      %v1002 = vpack.c.b16 %v890, %v882
      %v1003 = vpack.c.b16 %v891, %v883
      %v1004 = vpack.c.b16 %v892, %v884
      %v1005 = vpack.c.b16 %v893, %v885
      %v1006 = vpack.c.b16 %v894, %v886
      %v1007 = vpack.c.b16 %v895, %v887
      %v1008 = vpack.c.b16 %v904, %v896
      %v1009 = vpack.c.b16 %v905, %v897
      %v1010 = vpack.c.b16 %v906, %v898
      %v1011 = vpack.c.b16 %v907, %v899
      %v1012 = vpack.c.b16 %v908, %v900
      %v1013 = vpack.c.b16 %v909, %v901
      %v1014 = vpack.c.b16 %v910, %v902
      %v1015 = vpack.c.b16 %v911, %v903
      %v1016 = vpack.c.b16 %v920, %v912
      %v1017 = vpack.c.b16 %v921, %v913
      %v1018 = vpack.c.b16 %v922, %v914
      %v1019 = vpack.c.b16 %v923, %v915
      %v1020 = vpack.c.b16 %v924, %v916
      %v1021 = vpack.c.b16 %v925, %v917
      %v1022 = vpack.c.b16 %v926, %v918
      %v1023 = vpack.c.b16 %v927, %v919
      %v1024 = vpack.c.b16 %v936, %v928
      %v1025 = vpack.c.b16 %v937, %v929
      %v1026 = vpack.c.b16 %v938, %v930
      %v1027 = vpack.c.b16 %v939, %v931
      %v1028 = vpack.c.b16 %v940, %v932
      %v1029 = vpack.c.b16 %v941, %v933
      %v1030 = vpack.c.b16 %v942, %v934
      %v1031 = vpack.c.b16 %v943, %v935
      %v1032 = vpack.c.b16 %v952, %v944
      %v1033 = vpack.c.b16 %v953, %v945
      %v1034 = vpack.c.b16 %v954, %v946
      %v1035 = vpack.c.b16 %v955, %v947
      %v1036 = vpack.c.b16 %v956, %v948
      %v1037 = vpack.c.b16 %v957, %v949
      %v1038 = vpack.c.b16 %v958, %v950
      %v1039 = vpack.c.b16 %v959, %v951
      %v1040 = vpack.c.b16 %v968, %v960
      %v1041 = vpack.c.b16 %v969, %v961
      %v1042 = vpack.c.b16 %v970, %v962
      %v1043 = vpack.c.b16 %v971, %v963
      %v1044 = vpack.c.b16 %v972, %v964
      %v1045 = vpack.c.b16 %v973, %v965
      %v1046 = vpack.c.b16 %v974, %v966
      %v1047 = vpack.c.b16 %v975, %v967
      %v1048 = vpack.c.b16 %v984, %v976
      %v1049 = vpack.c.b16 %v985, %v977
      %v1050 = vpack.c.b16 %v986, %v978
      %v1051 = vpack.c.b16 %v987, %v979
      %v1052 = vpack.c.b16 %v988, %v980
      %v1053 = vpack.c.b16 %v989, %v981
      %v1054 = vpack.c.b16 %v990, %v982
      %v1055 = vpack.c.b16 %v991, %v983
      %1120 = vmatprep.subr.bf16.mxu0 %v993
      %1121 = vmatpush1.bf16.msra.mxu0 %v992
      %1122 = vmatprep.subr.bf16.mxu0 %v1001
      %1123 = vmatpush1.bf16.msra.mxu0 %v1000
      %1124 = vmatprep.subr.bf16.mxu0 %v1009
      %1125 = vmatpush1.bf16.msra.mxu0 %v1008
      %1126 = vmatprep.subr.bf16.mxu0 %v1017
      %1127 = vmatpush1.bf16.msra.mxu0 %v1016
      %1128 = vmatprep.subr.bf16.mxu0 %v1025
      %1129 = vmatpush1.bf16.msra.mxu0 %v1024
      %1130 = vmatprep.subr.bf16.mxu0 %v1033
      %1131 = vmatpush1.bf16.msra.mxu0 %v1032
      %1132 = vmatprep.subr.bf16.mxu0 %v1041
      %1133 = vmatpush1.bf16.msra.mxu0 %v1040
      %1134 = vmatprep.subr.bf16.mxu0 %v1049
      %1135 = vmatpush1.bf16.msra.mxu0 %v1048
      %1136 = vmatprep.subr.bf16.mxu0 0
      %1137 = vmatpush1.bf16.msra.mxu0 0
      %1138 = vmatprep.subr.bf16.mxu0 0
      %1139 = vmatpush1.bf16.msra.mxu0 0
      %1140 = vmatprep.subr.bf16.mxu0 0
      %1141 = vmatpush1.bf16.msra.mxu0 0
      %1142 = vmatprep.subr.bf16.mxu0 0
      %1143 = vmatpush1.bf16.msra.mxu0 0
      %1144 = vmatprep.subr.bf16.mxu0 0
      %1145 = vmatpush1.bf16.msra.mxu0 0
      %1146 = vmatprep.subr.bf16.mxu0 0
      %1147 = vmatpush1.bf16.msra.mxu0 0
      %1148 = vmatprep.subr.bf16.mxu0 0
      %1149 = vmatpush1.bf16.msra.mxu0 0
      %1150 = vmatprep.subr.bf16.mxu0 0
      %1151 = vmatpush1.bf16.msra.mxu0 0
      %1152 = vmatprep.mubr.bf16.mxu0 0
      %1153 = vmatmul.mubr.bf16.gmra.mrb[0].mxu0 %v797
      %v1154 = vpop.f32.mrb[0].mxu0
      %v1155 = vadd.f32 0.0, %v1154
      %v1156 = vpop.f32.mrb[0].mxu0
      %v1157 = vadd.f32 0.0, %v1156
      %v1158 = vpop.f32.mrb[0].mxu0
      %v1159 = vadd.f32 0.0, %v1158
      %v1160 = vpop.f32.mrb[0].mxu0
      %v1161 = vadd.f32 0.0, %v1160
      %1162 = vmatprep.mubr.bf16.mxu0 0
      %1163 = vmatmul.mubr.bf16.gmra.mrb[0].mxu0 %v798
      %v1164 = vpop.f32.mrb[0].mxu0
      %v1165 = vadd.f32 0.0, %v1164
      %v1166 = vpop.f32.mrb[0].mxu0
      %v1167 = vadd.f32 0.0, %v1166
      %v1168 = vpop.f32.mrb[0].mxu0
      %v1169 = vadd.f32 0.0, %v1168
      %v1170 = vpop.f32.mrb[0].mxu0
      %v1171 = vadd.f32 0.0, %v1170
      %1172 = vmatprep.mubr.bf16.mxu0 0
      %1173 = vmatmul.mubr.bf16.gmra.mrb[0].mxu0 %v799
      %v1174 = vpop.f32.mrb[0].mxu0
      %v1175 = vadd.f32 0.0, %v1174
      %v1176 = vpop.f32.mrb[0].mxu0
      %v1177 = vadd.f32 0.0, %v1176
      %v1178 = vpop.f32.mrb[0].mxu0
      %v1179 = vpop.f32.mrb[0].mxu0
      %1180 = vdwg.mxu0
      %1181 = vmatprep.subr.bf16.mxu0 %v995
      %1182 = vmatpush1.bf16.msra.mxu0 %v994
      %1183 = vmatprep.subr.bf16.mxu0 %v1003
      %1184 = vmatpush1.bf16.msra.mxu0 %v1002
      %1185 = vmatprep.subr.bf16.mxu0 %v1011
      %1186 = vmatpush1.bf16.msra.mxu0 %v1010
      %1187 = vmatprep.subr.bf16.mxu0 %v1019
      %1188 = vmatpush1.bf16.msra.mxu0 %v1018
      %1189 = vmatprep.subr.bf16.mxu0 %v1027
      %1190 = vmatpush1.bf16.msra.mxu0 %v1026
      %1191 = vmatprep.subr.bf16.mxu0 %v1035
      %1192 = vmatpush1.bf16.msra.mxu0 %v1034
      %1193 = vmatprep.subr.bf16.mxu0 %v1043
      %1194 = vmatpush1.bf16.msra.mxu0 %v1042
      %1195 = vmatprep.subr.bf16.mxu0 %v1051
      %1196 = vmatpush1.bf16.msra.mxu0 %v1050
      %1197 = vmatprep.subr.bf16.mxu0 0
      %1198 = vmatpush1.bf16.msra.mxu0 0
      %1199 = vmatprep.subr.bf16.mxu0 0
      %1200 = vmatpush1.bf16.msra.mxu0 0
      %1201 = vmatprep.subr.bf16.mxu0 0
      %1202 = vmatpush1.bf16.msra.mxu0 0
      %1203 = vmatprep.subr.bf16.mxu0 0
      %1204 = vmatpush1.bf16.msra.mxu0 0
      %1205 = vmatprep.subr.bf16.mxu0 0
      %1206 = vmatpush1.bf16.msra.mxu0 0
      %1207 = vmatprep.subr.bf16.mxu0 0
      %1208 = vmatpush1.bf16.msra.mxu0 0
      %1209 = vmatprep.subr.bf16.mxu0 0
      %1210 = vmatpush1.bf16.msra.mxu0 0
      %1211 = vmatprep.subr.bf16.mxu0 0
      %1212 = vmatpush1.bf16.msra.mxu0 0
      %1213 = vmatprep.mubr.bf16.mxu0 0
      %1214 = vmatmul.mubr.bf16.gmra.mrb[0].mxu0 %v797
      %v1215 = vpop.f32.mrb[0].mxu0
      %v1216 = vadd.f32 0.0, %v1215
      %v1217 = vpop.f32.mrb[0].mxu0
      %v1218 = vadd.f32 0.0, %v1217
      %v1219 = vpop.f32.mrb[0].mxu0
      %v1220 = vadd.f32 0.0, %v1219
      %v1221 = vpop.f32.mrb[0].mxu0
      %v1222 = vadd.f32 0.0, %v1221
      %1223 = vmatprep.mubr.bf16.mxu0 0
      %1224 = vmatmul.mubr.bf16.gmra.mrb[0].mxu0 %v798
      %v1225 = vpop.f32.mrb[0].mxu0
      %v1226 = vadd.f32 0.0, %v1225
      %v1227 = vpop.f32.mrb[0].mxu0
      %v1228 = vadd.f32 0.0, %v1227
      %v1229 = vpop.f32.mrb[0].mxu0
      %v1230 = vadd.f32 0.0, %v1229
      %v1231 = vpop.f32.mrb[0].mxu0
      %v1232 = vadd.f32 0.0, %v1231
      %1233 = vmatprep.mubr.bf16.mxu0 0
      %1234 = vmatmul.mubr.bf16.gmra.mrb[0].mxu0 %v799
      %v1235 = vpop.f32.mrb[0].mxu0
      %v1236 = vadd.f32 0.0, %v1235
      %v1237 = vpop.f32.mrb[0].mxu0
      %v1238 = vadd.f32 0.0, %v1237
      %v1239 = vpop.f32.mrb[0].mxu0
      %v1240 = vpop.f32.mrb[0].mxu0
      %1241 = vdwg.mxu0
      %1242 = vmatprep.subr.bf16.mxu0 %v997
      %1243 = vmatpush1.bf16.msra.mxu0 %v996
      %1244 = vmatprep.subr.bf16.mxu0 %v1005
      %1245 = vmatpush1.bf16.msra.mxu0 %v1004
      %1246 = vmatprep.subr.bf16.mxu0 %v1013
      %1247 = vmatpush1.bf16.msra.mxu0 %v1012
      %1248 = vmatprep.subr.bf16.mxu0 %v1021
      %1249 = vmatpush1.bf16.msra.mxu0 %v1020
      %1250 = vmatprep.subr.bf16.mxu0 %v1029
      %1251 = vmatpush1.bf16.msra.mxu0 %v1028
      %1252 = vmatprep.subr.bf16.mxu0 %v1037
      %1253 = vmatpush1.bf16.msra.mxu0 %v1036
      %1254 = vmatprep.subr.bf16.mxu0 %v1045
      %1255 = vmatpush1.bf16.msra.mxu0 %v1044
      %1256 = vmatprep.subr.bf16.mxu0 %v1053
      %1257 = vmatpush1.bf16.msra.mxu0 %v1052
      %1258 = vmatprep.subr.bf16.mxu0 0
      %1259 = vmatpush1.bf16.msra.mxu0 0
      %1260 = vmatprep.subr.bf16.mxu0 0
      %1261 = vmatpush1.bf16.msra.mxu0 0
      %1262 = vmatprep.subr.bf16.mxu0 0
      %1263 = vmatpush1.bf16.msra.mxu0 0
      %1264 = vmatprep.subr.bf16.mxu0 0
      %1265 = vmatpush1.bf16.msra.mxu0 0
      %1266 = vmatprep.subr.bf16.mxu0 0
      %1267 = vmatpush1.bf16.msra.mxu0 0
      %1268 = vmatprep.subr.bf16.mxu0 0
      %1269 = vmatpush1.bf16.msra.mxu0 0
      %1270 = vmatprep.subr.bf16.mxu0 0
      %1271 = vmatpush1.bf16.msra.mxu0 0
      %1272 = vmatprep.subr.bf16.mxu0 0
      %1273 = vmatpush1.bf16.msra.mxu0 0
      %1274 = vmatprep.mubr.bf16.mxu0 0
      %1275 = vmatmul.mubr.bf16.gmra.mrb[0].mxu0 %v797
      %v1276 = vpop.f32.mrb[0].mxu0
      %v1277 = vadd.f32 0.0, %v1276
      %v1278 = vpop.f32.mrb[0].mxu0
      %v1279 = vadd.f32 0.0, %v1278
      %v1280 = vpop.f32.mrb[0].mxu0
      %v1281 = vadd.f32 0.0, %v1280
      %v1282 = vpop.f32.mrb[0].mxu0
      %v1283 = vadd.f32 0.0, %v1282
      %1284 = vmatprep.mubr.bf16.mxu0 0
      %1285 = vmatmul.mubr.bf16.gmra.mrb[0].mxu0 %v798
      %v1286 = vpop.f32.mrb[0].mxu0
      %v1287 = vadd.f32 0.0, %v1286
      %v1288 = vpop.f32.mrb[0].mxu0
      %v1289 = vadd.f32 0.0, %v1288
      %v1290 = vpop.f32.mrb[0].mxu0
      %v1291 = vadd.f32 0.0, %v1290
      %v1292 = vpop.f32.mrb[0].mxu0
      %v1293 = vadd.f32 0.0, %v1292
      %1294 = vmatprep.mubr.bf16.mxu0 0
      %1295 = vmatmul.mubr.bf16.gmra.mrb[0].mxu0 %v799
      %v1296 = vpop.f32.mrb[0].mxu0
      %v1297 = vadd.f32 0.0, %v1296
      %v1298 = vpop.f32.mrb[0].mxu0
      %v1299 = vadd.f32 0.0, %v1298
      %v1300 = vpop.f32.mrb[0].mxu0
      %v1301 = vpop.f32.mrb[0].mxu0
      %1302 = vdwg.mxu0
      %1303 = vmatprep.subr.bf16.mxu0 %v999
      %1304 = vmatpush1.bf16.msra.mxu0 %v998
      %1305 = vmatprep.subr.bf16.mxu0 %v1007
      %1306 = vmatpush1.bf16.msra.mxu0 %v1006
      %1307 = vmatprep.subr.bf16.mxu0 %v1015
      %1308 = vmatpush1.bf16.msra.mxu0 %v1014
      %1309 = vmatprep.subr.bf16.mxu0 %v1023
      %1310 = vmatpush1.bf16.msra.mxu0 %v1022
      %1311 = vmatprep.subr.bf16.mxu0 %v1031
      %1312 = vmatpush1.bf16.msra.mxu0 %v1030
      %1313 = vmatprep.subr.bf16.mxu0 %v1039
      %1314 = vmatpush1.bf16.msra.mxu0 %v1038
      %1315 = vmatprep.subr.bf16.mxu0 %v1047
      %1316 = vmatpush1.bf16.msra.mxu0 %v1046
      %1317 = vmatprep.subr.bf16.mxu0 %v1055
      %1318 = vmatpush1.bf16.msra.mxu0 %v1054
      %1319 = vmatprep.subr.bf16.mxu0 0
      %1320 = vmatpush1.bf16.msra.mxu0 0
      %1321 = vmatprep.subr.bf16.mxu0 0
      %1322 = vmatpush1.bf16.msra.mxu0 0
      %1323 = vmatprep.subr.bf16.mxu0 0
      %1324 = vmatpush1.bf16.msra.mxu0 0
      %1325 = vmatprep.subr.bf16.mxu0 0
      %1326 = vmatpush1.bf16.msra.mxu0 0
      %1327 = vmatprep.subr.bf16.mxu0 0
      %1328 = vmatpush1.bf16.msra.mxu0 0
      %1329 = vmatprep.subr.bf16.mxu0 0
      %1330 = vmatpush1.bf16.msra.mxu0 0
      %1331 = vmatprep.subr.bf16.mxu0 0
      %1332 = vmatpush1.bf16.msra.mxu0 0
      %1333 = vmatprep.subr.bf16.mxu0 0
      %1334 = vmatpush1.bf16.msra.mxu0 0
      %1335 = vmatprep.mubr.bf16.mxu0 0
      %1336 = vmatmul.mubr.bf16.gmra.mrb[0].mxu0 %v797
      %v1337 = vpop.f32.mrb[0].mxu0
      %v1338 = vadd.f32 0.0, %v1337
      %v1339 = vpop.f32.mrb[0].mxu0
      %v1340 = vadd.f32 0.0, %v1339
      %v1341 = vpop.f32.mrb[0].mxu0
      %v1342 = vadd.f32 0.0, %v1341
      %v1343 = vpop.f32.mrb[0].mxu0
      %v1344 = vadd.f32 0.0, %v1343
      %1345 = vmatprep.mubr.bf16.mxu0 0
      %1346 = vmatmul.mubr.bf16.gmra.mrb[0].mxu0 %v798
      %v1347 = vpop.f32.mrb[0].mxu0
      %v1348 = vadd.f32 0.0, %v1347
      %v1349 = vpop.f32.mrb[0].mxu0
      %v1350 = vadd.f32 0.0, %v1349
      %v1351 = vpop.f32.mrb[0].mxu0
      %v1352 = vadd.f32 0.0, %v1351
      %v1353 = vpop.f32.mrb[0].mxu0
      %v1354 = vadd.f32 0.0, %v1353
      %1355 = vmatprep.mubr.bf16.mxu0 0
      %1356 = vmatmul.mubr.bf16.gmra.mrb[0].mxu0 %v799
      %v1357 = vpop.f32.mrb[0].mxu0
      %v1358 = vadd.f32 0.0, %v1357
      %v1359 = vpop.f32.mrb[0].mxu0
      %v1360 = vadd.f32 0.0, %v1359
      %v1361 = vpop.f32.mrb[0].mxu0
      %v1362 = vpop.f32.mrb[0].mxu0
      %1363 = vdwg.mxu0
      %s1364 = smul.u32 %s28, 40
      %v1365 = vlaneseq
      %v1366 = vshrl.u32 %v1365, 7
      %v1367 = vadd.s32 %v1366, 8
      %v1368 = vadd.s32 %v1366, 16
      %v1369 = vadd.s32 %v1366, 24
      %v1370 = vadd.s32 %v1366, 32
      %v1371 = vstv %s1364
      %v1372 = vadd.s32 %v1366, %v1371
      %v1373 = vadd.s32 %v1367, %v1371
      %v1374 = vadd.s32 %v1368, %v1371
      %v1375 = vadd.s32 %v1369, %v1371
      %v1376 = vadd.s32 %v1370, %v1371
      %vm1377 = vcmp.lt.s32.totalorder %v1372, 36
      %vm1378 = vcmp.lt.s32.totalorder %v1373, 36
      %vm1379 = vcmp.lt.s32.totalorder %v1374, 36
      %vm1380 = vcmp.lt.s32.totalorder %v1375, 36
      %vm1381 = vcmp.lt.s32.totalorder %v1376, 36
      %v1382 = vsel %vm1377, 1, 0
      %v1383 = vsel %vm1378, 1, 0
      %v1384 = vsel %vm1379, 1, 0
      %v1385 = vsel %vm1380, 1, 0
      %v1386 = vsel %vm1381, 1, 0
      %vm1387 = vcmp.eq.s32.totalorder %v1382, 1
      %vm1388 = vcmp.eq.s32.totalorder %v1383, 1
      %vm1389 = vcmp.eq.s32.totalorder %v1384, 1
      %vm1390 = vcmp.eq.s32.totalorder %v1385, 1
      %vm1391 = vcmp.eq.s32.totalorder %v1386, 1
      %v1392 = vsel %vm1387, %v1155, 0.0
      %v1393 = vsel %vm1387, %v1157, 0.0
      %v1394 = vsel %vm1387, %v1216, 0.0
      %v1395 = vsel %vm1387, %v1218, 0.0
      %v1396 = vsel %vm1387, %v1277, 0.0
      %v1397 = vsel %vm1387, %v1279, 0.0
      %v1398 = vsel %vm1387, %v1338, 0.0
      %v1399 = vsel %vm1387, %v1340, 0.0
      %v1400 = vsel %vm1388, %v1159, 0.0
      %v1401 = vsel %vm1388, %v1161, 0.0
      %v1402 = vsel %vm1388, %v1220, 0.0
      %v1403 = vsel %vm1388, %v1222, 0.0
      %v1404 = vsel %vm1388, %v1281, 0.0
      %v1405 = vsel %vm1388, %v1283, 0.0
      %v1406 = vsel %vm1388, %v1342, 0.0
      %v1407 = vsel %vm1388, %v1344, 0.0
      %v1408 = vsel %vm1389, %v1165, 0.0
      %v1409 = vsel %vm1389, %v1167, 0.0
      %v1410 = vsel %vm1389, %v1226, 0.0
      %v1411 = vsel %vm1389, %v1228, 0.0
      %v1412 = vsel %vm1389, %v1287, 0.0
      %v1413 = vsel %vm1389, %v1289, 0.0
      %v1414 = vsel %vm1389, %v1348, 0.0
      %v1415 = vsel %vm1389, %v1350, 0.0
      %v1416 = vsel %vm1390, %v1169, 0.0
      %v1417 = vsel %vm1390, %v1171, 0.0
      %v1418 = vsel %vm1390, %v1230, 0.0
      %v1419 = vsel %vm1390, %v1232, 0.0
      %v1420 = vsel %vm1390, %v1291, 0.0
      %v1421 = vsel %vm1390, %v1293, 0.0
      %v1422 = vsel %vm1390, %v1352, 0.0
      %v1423 = vsel %vm1390, %v1354, 0.0
      %v1424 = vsel %vm1391, %v1175, 0.0
      %v1425 = vsel %vm1391, %v1177, 0.0
      %v1426 = vsel %vm1391, %v1236, 0.0
      %v1427 = vsel %vm1391, %v1238, 0.0
      %v1428 = vsel %vm1391, %v1297, 0.0
      %v1429 = vsel %vm1391, %v1299, 0.0
      %v1430 = vsel %vm1391, %v1358, 0.0
      %v1431 = vsel %vm1391, %v1360, 0.0
      %v1432 = vadd.f32 %v1392, %v1400
      %v1433 = vadd.f32 %v1432, %v1408
      %v1434 = vadd.f32 %v1433, %v1416
      %v1435 = vadd.f32 %v1434, %v1424
      %v1436 = vrot.slane %v1435, 4
      %v1437 = vadd.f32 %v1435, %v1436
      %v1438 = vrot.slane %v1437, 2
      %v1439 = vadd.f32 %v1437, %v1438
      %v1440 = vrot.slane %v1439, 1
      %v1441 = vadd.f32 %v1439, %v1440
      %v1442 = vadd.f32 %v1393, %v1401
      %v1443 = vadd.f32 %v1442, %v1409
      %v1444 = vadd.f32 %v1443, %v1417
      %v1445 = vadd.f32 %v1444, %v1425
      %v1446 = vrot.slane %v1445, 4
      %v1447 = vadd.f32 %v1445, %v1446
      %v1448 = vrot.slane %v1447, 2
      %v1449 = vadd.f32 %v1447, %v1448
      %v1450 = vrot.slane %v1449, 1
      %v1451 = vadd.f32 %v1449, %v1450
      %v1452 = vadd.f32 %v1394, %v1402
      %v1453 = vadd.f32 %v1452, %v1410
      %v1454 = vadd.f32 %v1453, %v1418
      %v1455 = vadd.f32 %v1454, %v1426
      %v1456 = vrot.slane %v1455, 4
      %v1457 = vadd.f32 %v1455, %v1456
      %v1458 = vrot.slane %v1457, 2
      %v1459 = vadd.f32 %v1457, %v1458
      %v1460 = vrot.slane %v1459, 1
      %v1461 = vadd.f32 %v1459, %v1460
      %v1462 = vadd.f32 %v1395, %v1403
      %v1463 = vadd.f32 %v1462, %v1411
      %v1464 = vadd.f32 %v1463, %v1419
      %v1465 = vadd.f32 %v1464, %v1427
      %v1466 = vrot.slane %v1465, 4
      %v1467 = vadd.f32 %v1465, %v1466
      %v1468 = vrot.slane %v1467, 2
      %v1469 = vadd.f32 %v1467, %v1468
      %v1470 = vrot.slane %v1469, 1
      %v1471 = vadd.f32 %v1469, %v1470
      %v1472 = vadd.f32 %v1396, %v1404
      %v1473 = vadd.f32 %v1472, %v1412
      %v1474 = vadd.f32 %v1473, %v1420
      %v1475 = vadd.f32 %v1474, %v1428
      %v1476 = vrot.slane %v1475, 4
      %v1477 = vadd.f32 %v1475, %v1476
      %v1478 = vrot.slane %v1477, 2
      %v1479 = vadd.f32 %v1477, %v1478
      %v1480 = vrot.slane %v1479, 1
      %v1481 = vadd.f32 %v1479, %v1480
      %v1482 = vadd.f32 %v1397, %v1405
      %v1483 = vadd.f32 %v1482, %v1413
      %v1484 = vadd.f32 %v1483, %v1421
      %v1485 = vadd.f32 %v1484, %v1429
      %v1486 = vrot.slane %v1485, 4
      %v1487 = vadd.f32 %v1485, %v1486
      %v1488 = vrot.slane %v1487, 2
      %v1489 = vadd.f32 %v1487, %v1488
      %v1490 = vrot.slane %v1489, 1
      %v1491 = vadd.f32 %v1489, %v1490
      %v1492 = vadd.f32 %v1398, %v1406
      %v1493 = vadd.f32 %v1492, %v1414
      %v1494 = vadd.f32 %v1493, %v1422
      %v1495 = vadd.f32 %v1494, %v1430
      %v1496 = vrot.slane %v1495, 4
      %v1497 = vadd.f32 %v1495, %v1496
      %v1498 = vrot.slane %v1497, 2
      %v1499 = vadd.f32 %v1497, %v1498
      %v1500 = vrot.slane %v1499, 1
      %v1501 = vadd.f32 %v1499, %v1500
      %v1502 = vadd.f32 %v1399, %v1407
      %v1503 = vadd.f32 %v1502, %v1415
      %v1504 = vadd.f32 %v1503, %v1423
      %v1505 = vadd.f32 %v1504, %v1431
      %v1506 = vrot.slane %v1505, 4
      %v1507 = vadd.f32 %v1505, %v1506
      %v1508 = vrot.slane %v1507, 2
      %v1509 = vadd.f32 %v1507, %v1508
      %v1510 = vrot.slane %v1509, 1
      %v1511 = vadd.f32 %v1509, %v1510
      %v1520 = vcombine.low %v1441, %v1451
      %v1521 = vcombine.low %v1461, %v1471
      %v1522 = vcombine.low %v1481, %v1491
      %v1523 = vcombine.low %v1501, %v1511
      %v1525 = vunpack.c.l.s4 1966171168
      %v1526 = vunpack.c.0.s8 %v1525
      %v1527 = vlaneseq
      %v1528 = vshrl.u32 %v1527, 7
      %v1529 = vsub.s32 %v1526, %v1528
      %v1530 = vrot.slane %v1520, %v1529
      %v1532 = vunpack.c.l.s4 1966171168
      %v1533 = vunpack.c.0.s8 %v1532
      %v1534 = vlaneseq
      %v1535 = vshrl.u32 %v1534, 7
      %v1536 = vsub.s32 %v1533, %v1535
      %v1537 = vrot.slane %v1521, %v1536
      %v1539 = vunpack.c.l.s4 1966171168
      %v1540 = vunpack.c.0.s8 %v1539
      %v1541 = vlaneseq
      %v1542 = vshrl.u32 %v1541, 7
      %v1543 = vsub.s32 %v1540, %v1542
      %v1544 = vrot.slane %v1522, %v1543
      %v1546 = vunpack.c.l.s4 1966171168
      %v1547 = vunpack.c.0.s8 %v1546
      %v1548 = vlaneseq
      %v1549 = vshrl.u32 %v1548, 7
      %v1550 = vsub.s32 %v1547, %v1549
      %v1551 = vrot.slane %v1523, %v1550
      %v1552 = vcombine.low %v1530, %v1537
      %v1553 = vcombine.low %v1544, %v1551
      %v1555 = vunpack.c.l.s4 1966171168
      %v1556 = vunpack.c.0.s8 %v1555
      %v1557 = vlaneseq
      %v1558 = vshrl.u32 %v1557, 7
      %v1559 = vsub.s32 %v1556, %v1558
      %v1560 = vrot.slane %v1552, %v1559
      %v1562 = vunpack.c.l.s4 1966171168
      %v1563 = vunpack.c.0.s8 %v1562
      %v1564 = vlaneseq
      %v1565 = vshrl.u32 %v1564, 7
      %v1566 = vsub.s32 %v1563, %v1565
      %v1567 = vrot.slane %v1553, %v1566
      %v1568 = vcombine.low %v1560, %v1567
      %1570 = vst [vmem:[%s459] sm:$0xff] %v1568
      %v1571 = vmul.f32 %v1392, %v1392
      %v1572 = vmul.f32 %v1393, %v1393
      %v1573 = vmul.f32 %v1394, %v1394
      %v1574 = vmul.f32 %v1395, %v1395
      %v1575 = vmul.f32 %v1396, %v1396
      %v1576 = vmul.f32 %v1397, %v1397
      %v1577 = vmul.f32 %v1398, %v1398
      %v1578 = vmul.f32 %v1399, %v1399
      %v1579 = vmul.f32 %v1400, %v1400
      %v1580 = vmul.f32 %v1401, %v1401
      %v1581 = vmul.f32 %v1402, %v1402
      %v1582 = vmul.f32 %v1403, %v1403
      %v1583 = vmul.f32 %v1404, %v1404
      %v1584 = vmul.f32 %v1405, %v1405
      %v1585 = vmul.f32 %v1406, %v1406
      %v1586 = vmul.f32 %v1407, %v1407
      %v1587 = vmul.f32 %v1408, %v1408
      %v1588 = vmul.f32 %v1409, %v1409
      %v1589 = vmul.f32 %v1410, %v1410
      %v1590 = vmul.f32 %v1411, %v1411
      %v1591 = vmul.f32 %v1412, %v1412
      %v1592 = vmul.f32 %v1413, %v1413
      %v1593 = vmul.f32 %v1414, %v1414
      %v1594 = vmul.f32 %v1415, %v1415
      %v1595 = vmul.f32 %v1416, %v1416
      %v1596 = vmul.f32 %v1417, %v1417
      %v1597 = vmul.f32 %v1418, %v1418
      %v1598 = vmul.f32 %v1419, %v1419
      %v1599 = vmul.f32 %v1420, %v1420
      %v1600 = vmul.f32 %v1421, %v1421
      %v1601 = vmul.f32 %v1422, %v1422
      %v1602 = vmul.f32 %v1423, %v1423
      %v1603 = vmul.f32 %v1424, %v1424
      %v1604 = vmul.f32 %v1425, %v1425
      %v1605 = vmul.f32 %v1426, %v1426
      %v1606 = vmul.f32 %v1427, %v1427
      %v1607 = vmul.f32 %v1428, %v1428
      %v1608 = vmul.f32 %v1429, %v1429
      %v1609 = vmul.f32 %v1430, %v1430
      %v1610 = vmul.f32 %v1431, %v1431
      %v1611 = vadd.f32 %v1571, %v1579
      %v1612 = vadd.f32 %v1611, %v1587
      %v1613 = vadd.f32 %v1612, %v1595
      %v1614 = vadd.f32 %v1613, %v1603
      %v1615 = vrot.slane %v1614, 4
      %v1616 = vadd.f32 %v1614, %v1615
      %v1617 = vrot.slane %v1616, 2
      %v1618 = vadd.f32 %v1616, %v1617
      %v1619 = vrot.slane %v1618, 1
      %v1620 = vadd.f32 %v1618, %v1619
      %v1621 = vadd.f32 %v1572, %v1580
      %v1622 = vadd.f32 %v1621, %v1588
      %v1623 = vadd.f32 %v1622, %v1596
      %v1624 = vadd.f32 %v1623, %v1604
      %v1625 = vrot.slane %v1624, 4
      %v1626 = vadd.f32 %v1624, %v1625
      %v1627 = vrot.slane %v1626, 2
      %v1628 = vadd.f32 %v1626, %v1627
      %v1629 = vrot.slane %v1628, 1
      %v1630 = vadd.f32 %v1628, %v1629
      %v1631 = vadd.f32 %v1573, %v1581
      %v1632 = vadd.f32 %v1631, %v1589
      %v1633 = vadd.f32 %v1632, %v1597
      %v1634 = vadd.f32 %v1633, %v1605
      %v1635 = vrot.slane %v1634, 4
      %v1636 = vadd.f32 %v1634, %v1635
      %v1637 = vrot.slane %v1636, 2
      %v1638 = vadd.f32 %v1636, %v1637
      %v1639 = vrot.slane %v1638, 1
      %v1640 = vadd.f32 %v1638, %v1639
      %v1641 = vadd.f32 %v1574, %v1582
      %v1642 = vadd.f32 %v1641, %v1590
      %v1643 = vadd.f32 %v1642, %v1598
      %v1644 = vadd.f32 %v1643, %v1606
      %v1645 = vrot.slane %v1644, 4
      %v1646 = vadd.f32 %v1644, %v1645
      %v1647 = vrot.slane %v1646, 2
      %v1648 = vadd.f32 %v1646, %v1647
      %v1649 = vrot.slane %v1648, 1
      %v1650 = vadd.f32 %v1648, %v1649
      %v1651 = vadd.f32 %v1575, %v1583
      %v1652 = vadd.f32 %v1651, %v1591
      %v1653 = vadd.f32 %v1652, %v1599
      %v1654 = vadd.f32 %v1653, %v1607
      %v1655 = vrot.slane %v1654, 4
      %v1656 = vadd.f32 %v1654, %v1655
      %v1657 = vrot.slane %v1656, 2
      %v1658 = vadd.f32 %v1656, %v1657
      %v1659 = vrot.slane %v1658, 1
      %v1660 = vadd.f32 %v1658, %v1659
      %v1661 = vadd.f32 %v1576, %v1584
      %v1662 = vadd.f32 %v1661, %v1592
      %v1663 = vadd.f32 %v1662, %v1600
      %v1664 = vadd.f32 %v1663, %v1608
      %v1665 = vrot.slane %v1664, 4
      %v1666 = vadd.f32 %v1664, %v1665
      %v1667 = vrot.slane %v1666, 2
      %v1668 = vadd.f32 %v1666, %v1667
      %v1669 = vrot.slane %v1668, 1
      %v1670 = vadd.f32 %v1668, %v1669
      %v1671 = vadd.f32 %v1577, %v1585
      %v1672 = vadd.f32 %v1671, %v1593
      %v1673 = vadd.f32 %v1672, %v1601
      %v1674 = vadd.f32 %v1673, %v1609
      %v1675 = vrot.slane %v1674, 4
      %v1676 = vadd.f32 %v1674, %v1675
      %v1677 = vrot.slane %v1676, 2
      %v1678 = vadd.f32 %v1676, %v1677
      %v1679 = vrot.slane %v1678, 1
      %v1680 = vadd.f32 %v1678, %v1679
      %v1681 = vadd.f32 %v1578, %v1586
      %v1682 = vadd.f32 %v1681, %v1594
      %v1683 = vadd.f32 %v1682, %v1602
      %v1684 = vadd.f32 %v1683, %v1610
      %v1685 = vrot.slane %v1684, 4
      %v1686 = vadd.f32 %v1684, %v1685
      %v1687 = vrot.slane %v1686, 2
      %v1688 = vadd.f32 %v1686, %v1687
      %v1689 = vrot.slane %v1688, 1
      %v1690 = vadd.f32 %v1688, %v1689
      %v1699 = vcombine.low %v1620, %v1630
      %v1700 = vcombine.low %v1640, %v1650
      %v1701 = vcombine.low %v1660, %v1670
      %v1702 = vcombine.low %v1680, %v1690
      %v1704 = vunpack.c.l.s4 1966171168
      %v1705 = vunpack.c.0.s8 %v1704
      %v1706 = vlaneseq
      %v1707 = vshrl.u32 %v1706, 7
      %v1708 = vsub.s32 %v1705, %v1707
      %v1709 = vrot.slane %v1699, %v1708
      %v1711 = vunpack.c.l.s4 1966171168
      %v1712 = vunpack.c.0.s8 %v1711
      %v1713 = vlaneseq
      %v1714 = vshrl.u32 %v1713, 7
      %v1715 = vsub.s32 %v1712, %v1714
      %v1716 = vrot.slane %v1700, %v1715
      %v1718 = vunpack.c.l.s4 1966171168
      %v1719 = vunpack.c.0.s8 %v1718
      %v1720 = vlaneseq
      %v1721 = vshrl.u32 %v1720, 7
      %v1722 = vsub.s32 %v1719, %v1721
      %v1723 = vrot.slane %v1701, %v1722
      %v1725 = vunpack.c.l.s4 1966171168
      %v1726 = vunpack.c.0.s8 %v1725
      %v1727 = vlaneseq
      %v1728 = vshrl.u32 %v1727, 7
      %v1729 = vsub.s32 %v1726, %v1728
      %v1730 = vrot.slane %v1702, %v1729
      %v1731 = vcombine.low %v1709, %v1716
      %v1732 = vcombine.low %v1723, %v1730
      %v1734 = vunpack.c.l.s4 1966171168
      %v1735 = vunpack.c.0.s8 %v1734
      %v1736 = vlaneseq
      %v1737 = vshrl.u32 %v1736, 7
      %v1738 = vsub.s32 %v1735, %v1737
      %v1739 = vrot.slane %v1731, %v1738
      %v1741 = vunpack.c.l.s4 1966171168
      %v1742 = vunpack.c.0.s8 %v1741
      %v1743 = vlaneseq
      %v1744 = vshrl.u32 %v1743, 7
      %v1745 = vsub.s32 %v1742, %v1744
      %v1746 = vrot.slane %v1732, %v1745
      %v1747 = vcombine.low %v1739, %v1746
      %1749 = vst [vmem:[%s467] sm:$0xff] %v1747
      %v1750 = vsel %vm1387, %v1155, -inf
      %v1751 = vsel %vm1387, %v1157, -inf
      %v1752 = vsel %vm1387, %v1216, -inf
      %v1753 = vsel %vm1387, %v1218, -inf
      %v1754 = vsel %vm1387, %v1277, -inf
      %v1755 = vsel %vm1387, %v1279, -inf
      %v1756 = vsel %vm1387, %v1338, -inf
      %v1757 = vsel %vm1387, %v1340, -inf
      %v1758 = vsel %vm1388, %v1159, -inf
      %v1759 = vsel %vm1388, %v1161, -inf
      %v1760 = vsel %vm1388, %v1220, -inf
      %v1761 = vsel %vm1388, %v1222, -inf
      %v1762 = vsel %vm1388, %v1281, -inf
      %v1763 = vsel %vm1388, %v1283, -inf
      %v1764 = vsel %vm1388, %v1342, -inf
      %v1765 = vsel %vm1388, %v1344, -inf
      %v1766 = vsel %vm1389, %v1165, -inf
      %v1767 = vsel %vm1389, %v1167, -inf
      %v1768 = vsel %vm1389, %v1226, -inf
      %v1769 = vsel %vm1389, %v1228, -inf
      %v1770 = vsel %vm1389, %v1287, -inf
      %v1771 = vsel %vm1389, %v1289, -inf
      %v1772 = vsel %vm1389, %v1348, -inf
      %v1773 = vsel %vm1389, %v1350, -inf
      %v1774 = vsel %vm1390, %v1169, -inf
      %v1775 = vsel %vm1390, %v1171, -inf
      %v1776 = vsel %vm1390, %v1230, -inf
      %v1777 = vsel %vm1390, %v1232, -inf
      %v1778 = vsel %vm1390, %v1291, -inf
      %v1779 = vsel %vm1390, %v1293, -inf
      %v1780 = vsel %vm1390, %v1352, -inf
      %v1781 = vsel %vm1390, %v1354, -inf
      %v1782 = vsel %vm1391, %v1175, -inf
      %v1783 = vsel %vm1391, %v1177, -inf
      %v1784 = vsel %vm1391, %v1236, -inf
      %v1785 = vsel %vm1391, %v1238, -inf
      %v1786 = vsel %vm1391, %v1297, -inf
      %v1787 = vsel %vm1391, %v1299, -inf
      %v1788 = vsel %vm1391, %v1358, -inf
      %v1789 = vsel %vm1391, %v1360, -inf
      %v1790 = vmax.f32 %v1750, %v1758
      %v1791 = vmax.f32 %v1790, %v1766
      %v1792 = vmax.f32 %v1791, %v1774
      %v1793 = vmax.f32 %v1792, %v1782
      %v1794 = vrot.slane %v1793, 4
      %v1795 = vmax.f32 %v1793, %v1794
      %v1796 = vrot.slane %v1795, 2
      %v1797 = vmax.f32 %v1795, %v1796
      %v1798 = vrot.slane %v1797, 1
      %v1799 = vmax.f32 %v1797, %v1798
      %v1800 = vmax.f32 %v1751, %v1759
      %v1801 = vmax.f32 %v1800, %v1767
      %v1802 = vmax.f32 %v1801, %v1775
      %v1803 = vmax.f32 %v1802, %v1783
      %v1804 = vrot.slane %v1803, 4
      %v1805 = vmax.f32 %v1803, %v1804
      %v1806 = vrot.slane %v1805, 2
      %v1807 = vmax.f32 %v1805, %v1806
      %v1808 = vrot.slane %v1807, 1
      %v1809 = vmax.f32 %v1807, %v1808
      %v1810 = vmax.f32 %v1752, %v1760
      %v1811 = vmax.f32 %v1810, %v1768
      %v1812 = vmax.f32 %v1811, %v1776
      %v1813 = vmax.f32 %v1812, %v1784
      %v1814 = vrot.slane %v1813, 4
      %v1815 = vmax.f32 %v1813, %v1814
      %v1816 = vrot.slane %v1815, 2
      %v1817 = vmax.f32 %v1815, %v1816
      %v1818 = vrot.slane %v1817, 1
      %v1819 = vmax.f32 %v1817, %v1818
      %v1820 = vmax.f32 %v1753, %v1761
      %v1821 = vmax.f32 %v1820, %v1769
      %v1822 = vmax.f32 %v1821, %v1777
      %v1823 = vmax.f32 %v1822, %v1785
      %v1824 = vrot.slane %v1823, 4
      %v1825 = vmax.f32 %v1823, %v1824
      %v1826 = vrot.slane %v1825, 2
      %v1827 = vmax.f32 %v1825, %v1826
      %v1828 = vrot.slane %v1827, 1
      %v1829 = vmax.f32 %v1827, %v1828
      %v1830 = vmax.f32 %v1754, %v1762
      %v1831 = vmax.f32 %v1830, %v1770
      %v1832 = vmax.f32 %v1831, %v1778
      %v1833 = vmax.f32 %v1832, %v1786
      %v1834 = vrot.slane %v1833, 4
      %v1835 = vmax.f32 %v1833, %v1834
      %v1836 = vrot.slane %v1835, 2
      %v1837 = vmax.f32 %v1835, %v1836
      %v1838 = vrot.slane %v1837, 1
      %v1839 = vmax.f32 %v1837, %v1838
      %v1840 = vmax.f32 %v1755, %v1763
      %v1841 = vmax.f32 %v1840, %v1771
      %v1842 = vmax.f32 %v1841, %v1779
      %v1843 = vmax.f32 %v1842, %v1787
      %v1844 = vrot.slane %v1843, 4
      %v1845 = vmax.f32 %v1843, %v1844
      %v1846 = vrot.slane %v1845, 2
      %v1847 = vmax.f32 %v1845, %v1846
      %v1848 = vrot.slane %v1847, 1
      %v1849 = vmax.f32 %v1847, %v1848
      %v1850 = vmax.f32 %v1756, %v1764
      %v1851 = vmax.f32 %v1850, %v1772
      %v1852 = vmax.f32 %v1851, %v1780
      %v1853 = vmax.f32 %v1852, %v1788
      %v1854 = vrot.slane %v1853, 4
      %v1855 = vmax.f32 %v1853, %v1854
      %v1856 = vrot.slane %v1855, 2
      %v1857 = vmax.f32 %v1855, %v1856
      %v1858 = vrot.slane %v1857, 1
      %v1859 = vmax.f32 %v1857, %v1858
      %v1860 = vmax.f32 %v1757, %v1765
      %v1861 = vmax.f32 %v1860, %v1773
      %v1862 = vmax.f32 %v1861, %v1781
      %v1863 = vmax.f32 %v1862, %v1789
      %v1864 = vrot.slane %v1863, 4
      %v1865 = vmax.f32 %v1863, %v1864
      %v1866 = vrot.slane %v1865, 2
      %v1867 = vmax.f32 %v1865, %v1866
      %v1868 = vrot.slane %v1867, 1
      %v1869 = vmax.f32 %v1867, %v1868
      %v1878 = vcombine.low %v1799, %v1809
      %v1879 = vcombine.low %v1819, %v1829
      %v1880 = vcombine.low %v1839, %v1849
      %v1881 = vcombine.low %v1859, %v1869
      %v1883 = vunpack.c.l.s4 1966171168
      %v1884 = vunpack.c.0.s8 %v1883
      %v1885 = vlaneseq
      %v1886 = vshrl.u32 %v1885, 7
      %v1887 = vsub.s32 %v1884, %v1886
      %v1888 = vrot.slane %v1878, %v1887
      %v1890 = vunpack.c.l.s4 1966171168
      %v1891 = vunpack.c.0.s8 %v1890
      %v1892 = vlaneseq
      %v1893 = vshrl.u32 %v1892, 7
      %v1894 = vsub.s32 %v1891, %v1893
      %v1895 = vrot.slane %v1879, %v1894
      %v1897 = vunpack.c.l.s4 1966171168
      %v1898 = vunpack.c.0.s8 %v1897
      %v1899 = vlaneseq
      %v1900 = vshrl.u32 %v1899, 7
      %v1901 = vsub.s32 %v1898, %v1900
      %v1902 = vrot.slane %v1880, %v1901
      %v1904 = vunpack.c.l.s4 1966171168
      %v1905 = vunpack.c.0.s8 %v1904
      %v1906 = vlaneseq
      %v1907 = vshrl.u32 %v1906, 7
      %v1908 = vsub.s32 %v1905, %v1907
      %v1909 = vrot.slane %v1881, %v1908
      %v1910 = vcombine.low %v1888, %v1895
      %v1911 = vcombine.low %v1902, %v1909
      %v1913 = vunpack.c.l.s4 1966171168
      %v1914 = vunpack.c.0.s8 %v1913
      %v1915 = vlaneseq
      %v1916 = vshrl.u32 %v1915, 7
      %v1917 = vsub.s32 %v1914, %v1916
      %v1918 = vrot.slane %v1910, %v1917
      %v1920 = vunpack.c.l.s4 1966171168
      %v1921 = vunpack.c.0.s8 %v1920
      %v1922 = vlaneseq
      %v1923 = vshrl.u32 %v1922, 7
      %v1924 = vsub.s32 %v1921, %v1923
      %v1925 = vrot.slane %v1911, %v1924
      %v1926 = vcombine.low %v1918, %v1925
      %1928 = vst [vmem:[%s475] sm:$0xff] %v1926
      %v1929 = vsel %vm1387, %v1155, inf
      %v1930 = vsel %vm1387, %v1157, inf
      %v1931 = vsel %vm1387, %v1216, inf
      %v1932 = vsel %vm1387, %v1218, inf
      %v1933 = vsel %vm1387, %v1277, inf
      %v1934 = vsel %vm1387, %v1279, inf
      %v1935 = vsel %vm1387, %v1338, inf
      %v1936 = vsel %vm1387, %v1340, inf
      %v1937 = vsel %vm1388, %v1159, inf
      %v1938 = vsel %vm1388, %v1161, inf
      %v1939 = vsel %vm1388, %v1220, inf
      %v1940 = vsel %vm1388, %v1222, inf
      %v1941 = vsel %vm1388, %v1281, inf
      %v1942 = vsel %vm1388, %v1283, inf
      %v1943 = vsel %vm1388, %v1342, inf
      %v1944 = vsel %vm1388, %v1344, inf
      %v1945 = vsel %vm1389, %v1165, inf
      %v1946 = vsel %vm1389, %v1167, inf
      %v1947 = vsel %vm1389, %v1226, inf
      %v1948 = vsel %vm1389, %v1228, inf
      %v1949 = vsel %vm1389, %v1287, inf
      %v1950 = vsel %vm1389, %v1289, inf
      %v1951 = vsel %vm1389, %v1348, inf
      %v1952 = vsel %vm1389, %v1350, inf
      %v1953 = vsel %vm1390, %v1169, inf
      %v1954 = vsel %vm1390, %v1171, inf
      %v1955 = vsel %vm1390, %v1230, inf
      %v1956 = vsel %vm1390, %v1232, inf
      %v1957 = vsel %vm1390, %v1291, inf
      %v1958 = vsel %vm1390, %v1293, inf
      %v1959 = vsel %vm1390, %v1352, inf
      %v1960 = vsel %vm1390, %v1354, inf
      %v1961 = vsel %vm1391, %v1175, inf
      %v1962 = vsel %vm1391, %v1177, inf
      %v1963 = vsel %vm1391, %v1236, inf
      %v1964 = vsel %vm1391, %v1238, inf
      %v1965 = vsel %vm1391, %v1297, inf
      %v1966 = vsel %vm1391, %v1299, inf
      %v1967 = vsel %vm1391, %v1358, inf
      %v1968 = vsel %vm1391, %v1360, inf
      %v1969 = vmin.f32 %v1929, %v1937
      %v1970 = vmin.f32 %v1969, %v1945
      %v1971 = vmin.f32 %v1970, %v1953
      %v1972 = vmin.f32 %v1971, %v1961
      %v1973 = vrot.slane %v1972, 4
      %v1974 = vmin.f32 %v1972, %v1973
      %v1975 = vrot.slane %v1974, 2
      %v1976 = vmin.f32 %v1974, %v1975
      %v1977 = vrot.slane %v1976, 1
      %v1978 = vmin.f32 %v1976, %v1977
      %v1979 = vmin.f32 %v1930, %v1938
      %v1980 = vmin.f32 %v1979, %v1946
      %v1981 = vmin.f32 %v1980, %v1954
      %v1982 = vmin.f32 %v1981, %v1962
      %v1983 = vrot.slane %v1982, 4
      %v1984 = vmin.f32 %v1982, %v1983
      %v1985 = vrot.slane %v1984, 2
      %v1986 = vmin.f32 %v1984, %v1985
      %v1987 = vrot.slane %v1986, 1
      %v1988 = vmin.f32 %v1986, %v1987
      %v1989 = vmin.f32 %v1931, %v1939
      %v1990 = vmin.f32 %v1989, %v1947
      %v1991 = vmin.f32 %v1990, %v1955
      %v1992 = vmin.f32 %v1991, %v1963
      %v1993 = vrot.slane %v1992, 4
      %v1994 = vmin.f32 %v1992, %v1993
      %v1995 = vrot.slane %v1994, 2
      %v1996 = vmin.f32 %v1994, %v1995
      %v1997 = vrot.slane %v1996, 1
      %v1998 = vmin.f32 %v1996, %v1997
      %v1999 = vmin.f32 %v1932, %v1940
      %v2000 = vmin.f32 %v1999, %v1948
      %v2001 = vmin.f32 %v2000, %v1956
      %v2002 = vmin.f32 %v2001, %v1964
      %v2003 = vrot.slane %v2002, 4
      %v2004 = vmin.f32 %v2002, %v2003
      %v2005 = vrot.slane %v2004, 2
      %v2006 = vmin.f32 %v2004, %v2005
      %v2007 = vrot.slane %v2006, 1
      %v2008 = vmin.f32 %v2006, %v2007
      %v2009 = vmin.f32 %v1933, %v1941
      %v2010 = vmin.f32 %v2009, %v1949
      %v2011 = vmin.f32 %v2010, %v1957
      %v2012 = vmin.f32 %v2011, %v1965
      %v2013 = vrot.slane %v2012, 4
      %v2014 = vmin.f32 %v2012, %v2013
      %v2015 = vrot.slane %v2014, 2
      %v2016 = vmin.f32 %v2014, %v2015
      %v2017 = vrot.slane %v2016, 1
      %v2018 = vmin.f32 %v2016, %v2017
      %v2019 = vmin.f32 %v1934, %v1942
      %v2020 = vmin.f32 %v2019, %v1950
      %v2021 = vmin.f32 %v2020, %v1958
      %v2022 = vmin.f32 %v2021, %v1966
      %v2023 = vrot.slane %v2022, 4
      %v2024 = vmin.f32 %v2022, %v2023
      %v2025 = vrot.slane %v2024, 2
      %v2026 = vmin.f32 %v2024, %v2025
      %v2027 = vrot.slane %v2026, 1
      %v2028 = vmin.f32 %v2026, %v2027
      %v2029 = vmin.f32 %v1935, %v1943
      %v2030 = vmin.f32 %v2029, %v1951
      %v2031 = vmin.f32 %v2030, %v1959
      %v2032 = vmin.f32 %v2031, %v1967
      %v2033 = vrot.slane %v2032, 4
      %v2034 = vmin.f32 %v2032, %v2033
      %v2035 = vrot.slane %v2034, 2
      %v2036 = vmin.f32 %v2034, %v2035
      %v2037 = vrot.slane %v2036, 1
      %v2038 = vmin.f32 %v2036, %v2037
      %v2039 = vmin.f32 %v1936, %v1944
      %v2040 = vmin.f32 %v2039, %v1952
      %v2041 = vmin.f32 %v2040, %v1960
      %v2042 = vmin.f32 %v2041, %v1968
      %v2043 = vrot.slane %v2042, 4
      %v2044 = vmin.f32 %v2042, %v2043
      %v2045 = vrot.slane %v2044, 2
      %v2046 = vmin.f32 %v2044, %v2045
      %v2047 = vrot.slane %v2046, 1
      %v2048 = vmin.f32 %v2046, %v2047
      %v2057 = vcombine.low %v1978, %v1988
      %v2058 = vcombine.low %v1998, %v2008
      %v2059 = vcombine.low %v2018, %v2028
      %v2060 = vcombine.low %v2038, %v2048
      %v2062 = vunpack.c.l.s4 1966171168
      %v2063 = vunpack.c.0.s8 %v2062
      %v2064 = vlaneseq
      %v2065 = vshrl.u32 %v2064, 7
      %v2066 = vsub.s32 %v2063, %v2065
      %v2067 = vrot.slane %v2057, %v2066
      %v2069 = vunpack.c.l.s4 1966171168
      %v2070 = vunpack.c.0.s8 %v2069
      %v2071 = vlaneseq
      %v2072 = vshrl.u32 %v2071, 7
      %v2073 = vsub.s32 %v2070, %v2072
      %v2074 = vrot.slane %v2058, %v2073
      %v2076 = vunpack.c.l.s4 1966171168
      %v2077 = vunpack.c.0.s8 %v2076
      %v2078 = vlaneseq
      %v2079 = vshrl.u32 %v2078, 7
      %v2080 = vsub.s32 %v2077, %v2079
      %v2081 = vrot.slane %v2059, %v2080
      %v2083 = vunpack.c.l.s4 1966171168
      %v2084 = vunpack.c.0.s8 %v2083
      %v2085 = vlaneseq
      %v2086 = vshrl.u32 %v2085, 7
      %v2087 = vsub.s32 %v2084, %v2086
      %v2088 = vrot.slane %v2060, %v2087
      %v2089 = vcombine.low %v2067, %v2074
      %v2090 = vcombine.low %v2081, %v2088
      %v2092 = vunpack.c.l.s4 1966171168
      %v2093 = vunpack.c.0.s8 %v2092
      %v2094 = vlaneseq
      %v2095 = vshrl.u32 %v2094, 7
      %v2096 = vsub.s32 %v2093, %v2095
      %v2097 = vrot.slane %v2089, %v2096
      %v2099 = vunpack.c.l.s4 1966171168
      %v2100 = vunpack.c.0.s8 %v2099
      %v2101 = vlaneseq
      %v2102 = vshrl.u32 %v2101, 7
      %v2103 = vsub.s32 %v2100, %v2102
      %v2104 = vrot.slane %v2090, %v2103
      %v2105 = vcombine.low %v2097, %v2104
      %2107 = vst [vmem:[%s483] sm:$0xff] %v2105
      %p2108 = scmp.lt.s32.totalorder %s27, 3
      %s2109 = scalar_select %p2108, %s27, 3
      %p2110 = scmp.lt.s32.totalorder %s28, 0
      %s2111 = scalar_select %p2110, %s28, 0
      %s2112 = smul.addr %s2111, 8
      %s2113 = smul.addr %s2109, 8
      %s2114 = sadd.s32 %s2112, %s2113
      %s2115 = scalar_lea.vmem %s8, %s2114
      %p2116 = scmp.lt.s32.totalorder %s27, 3
      %s2117 = scalar_select %p2116, %s27, 3
      %p2118 = scmp.lt.s32.totalorder %s28, 0
      %s2119 = scalar_select %p2118, %s28, 0
      %s2120 = smul.addr %s2119, 8
      %s2121 = smul.addr %s2117, 8
      %s2122 = sadd.s32 %s2120, %s2121
      %s2123 = scalar_lea.vmem %s9, %s2122
      %p2124 = scmp.lt.s32.totalorder %s27, 3
      %s2125 = scalar_select %p2124, %s27, 3
      %p2126 = scmp.lt.s32.totalorder %s28, 0
      %s2127 = scalar_select %p2126, %s28, 0
      %s2128 = smul.addr %s2127, 8
      %s2129 = smul.addr %s2125, 8
      %s2130 = sadd.s32 %s2128, %s2129
      %s2131 = scalar_lea.vmem %s10, %s2130
      %p2132 = scmp.lt.s32.totalorder %s27, 3
      %s2133 = scalar_select %p2132, %s27, 3
      %p2134 = scmp.lt.s32.totalorder %s28, 0
      %s2135 = scalar_select %p2134, %s28, 0
      %s2136 = smul.addr %s2135, 8
      %s2137 = smul.addr %s2133, 8
      %s2138 = sadd.s32 %s2136, %s2137
      %s2139 = scalar_lea.vmem %s11, %s2138
      // Predicated region
      $region53: #{tnet_forward.6} parent=51 // pred_check
        %p2140 = pneg %p230
      $region54: #{tnet_forward.6} parent=51 // pred_check_branch
        %2142 = sbr.rel (%p2140) target = $region56
      $region55: #{tnet_forward.6} parent=51 // pred_region
        _
      $region56: #{tnet_forward.6} parent=51 // pred_fallthru
        _
      // Predicated region
      $region57: #{tnet_forward.6} parent=51 // pred_check
        %p2143 = pneg %p258
      $region58: #{tnet_forward.6} parent=51 // pred_check_branch
        %2145 = sbr.rel (%p2143) target = $region60
      $region59: #{tnet_forward.6} parent=51 // pred_region
        _
      $region60: #{tnet_forward.6} parent=51 // pred_fallthru
        _
      // Predicated region
      $region61: #{tnet_forward.6} parent=51 // pred_check
        %p2146 = pneg %p286
      $region62: #{tnet_forward.6} parent=51 // pred_check_branch
        %2148 = sbr.rel (%p2146) target = $region64
      $region63: #{tnet_forward.6} parent=51 // pred_region
        _
      $region64: #{tnet_forward.6} parent=51 // pred_fallthru
        _
      // Predicated region
      $region65: #{tnet_forward.6} parent=51 // pred_check
        %p2149 = pneg %p314
      $region66: #{tnet_forward.6} parent=51 // pred_check_branch
        %2151 = sbr.rel (%p2149) target = $region68
      $region67: #{tnet_forward.6} parent=51 // pred_region
        _
      $region68: #{tnet_forward.6} parent=51 // pred_fallthru
        _
    $region52: #{tnet_forward.6} parent=5 // pred_fallthru
      _
    %p2152 = scmp.le.s32.totalorder 2, %s18
    // Predicated region
    $region69: #{tnet_forward.6} parent=5 // pred_check
      %p2153 = pneg %p2152
    $region70: #{tnet_forward.6} parent=5 // pred_check_branch
      %2155 = sbr.rel (%p2153) target = $region72
    $region71: #{tnet_forward.6} parent=5 // pred_region
      %s2156 = ssub.s32 %s18, 2
      // Predicated region
      $region73: #{tnet_forward.6} parent=71 // pred_check
        %p2157 = pneg %p236
      $region74: #{tnet_forward.6} parent=71 // pred_check_branch
        %2159 = sbr.rel (%p2157) target = $region76
      $region75: #{tnet_forward.6} parent=71 // pred_region
        %p2160 = scmp.lt.s32.totalorder %s29, 3
        %s2161 = scalar_select %p2160, %s29, 3
        %p2162 = scmp.lt.s32.totalorder %s30, 0
        %s2163 = scalar_select %p2162, %s30, 0
        %s2164 = smul.addr %s2163, 8
        %s2165 = smul.addr %s2161, 8
        %s2166 = sadd.s32 %s2164, %s2165
        %s2167 = scalar_lea.vmem %s8, %s2166
      $region76: #{tnet_forward.6} parent=71 // pred_fallthru
        _
      // Predicated region
      $region77: #{tnet_forward.6} parent=71 // pred_check
        %p2168 = pneg %p264
      $region78: #{tnet_forward.6} parent=71 // pred_check_branch
        %2170 = sbr.rel (%p2168) target = $region80
      $region79: #{tnet_forward.6} parent=71 // pred_region
        %p2171 = scmp.lt.s32.totalorder %s29, 3
        %s2172 = scalar_select %p2171, %s29, 3
        %p2173 = scmp.lt.s32.totalorder %s30, 0
        %s2174 = scalar_select %p2173, %s30, 0
        %s2175 = smul.addr %s2174, 8
        %s2176 = smul.addr %s2172, 8
        %s2177 = sadd.s32 %s2175, %s2176
        %s2178 = scalar_lea.vmem %s9, %s2177
      $region80: #{tnet_forward.6} parent=71 // pred_fallthru
        _
      // Predicated region
      $region81: #{tnet_forward.6} parent=71 // pred_check
        %p2179 = pneg %p292
      $region82: #{tnet_forward.6} parent=71 // pred_check_branch
        %2181 = sbr.rel (%p2179) target = $region84
      $region83: #{tnet_forward.6} parent=71 // pred_region
        %p2182 = scmp.lt.s32.totalorder %s29, 3
        %s2183 = scalar_select %p2182, %s29, 3
        %p2184 = scmp.lt.s32.totalorder %s30, 0
        %s2185 = scalar_select %p2184, %s30, 0
        %s2186 = smul.addr %s2185, 8
        %s2187 = smul.addr %s2183, 8
        %s2188 = sadd.s32 %s2186, %s2187
        %s2189 = scalar_lea.vmem %s10, %s2188
      $region84: #{tnet_forward.6} parent=71 // pred_fallthru
        _
      // Predicated region
      $region85: #{tnet_forward.6} parent=71 // pred_check
        %p2190 = pneg %p320
      $region86: #{tnet_forward.6} parent=71 // pred_check_branch
        %2192 = sbr.rel (%p2190) target = $region88
      $region87: #{tnet_forward.6} parent=71 // pred_region
        %p2193 = scmp.lt.s32.totalorder %s29, 3
        %s2194 = scalar_select %p2193, %s29, 3
        %p2195 = scmp.lt.s32.totalorder %s30, 0
        %s2196 = scalar_select %p2195, %s30, 0
        %s2197 = smul.addr %s2196, 8
        %s2198 = smul.addr %s2194, 8
        %s2199 = sadd.s32 %s2197, %s2198
        %s2200 = scalar_lea.vmem %s11, %s2199
      $region88: #{tnet_forward.6} parent=71 // pred_fallthru
        _
    $region72: #{tnet_forward.6} parent=5 // pred_fallthru
      _
  $region6: #{tnet_forward.6} parent=0 // loop_footer
    %s22 = sadd.s32 1, %s18
  $region7: #{tnet_forward.6} parent=0 // loop_footer_branch
    %17 = sbr.rel target = $region3
  $region8: #{tnet_forward.6} parent=0 // loop_exit
    _

// kernel: tnet_forward.7
$region0: #{tnet_forward.7}
  #allocation0 [shape = 'u32[]', space=smem, size = 0x4, offset = 0x4, fixed_abs, tag = 'smem constant byte address 0x4 - core index']
  #allocation1 [shape = 'u32[144,128]{1,0:T(1,128)}', space=vmem, size = 0x12000, scoped, tag = 'internal scratch']
  %s0 = inlined_call_operand.vmem [shape: f32[4,1024], index: 0, kind: input, shape index: {}]
  %s1 = inlined_call_operand.vmem [shape: f32[4,1024], index: 1, kind: input, shape index: {}]
  %s2 = inlined_call_operand.vmem [shape: f32[1,1024], index: 2, kind: input, shape index: {}]
  %s3 = inlined_call_operand.vmem [shape: f32[1,1024], index: 3, kind: input, shape index: {}]
  %s4 = inlined_call_operand.vmem [shape: bf16[1024,512], index: 4, kind: input, shape index: {}]
  %s5 = inlined_call_operand.vmem [shape: f32[1,512], index: 5, kind: input, shape index: {}]
  %s6 = inlined_call_operand.vmem [shape: f32[1,512], index: 6, kind: input, shape index: {}]
  %s7 = inlined_call_operand.vmem [shape: bf16[512,256], index: 7, kind: input, shape index: {}]
  %s8 = inlined_call_operand.vmem [shape: f32[1,256], index: 8, kind: input, shape index: {}]
  %s9 = inlined_call_operand.vmem [shape: f32[1,256], index: 9, kind: input, shape index: {}]
  %s10 = inlined_call_operand.vmem [shape: f32[256,16], index: 10, kind: input, shape index: {}]
  %s11 = inlined_call_operand.vmem [shape: f32[1,16], index: 11, kind: input, shape index: {}]
  %s12 = inlined_call_operand.vmem [shape: f32[4,16], index: 12, kind: output, shape index: {}]
  %s13 = sld [smem:[#allocation0]]
  $region58: #{tnet_forward.7} parent=0
    _
  %s15 = ssub.s32 1, %s13
  %s16 = scalar_select 0, %s15, %s13
  // Predicated region
  $region2: #{tnet_forward.7} parent=0 // pred_check
    _
  $region3: #{tnet_forward.7} parent=0 // pred_check_branch
    %18 = sbr.rel (0) target = $region5
  $region4: #{tnet_forward.7} parent=0 // pred_region
    _
  $region5: #{tnet_forward.7} parent=0 // pred_fallthru
    _
  // Predicated region
  $region6: #{tnet_forward.7} parent=0 // pred_check
    _
  $region7: #{tnet_forward.7} parent=0 // pred_check_branch
    %20 = sbr.rel (0) target = $region9
  $region8: #{tnet_forward.7} parent=0 // pred_region
    _
  $region9: #{tnet_forward.7} parent=0 // pred_fallthru
    _
  // Predicated region
  $region10: #{tnet_forward.7} parent=0 // pred_check
    _
  $region11: #{tnet_forward.7} parent=0 // pred_check_branch
    %22 = sbr.rel (0) target = $region13
  $region12: #{tnet_forward.7} parent=0 // pred_region
    _
  $region13: #{tnet_forward.7} parent=0 // pred_fallthru
    _
  // Predicated region
  $region14: #{tnet_forward.7} parent=0 // pred_check
    _
  $region15: #{tnet_forward.7} parent=0 // pred_check_branch
    %24 = sbr.rel (0) target = $region17
  $region16: #{tnet_forward.7} parent=0 // pred_region
    _
  $region17: #{tnet_forward.7} parent=0 // pred_fallthru
    _
  // Predicated region
  $region18: #{tnet_forward.7} parent=0 // pred_check
    _
  $region19: #{tnet_forward.7} parent=0 // pred_check_branch
    %26 = sbr.rel (0) target = $region21
  $region20: #{tnet_forward.7} parent=0 // pred_region
    _
  $region21: #{tnet_forward.7} parent=0 // pred_fallthru
    _
  // Predicated region
  $region22: #{tnet_forward.7} parent=0 // pred_check
    _
  $region23: #{tnet_forward.7} parent=0 // pred_check_branch
    %28 = sbr.rel (0) target = $region25
  $region24: #{tnet_forward.7} parent=0 // pred_region
    _
  $region25: #{tnet_forward.7} parent=0 // pred_fallthru
    _
  // Predicated region
  $region26: #{tnet_forward.7} parent=0 // pred_check
    _
  $region27: #{tnet_forward.7} parent=0 // pred_check_branch
    %30 = sbr.rel (0) target = $region29
  $region28: #{tnet_forward.7} parent=0 // pred_region
    _
  $region29: #{tnet_forward.7} parent=0 // pred_fallthru
    _
  // Predicated region
  $region30: #{tnet_forward.7} parent=0 // pred_check
    _
  $region31: #{tnet_forward.7} parent=0 // pred_check_branch
    %32 = sbr.rel (0) target = $region33
  $region32: #{tnet_forward.7} parent=0 // pred_region
    _
  $region33: #{tnet_forward.7} parent=0 // pred_fallthru
    _
  // Predicated region
  $region34: #{tnet_forward.7} parent=0 // pred_check
    _
  $region35: #{tnet_forward.7} parent=0 // pred_check_branch
    %34 = sbr.rel (0) target = $region37
  $region36: #{tnet_forward.7} parent=0 // pred_region
    _
  $region37: #{tnet_forward.7} parent=0 // pred_fallthru
    _
  // Predicated region
  $region38: #{tnet_forward.7} parent=0 // pred_check
    _
  $region39: #{tnet_forward.7} parent=0 // pred_check_branch
    %36 = sbr.rel (0) target = $region41
  $region40: #{tnet_forward.7} parent=0 // pred_region
    _
  $region41: #{tnet_forward.7} parent=0 // pred_fallthru
    _
  // Predicated region
  $region42: #{tnet_forward.7} parent=0 // pred_check
    _
  $region43: #{tnet_forward.7} parent=0 // pred_check_branch
    %38 = sbr.rel (0) target = $region45
  $region44: #{tnet_forward.7} parent=0 // pred_region
    _
  $region45: #{tnet_forward.7} parent=0 // pred_fallthru
    _
  // Predicated region
  $region46: #{tnet_forward.7} parent=0 // pred_check
    _
  $region47: #{tnet_forward.7} parent=0 // pred_check_branch
    %40 = sbr.rel (0) target = $region49
  $region48: #{tnet_forward.7} parent=0 // pred_region
    _
  $region49: #{tnet_forward.7} parent=0 // pred_fallthru
    _
  %v41 = vld [vmem:[%s2] sm:$0xff]
  %v42 = vld [vmem:[%s3] sm:$0xff]
  %vm43 = vcmp.ge.f32.partialorder %v41, 0.0
  %v44 = vld [vmem:[%s0] sm:$0xff]
  %v45 = vld [vmem:[%s0 + $0x8] sm:$0xff]
  %v46 = vld [vmem:[%s0 + $0x10] sm:$0xff]
  %v47 = vld [vmem:[%s0 + $0x18] sm:$0xff]
  %v48 = vld [vmem:[%s1] sm:$0xff]
  %v49 = vld [vmem:[%s1 + $0x8] sm:$0xff]
  %v50 = vld [vmem:[%s1 + $0x10] sm:$0xff]
  %v51 = vld [vmem:[%s1 + $0x18] sm:$0xff]
  %v52 = vsel %vm43, 1, 0
  %v53 = vlaneseq
  %v54 = vshrl.u32 %v53, 7
  %v55 = vsub.s32 0, %v54
  %v56 = vrot.slane %v52, %v55
  %v57 = vlaneseq
  %v58 = vshrl.u32 %v57, 7
  %v59 = vsub.s32 1, %v58
  %v60 = vrot.slane %v52, %v59
  %v61 = vlaneseq
  %v62 = vshrl.u32 %v61, 7
  %v63 = vsub.s32 2, %v62
  %v64 = vrot.slane %v52, %v63
  %v65 = vlaneseq
  %v66 = vshrl.u32 %v65, 7
  %v67 = vsub.s32 3, %v66
  %v68 = vrot.slane %v52, %v67
  %v69 = vlaneseq
  %v70 = vshrl.u32 %v69, 7
  %v71 = vsub.s32 4, %v70
  %v72 = vrot.slane %v52, %v71
  %v73 = vlaneseq
  %v74 = vshrl.u32 %v73, 7
  %v75 = vsub.s32 5, %v74
  %v76 = vrot.slane %v52, %v75
  %v77 = vlaneseq
  %v78 = vshrl.u32 %v77, 7
  %v79 = vsub.s32 6, %v78
  %v80 = vrot.slane %v52, %v79
  %v81 = vlaneseq
  %v82 = vshrl.u32 %v81, 7
  %v83 = vsub.s32 7, %v82
  %v84 = vrot.slane %v52, %v83
  %vm85 = vcmp.eq.s32.totalorder %v56, 1
  %vm86 = vcmp.eq.s32.totalorder %v60, 1
  %vm87 = vcmp.eq.s32.totalorder %v64, 1
  %vm88 = vcmp.eq.s32.totalorder %v68, 1
  %vm89 = vcmp.eq.s32.totalorder %v72, 1
  %vm90 = vcmp.eq.s32.totalorder %v76, 1
  %vm91 = vcmp.eq.s32.totalorder %v80, 1
  %vm92 = vcmp.eq.s32.totalorder %v84, 1
  %v97 = vcombine.high %v44, %v44
  %v98 = vcombine.high %v45, %v45
  %v99 = vcombine.high %v46, %v46
  %v100 = vcombine.high %v47, %v47
  %v109 = vcombine.high %v48, %v48
  %v110 = vcombine.high %v49, %v49
  %v111 = vcombine.high %v50, %v50
  %v112 = vcombine.high %v51, %v51
  %v117 = vsel %vm85, %v44, %v48
  %v118 = vsel %vm86, %v97, %v109
  %v119 = vsel %vm87, %v45, %v49
  %v120 = vsel %vm88, %v98, %v110
  %v121 = vsel %vm89, %v46, %v50
  %v122 = vsel %vm90, %v99, %v111
  %v123 = vsel %vm91, %v47, %v51
  %v124 = vsel %vm92, %v100, %v112
  %v126 = vlaneseq
  %v127 = vshrl.u32 %v126, 7
  %v128 = vsub.s32 0, %v127
  %v129 = vrot.slane %v41, %v128
  %v130 = vlaneseq
  %v131 = vshrl.u32 %v130, 7
  %v132 = vsub.s32 1, %v131
  %v133 = vrot.slane %v41, %v132
  %v134 = vlaneseq
  %v135 = vshrl.u32 %v134, 7
  %v136 = vsub.s32 2, %v135
  %v137 = vrot.slane %v41, %v136
  %v138 = vlaneseq
  %v139 = vshrl.u32 %v138, 7
  %v140 = vsub.s32 3, %v139
  %v141 = vrot.slane %v41, %v140
  %v142 = vlaneseq
  %v143 = vshrl.u32 %v142, 7
  %v144 = vsub.s32 4, %v143
  %v145 = vrot.slane %v41, %v144
  %v146 = vlaneseq
  %v147 = vshrl.u32 %v146, 7
  %v148 = vsub.s32 5, %v147
  %v149 = vrot.slane %v41, %v148
  %v150 = vlaneseq
  %v151 = vshrl.u32 %v150, 7
  %v152 = vsub.s32 6, %v151
  %v153 = vrot.slane %v41, %v152
  %v154 = vlaneseq
  %v155 = vshrl.u32 %v154, 7
  %v156 = vsub.s32 7, %v155
  %v157 = vrot.slane %v41, %v156
  %v166 = vmul.f32 %v117, %v129
  %v167 = vmul.f32 %v118, %v133
  %v168 = vmul.f32 %v119, %v137
  %v169 = vmul.f32 %v120, %v141
  %v170 = vmul.f32 %v121, %v145
  %v171 = vmul.f32 %v122, %v149
  %v172 = vmul.f32 %v123, %v153
  %v173 = vmul.f32 %v124, %v157
  %v175 = vlaneseq
  %v176 = vshrl.u32 %v175, 7
  %v177 = vsub.s32 0, %v176
  %v178 = vrot.slane %v42, %v177
  %v179 = vlaneseq
  %v180 = vshrl.u32 %v179, 7
  %v181 = vsub.s32 1, %v180
  %v182 = vrot.slane %v42, %v181
  %v183 = vlaneseq
  %v184 = vshrl.u32 %v183, 7
  %v185 = vsub.s32 2, %v184
  %v186 = vrot.slane %v42, %v185
  %v187 = vlaneseq
  %v188 = vshrl.u32 %v187, 7
  %v189 = vsub.s32 3, %v188
  %v190 = vrot.slane %v42, %v189
  %v191 = vlaneseq
  %v192 = vshrl.u32 %v191, 7
  %v193 = vsub.s32 4, %v192
  %v194 = vrot.slane %v42, %v193
  %v195 = vlaneseq
  %v196 = vshrl.u32 %v195, 7
  %v197 = vsub.s32 5, %v196
  %v198 = vrot.slane %v42, %v197
  %v199 = vlaneseq
  %v200 = vshrl.u32 %v199, 7
  %v201 = vsub.s32 6, %v200
  %v202 = vrot.slane %v42, %v201
  %v203 = vlaneseq
  %v204 = vshrl.u32 %v203, 7
  %v205 = vsub.s32 7, %v204
  %v206 = vrot.slane %v42, %v205
  %v215 = vadd.f32 %v166, %v178
  %v216 = vadd.f32 %v167, %v182
  %v217 = vadd.f32 %v168, %v186
  %v218 = vadd.f32 %v169, %v190
  %v219 = vadd.f32 %v170, %v194
  %v220 = vadd.f32 %v171, %v198
  %v221 = vadd.f32 %v172, %v202
  %v222 = vadd.f32 %v173, %v206
  %v223 = vmax.f32 %v215, 0.0
  %v224 = vmax.f32 %v216, 0.0
  %v225 = vmax.f32 %v217, 0.0
  %v226 = vmax.f32 %v218, 0.0
  %v227 = vmax.f32 %v219, 0.0
  %v228 = vmax.f32 %v220, 0.0
  %v229 = vmax.f32 %v221, 0.0
  %v230 = vmax.f32 %v222, 0.0
  %v231 = vpack.c.bf16 %v223, %v223
  %v232 = vpack.c.bf16 %v224, %v224
  %v233 = vpack.c.bf16 %v225, %v225
  %v234 = vpack.c.bf16 %v226, %v226
  %v235 = vpack.c.bf16 %v227, %v227
  %v236 = vpack.c.bf16 %v228, %v228
  %v237 = vpack.c.bf16 %v229, %v229
  %v238 = vpack.c.bf16 %v230, %v230
  %v239 = vld [vmem:[%s4] sm:$0xff]
  %v240 = vld [vmem:[%s4 + $0x8] sm:$0xff]
  %v241 = vld [vmem:[%s4 + $0x10] sm:$0xff]
  %v242 = vld [vmem:[%s4 + $0x18] sm:$0xff]
  %v243 = vld [vmem:[%s4 + $0x20] sm:$0xff]
  %v244 = vld [vmem:[%s4 + $0x28] sm:$0xff]
  %v245 = vld [vmem:[%s4 + $0x30] sm:$0xff]
  %v246 = vld [vmem:[%s4 + $0x38] sm:$0xff]
  %v247 = vld [vmem:[%s4 + $0x40] sm:$0xff]
  %v248 = vld [vmem:[%s4 + $0x48] sm:$0xff]
  %v249 = vld [vmem:[%s4 + $0x50] sm:$0xff]
  %v250 = vld [vmem:[%s4 + $0x58] sm:$0xff]
  %v251 = vld [vmem:[%s4 + $0x60] sm:$0xff]
  %v252 = vld [vmem:[%s4 + $0x68] sm:$0xff]
  %v253 = vld [vmem:[%s4 + $0x70] sm:$0xff]
  %v254 = vld [vmem:[%s4 + $0x78] sm:$0xff]
  %v255 = vld [vmem:[%s4 + $0x80] sm:$0xff]
  %v256 = vld [vmem:[%s4 + $0x88] sm:$0xff]
  %v257 = vld [vmem:[%s4 + $0x90] sm:$0xff]
  %v258 = vld [vmem:[%s4 + $0x98] sm:$0xff]
  %v259 = vld [vmem:[%s4 + $0xa0] sm:$0xff]
  %v260 = vld [vmem:[%s4 + $0xa8] sm:$0xff]
  %v261 = vld [vmem:[%s4 + $0xb0] sm:$0xff]
  %v262 = vld [vmem:[%s4 + $0xb8] sm:$0xff]
  %v263 = vld [vmem:[%s4 + $0xc0] sm:$0xff]
  %v264 = vld [vmem:[%s4 + $0xc8] sm:$0xff]
  %v265 = vld [vmem:[%s4 + $0xd0] sm:$0xff]
  %v266 = vld [vmem:[%s4 + $0xd8] sm:$0xff]
  %v267 = vld [vmem:[%s4 + $0xe0] sm:$0xff]
  %v268 = vld [vmem:[%s4 + $0xe8] sm:$0xff]
  %v269 = vld [vmem:[%s4 + $0xf0] sm:$0xff]
  %v270 = vld [vmem:[%s4 + $0xf8] sm:$0xff]
  %v271 = vld [vmem:[%s4 + $0x100] sm:$0xff]
  %v272 = vld [vmem:[%s4 + $0x108] sm:$0xff]
  %v273 = vld [vmem:[%s4 + $0x110] sm:$0xff]
  %v274 = vld [vmem:[%s4 + $0x118] sm:$0xff]
  %v275 = vld [vmem:[%s4 + $0x120] sm:$0xff]
  %v276 = vld [vmem:[%s4 + $0x128] sm:$0xff]
  %v277 = vld [vmem:[%s4 + $0x130] sm:$0xff]
  %v278 = vld [vmem:[%s4 + $0x138] sm:$0xff]
  %v279 = vld [vmem:[%s4 + $0x140] sm:$0xff]
  %v280 = vld [vmem:[%s4 + $0x148] sm:$0xff]
  %v281 = vld [vmem:[%s4 + $0x150] sm:$0xff]
  %v282 = vld [vmem:[%s4 + $0x158] sm:$0xff]
  %v283 = vld [vmem:[%s4 + $0x160] sm:$0xff]
  %v284 = vld [vmem:[%s4 + $0x168] sm:$0xff]
  %v285 = vld [vmem:[%s4 + $0x170] sm:$0xff]
  %v286 = vld [vmem:[%s4 + $0x178] sm:$0xff]
  %v287 = vld [vmem:[%s4 + $0x180] sm:$0xff]
  %v288 = vld [vmem:[%s4 + $0x188] sm:$0xff]
  %v289 = vld [vmem:[%s4 + $0x190] sm:$0xff]
  %v290 = vld [vmem:[%s4 + $0x198] sm:$0xff]
  %v291 = vld [vmem:[%s4 + $0x1a0] sm:$0xff]
  %v292 = vld [vmem:[%s4 + $0x1a8] sm:$0xff]
  %v293 = vld [vmem:[%s4 + $0x1b0] sm:$0xff]
  %v294 = vld [vmem:[%s4 + $0x1b8] sm:$0xff]
  %v295 = vld [vmem:[%s4 + $0x1c0] sm:$0xff]
  %v296 = vld [vmem:[%s4 + $0x1c8] sm:$0xff]
  %v297 = vld [vmem:[%s4 + $0x1d0] sm:$0xff]
  %v298 = vld [vmem:[%s4 + $0x1d8] sm:$0xff]
  %v299 = vld [vmem:[%s4 + $0x1e0] sm:$0xff]
  %v300 = vld [vmem:[%s4 + $0x1e8] sm:$0xff]
  %v301 = vld [vmem:[%s4 + $0x1f0] sm:$0xff]
  %v302 = vld [vmem:[%s4 + $0x1f8] sm:$0xff]
  %v303 = vld [vmem:[%s4 + $0x200] sm:$0xff]
  %v304 = vld [vmem:[%s4 + $0x208] sm:$0xff]
  %v305 = vld [vmem:[%s4 + $0x210] sm:$0xff]
  %v306 = vld [vmem:[%s4 + $0x218] sm:$0xff]
  %v307 = vld [vmem:[%s4 + $0x220] sm:$0xff]
  %v308 = vld [vmem:[%s4 + $0x228] sm:$0xff]
  %v309 = vld [vmem:[%s4 + $0x230] sm:$0xff]
  %v310 = vld [vmem:[%s4 + $0x238] sm:$0xff]
  %v311 = vld [vmem:[%s4 + $0x240] sm:$0xff]
  %v312 = vld [vmem:[%s4 + $0x248] sm:$0xff]
  %v313 = vld [vmem:[%s4 + $0x250] sm:$0xff]
  %v314 = vld [vmem:[%s4 + $0x258] sm:$0xff]
  %v315 = vld [vmem:[%s4 + $0x260] sm:$0xff]
  %v316 = vld [vmem:[%s4 + $0x268] sm:$0xff]
  %v317 = vld [vmem:[%s4 + $0x270] sm:$0xff]
  %v318 = vld [vmem:[%s4 + $0x278] sm:$0xff]
  %v319 = vld [vmem:[%s4 + $0x280] sm:$0xff]
  %v320 = vld [vmem:[%s4 + $0x288] sm:$0xff]
  %v321 = vld [vmem:[%s4 + $0x290] sm:$0xff]
  %v322 = vld [vmem:[%s4 + $0x298] sm:$0xff]
  %v323 = vld [vmem:[%s4 + $0x2a0] sm:$0xff]
  %v324 = vld [vmem:[%s4 + $0x2a8] sm:$0xff]
  %v325 = vld [vmem:[%s4 + $0x2b0] sm:$0xff]
  %v326 = vld [vmem:[%s4 + $0x2b8] sm:$0xff]
  %v327 = vld [vmem:[%s4 + $0x2c0] sm:$0xff]
  %v328 = vld [vmem:[%s4 + $0x2c8] sm:$0xff]
  %v329 = vld [vmem:[%s4 + $0x2d0] sm:$0xff]
  %v330 = vld [vmem:[%s4 + $0x2d8] sm:$0xff]
  %v331 = vld [vmem:[%s4 + $0x2e0] sm:$0xff]
  %v332 = vld [vmem:[%s4 + $0x2e8] sm:$0xff]
  %v333 = vld [vmem:[%s4 + $0x2f0] sm:$0xff]
  %v334 = vld [vmem:[%s4 + $0x2f8] sm:$0xff]
  %v335 = vld [vmem:[%s4 + $0x300] sm:$0xff]
  %v336 = vld [vmem:[%s4 + $0x308] sm:$0xff]
  %v337 = vld [vmem:[%s4 + $0x310] sm:$0xff]
  %v338 = vld [vmem:[%s4 + $0x318] sm:$0xff]
  %v339 = vld [vmem:[%s4 + $0x320] sm:$0xff]
  %v340 = vld [vmem:[%s4 + $0x328] sm:$0xff]
  %v341 = vld [vmem:[%s4 + $0x330] sm:$0xff]
  %v342 = vld [vmem:[%s4 + $0x338] sm:$0xff]
  %v343 = vld [vmem:[%s4 + $0x340] sm:$0xff]
  %v344 = vld [vmem:[%s4 + $0x348] sm:$0xff]
  %v345 = vld [vmem:[%s4 + $0x350] sm:$0xff]
  %v346 = vld [vmem:[%s4 + $0x358] sm:$0xff]
  %v347 = vld [vmem:[%s4 + $0x360] sm:$0xff]
  %v348 = vld [vmem:[%s4 + $0x368] sm:$0xff]
  %v349 = vld [vmem:[%s4 + $0x370] sm:$0xff]
  %v350 = vld [vmem:[%s4 + $0x378] sm:$0xff]
  %v351 = vld [vmem:[%s4 + $0x380] sm:$0xff]
  %v352 = vld [vmem:[%s4 + $0x388] sm:$0xff]
  %v353 = vld [vmem:[%s4 + $0x390] sm:$0xff]
  %v354 = vld [vmem:[%s4 + $0x398] sm:$0xff]
  %v355 = vld [vmem:[%s4 + $0x3a0] sm:$0xff]
  %v356 = vld [vmem:[%s4 + $0x3a8] sm:$0xff]
  %v357 = vld [vmem:[%s4 + $0x3b0] sm:$0xff]
  %v358 = vld [vmem:[%s4 + $0x3b8] sm:$0xff]
  %v359 = vld [vmem:[%s4 + $0x3c0] sm:$0xff]
  %v360 = vld [vmem:[%s4 + $0x3c8] sm:$0xff]
  %v361 = vld [vmem:[%s4 + $0x3d0] sm:$0xff]
  %v362 = vld [vmem:[%s4 + $0x3d8] sm:$0xff]
  %v363 = vld [vmem:[%s4 + $0x3e0] sm:$0xff]
  %v364 = vld [vmem:[%s4 + $0x3e8] sm:$0xff]
  %v365 = vld [vmem:[%s4 + $0x3f0] sm:$0xff]
  %v366 = vld [vmem:[%s4 + $0x3f8] sm:$0xff]
  %v367 = vld [vmem:[%s4 + $0x400] sm:$0xff]
  %v368 = vld [vmem:[%s4 + $0x408] sm:$0xff]
  %v369 = vld [vmem:[%s4 + $0x410] sm:$0xff]
  %v370 = vld [vmem:[%s4 + $0x418] sm:$0xff]
  %v371 = vld [vmem:[%s4 + $0x420] sm:$0xff]
  %v372 = vld [vmem:[%s4 + $0x428] sm:$0xff]
  %v373 = vld [vmem:[%s4 + $0x430] sm:$0xff]
  %v374 = vld [vmem:[%s4 + $0x438] sm:$0xff]
  %v375 = vld [vmem:[%s4 + $0x440] sm:$0xff]
  %v376 = vld [vmem:[%s4 + $0x448] sm:$0xff]
  %v377 = vld [vmem:[%s4 + $0x450] sm:$0xff]
  %v378 = vld [vmem:[%s4 + $0x458] sm:$0xff]
  %v379 = vld [vmem:[%s4 + $0x460] sm:$0xff]
  %v380 = vld [vmem:[%s4 + $0x468] sm:$0xff]
  %v381 = vld [vmem:[%s4 + $0x470] sm:$0xff]
  %v382 = vld [vmem:[%s4 + $0x478] sm:$0xff]
  %v383 = vld [vmem:[%s4 + $0x480] sm:$0xff]
  %v384 = vld [vmem:[%s4 + $0x488] sm:$0xff]
  %v385 = vld [vmem:[%s4 + $0x490] sm:$0xff]
  %v386 = vld [vmem:[%s4 + $0x498] sm:$0xff]
  %v387 = vld [vmem:[%s4 + $0x4a0] sm:$0xff]
  %v388 = vld [vmem:[%s4 + $0x4a8] sm:$0xff]
  %v389 = vld [vmem:[%s4 + $0x4b0] sm:$0xff]
  %v390 = vld [vmem:[%s4 + $0x4b8] sm:$0xff]
  %v391 = vld [vmem:[%s4 + $0x4c0] sm:$0xff]
  %v392 = vld [vmem:[%s4 + $0x4c8] sm:$0xff]
  %v393 = vld [vmem:[%s4 + $0x4d0] sm:$0xff]
  %v394 = vld [vmem:[%s4 + $0x4d8] sm:$0xff]
  %v395 = vld [vmem:[%s4 + $0x4e0] sm:$0xff]
  %v396 = vld [vmem:[%s4 + $0x4e8] sm:$0xff]
  %v397 = vld [vmem:[%s4 + $0x4f0] sm:$0xff]
  %v398 = vld [vmem:[%s4 + $0x4f8] sm:$0xff]
  %v399 = vld [vmem:[%s4 + $0x500] sm:$0xff]
  %v400 = vld [vmem:[%s4 + $0x508] sm:$0xff]
  %v401 = vld [vmem:[%s4 + $0x510] sm:$0xff]
  %v402 = vld [vmem:[%s4 + $0x518] sm:$0xff]
  %v403 = vld [vmem:[%s4 + $0x520] sm:$0xff]
  %v404 = vld [vmem:[%s4 + $0x528] sm:$0xff]
  %v405 = vld [vmem:[%s4 + $0x530] sm:$0xff]
  %v406 = vld [vmem:[%s4 + $0x538] sm:$0xff]
  %v407 = vld [vmem:[%s4 + $0x540] sm:$0xff]
  %v408 = vld [vmem:[%s4 + $0x548] sm:$0xff]
  %v409 = vld [vmem:[%s4 + $0x550] sm:$0xff]
  %v410 = vld [vmem:[%s4 + $0x558] sm:$0xff]
  %v411 = vld [vmem:[%s4 + $0x560] sm:$0xff]
  %v412 = vld [vmem:[%s4 + $0x568] sm:$0xff]
  %v413 = vld [vmem:[%s4 + $0x570] sm:$0xff]
  %v414 = vld [vmem:[%s4 + $0x578] sm:$0xff]
  %v415 = vld [vmem:[%s4 + $0x580] sm:$0xff]
  %v416 = vld [vmem:[%s4 + $0x588] sm:$0xff]
  %v417 = vld [vmem:[%s4 + $0x590] sm:$0xff]
  %v418 = vld [vmem:[%s4 + $0x598] sm:$0xff]
  %v419 = vld [vmem:[%s4 + $0x5a0] sm:$0xff]
  %v420 = vld [vmem:[%s4 + $0x5a8] sm:$0xff]
  %v421 = vld [vmem:[%s4 + $0x5b0] sm:$0xff]
  %v422 = vld [vmem:[%s4 + $0x5b8] sm:$0xff]
  %v423 = vld [vmem:[%s4 + $0x5c0] sm:$0xff]
  %v424 = vld [vmem:[%s4 + $0x5c8] sm:$0xff]
  %v425 = vld [vmem:[%s4 + $0x5d0] sm:$0xff]
  %v426 = vld [vmem:[%s4 + $0x5d8] sm:$0xff]
  %v427 = vld [vmem:[%s4 + $0x5e0] sm:$0xff]
  %v428 = vld [vmem:[%s4 + $0x5e8] sm:$0xff]
  %v429 = vld [vmem:[%s4 + $0x5f0] sm:$0xff]
  %v430 = vld [vmem:[%s4 + $0x5f8] sm:$0xff]
  %v431 = vld [vmem:[%s4 + $0x600] sm:$0xff]
  %v432 = vld [vmem:[%s4 + $0x608] sm:$0xff]
  %v433 = vld [vmem:[%s4 + $0x610] sm:$0xff]
  %v434 = vld [vmem:[%s4 + $0x618] sm:$0xff]
  %v435 = vld [vmem:[%s4 + $0x620] sm:$0xff]
  %v436 = vld [vmem:[%s4 + $0x628] sm:$0xff]
  %v437 = vld [vmem:[%s4 + $0x630] sm:$0xff]
  %v438 = vld [vmem:[%s4 + $0x638] sm:$0xff]
  %v439 = vld [vmem:[%s4 + $0x640] sm:$0xff]
  %v440 = vld [vmem:[%s4 + $0x648] sm:$0xff]
  %v441 = vld [vmem:[%s4 + $0x650] sm:$0xff]
  %v442 = vld [vmem:[%s4 + $0x658] sm:$0xff]
  %v443 = vld [vmem:[%s4 + $0x660] sm:$0xff]
  %v444 = vld [vmem:[%s4 + $0x668] sm:$0xff]
  %v445 = vld [vmem:[%s4 + $0x670] sm:$0xff]
  %v446 = vld [vmem:[%s4 + $0x678] sm:$0xff]
  %v447 = vld [vmem:[%s4 + $0x680] sm:$0xff]
  %v448 = vld [vmem:[%s4 + $0x688] sm:$0xff]
  %v449 = vld [vmem:[%s4 + $0x690] sm:$0xff]
  %v450 = vld [vmem:[%s4 + $0x698] sm:$0xff]
  %v451 = vld [vmem:[%s4 + $0x6a0] sm:$0xff]
  %v452 = vld [vmem:[%s4 + $0x6a8] sm:$0xff]
  %v453 = vld [vmem:[%s4 + $0x6b0] sm:$0xff]
  %v454 = vld [vmem:[%s4 + $0x6b8] sm:$0xff]
  %v455 = vld [vmem:[%s4 + $0x6c0] sm:$0xff]
  %v456 = vld [vmem:[%s4 + $0x6c8] sm:$0xff]
  %v457 = vld [vmem:[%s4 + $0x6d0] sm:$0xff]
  %v458 = vld [vmem:[%s4 + $0x6d8] sm:$0xff]
  %v459 = vld [vmem:[%s4 + $0x6e0] sm:$0xff]
  %v460 = vld [vmem:[%s4 + $0x6e8] sm:$0xff]
  %v461 = vld [vmem:[%s4 + $0x6f0] sm:$0xff]
  %v462 = vld [vmem:[%s4 + $0x6f8] sm:$0xff]
  %v463 = vld [vmem:[%s4 + $0x700] sm:$0xff]
  %v464 = vld [vmem:[%s4 + $0x708] sm:$0xff]
  %v465 = vld [vmem:[%s4 + $0x710] sm:$0xff]
  %v466 = vld [vmem:[%s4 + $0x718] sm:$0xff]
  %v467 = vld [vmem:[%s4 + $0x720] sm:$0xff]
  %v468 = vld [vmem:[%s4 + $0x728] sm:$0xff]
  %v469 = vld [vmem:[%s4 + $0x730] sm:$0xff]
  %v470 = vld [vmem:[%s4 + $0x738] sm:$0xff]
  %v471 = vld [vmem:[%s4 + $0x740] sm:$0xff]
  %v472 = vld [vmem:[%s4 + $0x748] sm:$0xff]
  %v473 = vld [vmem:[%s4 + $0x750] sm:$0xff]
  %v474 = vld [vmem:[%s4 + $0x758] sm:$0xff]
  %v475 = vld [vmem:[%s4 + $0x760] sm:$0xff]
  %v476 = vld [vmem:[%s4 + $0x768] sm:$0xff]
  %v477 = vld [vmem:[%s4 + $0x770] sm:$0xff]
  %v478 = vld [vmem:[%s4 + $0x778] sm:$0xff]
  %v479 = vld [vmem:[%s4 + $0x780] sm:$0xff]
  %v480 = vld [vmem:[%s4 + $0x788] sm:$0xff]
  %v481 = vld [vmem:[%s4 + $0x790] sm:$0xff]
  %v482 = vld [vmem:[%s4 + $0x798] sm:$0xff]
  %v483 = vld [vmem:[%s4 + $0x7a0] sm:$0xff]
  %v484 = vld [vmem:[%s4 + $0x7a8] sm:$0xff]
  %v485 = vld [vmem:[%s4 + $0x7b0] sm:$0xff]
  %v486 = vld [vmem:[%s4 + $0x7b8] sm:$0xff]
  %v487 = vld [vmem:[%s4 + $0x7c0] sm:$0xff]
  %v488 = vld [vmem:[%s4 + $0x7c8] sm:$0xff]
  %v489 = vld [vmem:[%s4 + $0x7d0] sm:$0xff]
  %v490 = vld [vmem:[%s4 + $0x7d8] sm:$0xff]
  %v491 = vld [vmem:[%s4 + $0x7e0] sm:$0xff]
  %v492 = vld [vmem:[%s4 + $0x7e8] sm:$0xff]
  %v493 = vld [vmem:[%s4 + $0x7f0] sm:$0xff]
  %v494 = vld [vmem:[%s4 + $0x7f8] sm:$0xff]
  %v751 = vunpack.c.l.b16 %v239
  %v752 = vunpack.c.h.b16 %v239
  %v753 = vunpack.c.l.b16 %v240
  %v754 = vunpack.c.h.b16 %v240
  %v755 = vunpack.c.l.b16 %v241
  %v756 = vunpack.c.h.b16 %v241
  %v757 = vunpack.c.l.b16 %v242
  %v758 = vunpack.c.h.b16 %v242
  %v759 = vunpack.c.l.b16 %v243
  %v760 = vunpack.c.h.b16 %v243
  %v761 = vunpack.c.l.b16 %v244
  %v762 = vunpack.c.h.b16 %v244
  %v763 = vunpack.c.l.b16 %v245
  %v764 = vunpack.c.h.b16 %v245
  %v765 = vunpack.c.l.b16 %v246
  %v766 = vunpack.c.h.b16 %v246
  %v767 = vunpack.c.l.b16 %v247
  %v768 = vunpack.c.h.b16 %v247
  %v769 = vunpack.c.l.b16 %v248
  %v770 = vunpack.c.h.b16 %v248
  %v771 = vunpack.c.l.b16 %v249
  %v772 = vunpack.c.h.b16 %v249
  %v773 = vunpack.c.l.b16 %v250
  %v774 = vunpack.c.h.b16 %v250
  %v775 = vunpack.c.l.b16 %v251
  %v776 = vunpack.c.h.b16 %v251
  %v777 = vunpack.c.l.b16 %v252
  %v778 = vunpack.c.h.b16 %v252
  %v779 = vunpack.c.l.b16 %v253
  %v780 = vunpack.c.h.b16 %v253
  %v781 = vunpack.c.l.b16 %v254
  %v782 = vunpack.c.h.b16 %v254
  %v783 = vunpack.c.l.b16 %v255
  %v784 = vunpack.c.h.b16 %v255
  %v785 = vunpack.c.l.b16 %v256
  %v786 = vunpack.c.h.b16 %v256
  %v787 = vunpack.c.l.b16 %v257
  %v788 = vunpack.c.h.b16 %v257
  %v789 = vunpack.c.l.b16 %v258
  %v790 = vunpack.c.h.b16 %v258
  %v791 = vunpack.c.l.b16 %v259
  %v792 = vunpack.c.h.b16 %v259
  %v793 = vunpack.c.l.b16 %v260
  %v794 = vunpack.c.h.b16 %v260
  %v795 = vunpack.c.l.b16 %v261
  %v796 = vunpack.c.h.b16 %v261
  %v797 = vunpack.c.l.b16 %v262
  %v798 = vunpack.c.h.b16 %v262
  %v799 = vunpack.c.l.b16 %v263
  %v800 = vunpack.c.h.b16 %v263
  %v801 = vunpack.c.l.b16 %v264
  %v802 = vunpack.c.h.b16 %v264
  %v803 = vunpack.c.l.b16 %v265
  %v804 = vunpack.c.h.b16 %v265
  %v805 = vunpack.c.l.b16 %v266
  %v806 = vunpack.c.h.b16 %v266
  %v807 = vunpack.c.l.b16 %v267
  %v808 = vunpack.c.h.b16 %v267
  %v809 = vunpack.c.l.b16 %v268
  %v810 = vunpack.c.h.b16 %v268
  %v811 = vunpack.c.l.b16 %v269
  %v812 = vunpack.c.h.b16 %v269
  %v813 = vunpack.c.l.b16 %v270
  %v814 = vunpack.c.h.b16 %v270
  %v815 = vunpack.c.l.b16 %v271
  %v816 = vunpack.c.h.b16 %v271
  %v817 = vunpack.c.l.b16 %v272
  %v818 = vunpack.c.h.b16 %v272
  %v819 = vunpack.c.l.b16 %v273
  %v820 = vunpack.c.h.b16 %v273
  %v821 = vunpack.c.l.b16 %v274
  %v822 = vunpack.c.h.b16 %v274
  %v823 = vunpack.c.l.b16 %v275
  %v824 = vunpack.c.h.b16 %v275
  %v825 = vunpack.c.l.b16 %v276
  %v826 = vunpack.c.h.b16 %v276
  %v827 = vunpack.c.l.b16 %v277
  %v828 = vunpack.c.h.b16 %v277
  %v829 = vunpack.c.l.b16 %v278
  %v830 = vunpack.c.h.b16 %v278
  %v831 = vunpack.c.l.b16 %v279
  %v832 = vunpack.c.h.b16 %v279
  %v833 = vunpack.c.l.b16 %v280
  %v834 = vunpack.c.h.b16 %v280
  %v835 = vunpack.c.l.b16 %v281
  %v836 = vunpack.c.h.b16 %v281
  %v837 = vunpack.c.l.b16 %v282
  %v838 = vunpack.c.h.b16 %v282
  %v839 = vunpack.c.l.b16 %v283
  %v840 = vunpack.c.h.b16 %v283
  %v841 = vunpack.c.l.b16 %v284
  %v842 = vunpack.c.h.b16 %v284
  %v843 = vunpack.c.l.b16 %v285
  %v844 = vunpack.c.h.b16 %v285
  %v845 = vunpack.c.l.b16 %v286
  %v846 = vunpack.c.h.b16 %v286
  %v847 = vunpack.c.l.b16 %v287
  %v848 = vunpack.c.h.b16 %v287
  %v849 = vunpack.c.l.b16 %v288
  %v850 = vunpack.c.h.b16 %v288
  %v851 = vunpack.c.l.b16 %v289
  %v852 = vunpack.c.h.b16 %v289
  %v853 = vunpack.c.l.b16 %v290
  %v854 = vunpack.c.h.b16 %v290
  %v855 = vunpack.c.l.b16 %v291
  %v856 = vunpack.c.h.b16 %v291
  %v857 = vunpack.c.l.b16 %v292
  %v858 = vunpack.c.h.b16 %v292
  %v859 = vunpack.c.l.b16 %v293
  %v860 = vunpack.c.h.b16 %v293
  %v861 = vunpack.c.l.b16 %v294
  %v862 = vunpack.c.h.b16 %v294
  %v863 = vunpack.c.l.b16 %v295
  %v864 = vunpack.c.h.b16 %v295
  %v865 = vunpack.c.l.b16 %v296
  %v866 = vunpack.c.h.b16 %v296
  %v867 = vunpack.c.l.b16 %v297
  %v868 = vunpack.c.h.b16 %v297
  %v869 = vunpack.c.l.b16 %v298
  %v870 = vunpack.c.h.b16 %v298
  %v871 = vunpack.c.l.b16 %v299
  %v872 = vunpack.c.h.b16 %v299
  %v873 = vunpack.c.l.b16 %v300
  %v874 = vunpack.c.h.b16 %v300
  %v875 = vunpack.c.l.b16 %v301
  %v876 = vunpack.c.h.b16 %v301
  %v877 = vunpack.c.l.b16 %v302
  %v878 = vunpack.c.h.b16 %v302
  %v879 = vunpack.c.l.b16 %v303
  %v880 = vunpack.c.h.b16 %v303
  %v881 = vunpack.c.l.b16 %v304
  %v882 = vunpack.c.h.b16 %v304
  %v883 = vunpack.c.l.b16 %v305
  %v884 = vunpack.c.h.b16 %v305
  %v885 = vunpack.c.l.b16 %v306
  %v886 = vunpack.c.h.b16 %v306
  %v887 = vunpack.c.l.b16 %v307
  %v888 = vunpack.c.h.b16 %v307
  %v889 = vunpack.c.l.b16 %v308
  %v890 = vunpack.c.h.b16 %v308
  %v891 = vunpack.c.l.b16 %v309
  %v892 = vunpack.c.h.b16 %v309
  %v893 = vunpack.c.l.b16 %v310
  %v894 = vunpack.c.h.b16 %v310
  %v895 = vunpack.c.l.b16 %v311
  %v896 = vunpack.c.h.b16 %v311
  %v897 = vunpack.c.l.b16 %v312
  %v898 = vunpack.c.h.b16 %v312
  %v899 = vunpack.c.l.b16 %v313
  %v900 = vunpack.c.h.b16 %v313
  %v901 = vunpack.c.l.b16 %v314
  %v902 = vunpack.c.h.b16 %v314
  %v903 = vunpack.c.l.b16 %v315
  %v904 = vunpack.c.h.b16 %v315
  %v905 = vunpack.c.l.b16 %v316
  %v906 = vunpack.c.h.b16 %v316
  %v907 = vunpack.c.l.b16 %v317
  %v908 = vunpack.c.h.b16 %v317
  %v909 = vunpack.c.l.b16 %v318
  %v910 = vunpack.c.h.b16 %v318
  %v911 = vunpack.c.l.b16 %v319
  %v912 = vunpack.c.h.b16 %v319
  %v913 = vunpack.c.l.b16 %v320
  %v914 = vunpack.c.h.b16 %v320
  %v915 = vunpack.c.l.b16 %v321
  %v916 = vunpack.c.h.b16 %v321
  %v917 = vunpack.c.l.b16 %v322
  %v918 = vunpack.c.h.b16 %v322
  %v919 = vunpack.c.l.b16 %v323
  %v920 = vunpack.c.h.b16 %v323
  %v921 = vunpack.c.l.b16 %v324
  %v922 = vunpack.c.h.b16 %v324
  %v923 = vunpack.c.l.b16 %v325
  %v924 = vunpack.c.h.b16 %v325
  %v925 = vunpack.c.l.b16 %v326
  %v926 = vunpack.c.h.b16 %v326
  %v927 = vunpack.c.l.b16 %v327
  %v928 = vunpack.c.h.b16 %v327
  %v929 = vunpack.c.l.b16 %v328
  %v930 = vunpack.c.h.b16 %v328
  %v931 = vunpack.c.l.b16 %v329
  %v932 = vunpack.c.h.b16 %v329
  %v933 = vunpack.c.l.b16 %v330
  %v934 = vunpack.c.h.b16 %v330
  %v935 = vunpack.c.l.b16 %v331
  %v936 = vunpack.c.h.b16 %v331
  %v937 = vunpack.c.l.b16 %v332
  %v938 = vunpack.c.h.b16 %v332
  %v939 = vunpack.c.l.b16 %v333
  %v940 = vunpack.c.h.b16 %v333
  %v941 = vunpack.c.l.b16 %v334
  %v942 = vunpack.c.h.b16 %v334
  %v943 = vunpack.c.l.b16 %v335
  %v944 = vunpack.c.h.b16 %v335
  %v945 = vunpack.c.l.b16 %v336
  %v946 = vunpack.c.h.b16 %v336
  %v947 = vunpack.c.l.b16 %v337
  %v948 = vunpack.c.h.b16 %v337
  %v949 = vunpack.c.l.b16 %v338
  %v950 = vunpack.c.h.b16 %v338
  %v951 = vunpack.c.l.b16 %v339
  %v952 = vunpack.c.h.b16 %v339
  %v953 = vunpack.c.l.b16 %v340
  %v954 = vunpack.c.h.b16 %v340
  %v955 = vunpack.c.l.b16 %v341
  %v956 = vunpack.c.h.b16 %v341
  %v957 = vunpack.c.l.b16 %v342
  %v958 = vunpack.c.h.b16 %v342
  %v959 = vunpack.c.l.b16 %v343
  %v960 = vunpack.c.h.b16 %v343
  %v961 = vunpack.c.l.b16 %v344
  %v962 = vunpack.c.h.b16 %v344
  %v963 = vunpack.c.l.b16 %v345
  %v964 = vunpack.c.h.b16 %v345
  %v965 = vunpack.c.l.b16 %v346
  %v966 = vunpack.c.h.b16 %v346
  %v967 = vunpack.c.l.b16 %v347
  %v968 = vunpack.c.h.b16 %v347
  %v969 = vunpack.c.l.b16 %v348
  %v970 = vunpack.c.h.b16 %v348
  %v971 = vunpack.c.l.b16 %v349
  %v972 = vunpack.c.h.b16 %v349
  %v973 = vunpack.c.l.b16 %v350
  %v974 = vunpack.c.h.b16 %v350
  %v975 = vunpack.c.l.b16 %v351
  %v976 = vunpack.c.h.b16 %v351
  %v977 = vunpack.c.l.b16 %v352
  %v978 = vunpack.c.h.b16 %v352
  %v979 = vunpack.c.l.b16 %v353
  %v980 = vunpack.c.h.b16 %v353
  %v981 = vunpack.c.l.b16 %v354
  %v982 = vunpack.c.h.b16 %v354
  %v983 = vunpack.c.l.b16 %v355
  %v984 = vunpack.c.h.b16 %v355
  %v985 = vunpack.c.l.b16 %v356
  %v986 = vunpack.c.h.b16 %v356
  %v987 = vunpack.c.l.b16 %v357
  %v988 = vunpack.c.h.b16 %v357
  %v989 = vunpack.c.l.b16 %v358
  %v990 = vunpack.c.h.b16 %v358
  %v991 = vunpack.c.l.b16 %v359
  %v992 = vunpack.c.h.b16 %v359
  %v993 = vunpack.c.l.b16 %v360
  %v994 = vunpack.c.h.b16 %v360
  %v995 = vunpack.c.l.b16 %v361
  %v996 = vunpack.c.h.b16 %v361
  %v997 = vunpack.c.l.b16 %v362
  %v998 = vunpack.c.h.b16 %v362
  %v999 = vunpack.c.l.b16 %v363
  %v1000 = vunpack.c.h.b16 %v363
  %v1001 = vunpack.c.l.b16 %v364
  %v1002 = vunpack.c.h.b16 %v364
  %v1003 = vunpack.c.l.b16 %v365
  %v1004 = vunpack.c.h.b16 %v365
  %v1005 = vunpack.c.l.b16 %v366
  %v1006 = vunpack.c.h.b16 %v366
  %v1007 = vunpack.c.l.b16 %v367
  %v1008 = vunpack.c.h.b16 %v367
  %v1009 = vunpack.c.l.b16 %v368
  %v1010 = vunpack.c.h.b16 %v368
  %v1011 = vunpack.c.l.b16 %v369
  %v1012 = vunpack.c.h.b16 %v369
  %v1013 = vunpack.c.l.b16 %v370
  %v1014 = vunpack.c.h.b16 %v370
  %v1015 = vunpack.c.l.b16 %v371
  %v1016 = vunpack.c.h.b16 %v371
  %v1017 = vunpack.c.l.b16 %v372
  %v1018 = vunpack.c.h.b16 %v372
  %v1019 = vunpack.c.l.b16 %v373
  %v1020 = vunpack.c.h.b16 %v373
  %v1021 = vunpack.c.l.b16 %v374
  %v1022 = vunpack.c.h.b16 %v374
  %v1023 = vunpack.c.l.b16 %v375
  %v1024 = vunpack.c.h.b16 %v375
  %v1025 = vunpack.c.l.b16 %v376
  %v1026 = vunpack.c.h.b16 %v376
  %v1027 = vunpack.c.l.b16 %v377
  %v1028 = vunpack.c.h.b16 %v377
  %v1029 = vunpack.c.l.b16 %v378
  %v1030 = vunpack.c.h.b16 %v378
  %v1031 = vunpack.c.l.b16 %v379
  %v1032 = vunpack.c.h.b16 %v379
  %v1033 = vunpack.c.l.b16 %v380
  %v1034 = vunpack.c.h.b16 %v380
  %v1035 = vunpack.c.l.b16 %v381
  %v1036 = vunpack.c.h.b16 %v381
  %v1037 = vunpack.c.l.b16 %v382
  %v1038 = vunpack.c.h.b16 %v382
  %v1039 = vunpack.c.l.b16 %v383
  %v1040 = vunpack.c.h.b16 %v383
  %v1041 = vunpack.c.l.b16 %v384
  %v1042 = vunpack.c.h.b16 %v384
  %v1043 = vunpack.c.l.b16 %v385
  %v1044 = vunpack.c.h.b16 %v385
  %v1045 = vunpack.c.l.b16 %v386
  %v1046 = vunpack.c.h.b16 %v386
  %v1047 = vunpack.c.l.b16 %v387
  %v1048 = vunpack.c.h.b16 %v387
  %v1049 = vunpack.c.l.b16 %v388
  %v1050 = vunpack.c.h.b16 %v388
  %v1051 = vunpack.c.l.b16 %v389
  %v1052 = vunpack.c.h.b16 %v389
  %v1053 = vunpack.c.l.b16 %v390
  %v1054 = vunpack.c.h.b16 %v390
  %v1055 = vunpack.c.l.b16 %v391
  %v1056 = vunpack.c.h.b16 %v391
  %v1057 = vunpack.c.l.b16 %v392
  %v1058 = vunpack.c.h.b16 %v392
  %v1059 = vunpack.c.l.b16 %v393
  %v1060 = vunpack.c.h.b16 %v393
  %v1061 = vunpack.c.l.b16 %v394
  %v1062 = vunpack.c.h.b16 %v394
  %v1063 = vunpack.c.l.b16 %v395
  %v1064 = vunpack.c.h.b16 %v395
  %v1065 = vunpack.c.l.b16 %v396
  %v1066 = vunpack.c.h.b16 %v396
  %v1067 = vunpack.c.l.b16 %v397
  %v1068 = vunpack.c.h.b16 %v397
  %v1069 = vunpack.c.l.b16 %v398
  %v1070 = vunpack.c.h.b16 %v398
  %v1071 = vunpack.c.l.b16 %v399
  %v1072 = vunpack.c.h.b16 %v399
  %v1073 = vunpack.c.l.b16 %v400
  %v1074 = vunpack.c.h.b16 %v400
  %v1075 = vunpack.c.l.b16 %v401
  %v1076 = vunpack.c.h.b16 %v401
  %v1077 = vunpack.c.l.b16 %v402
  %v1078 = vunpack.c.h.b16 %v402
  %v1079 = vunpack.c.l.b16 %v403
  %v1080 = vunpack.c.h.b16 %v403
  %v1081 = vunpack.c.l.b16 %v404
  %v1082 = vunpack.c.h.b16 %v404
  %v1083 = vunpack.c.l.b16 %v405
  %v1084 = vunpack.c.h.b16 %v405
  %v1085 = vunpack.c.l.b16 %v406
  %v1086 = vunpack.c.h.b16 %v406
  %v1087 = vunpack.c.l.b16 %v407
  %v1088 = vunpack.c.h.b16 %v407
  %v1089 = vunpack.c.l.b16 %v408
  %v1090 = vunpack.c.h.b16 %v408
  %v1091 = vunpack.c.l.b16 %v409
  %v1092 = vunpack.c.h.b16 %v409
  %v1093 = vunpack.c.l.b16 %v410
  %v1094 = vunpack.c.h.b16 %v410
  %v1095 = vunpack.c.l.b16 %v411
  %v1096 = vunpack.c.h.b16 %v411
  %v1097 = vunpack.c.l.b16 %v412
  %v1098 = vunpack.c.h.b16 %v412
  %v1099 = vunpack.c.l.b16 %v413
  %v1100 = vunpack.c.h.b16 %v413
  %v1101 = vunpack.c.l.b16 %v414
  %v1102 = vunpack.c.h.b16 %v414
  %v1103 = vunpack.c.l.b16 %v415
  %v1104 = vunpack.c.h.b16 %v415
  %v1105 = vunpack.c.l.b16 %v416
  %v1106 = vunpack.c.h.b16 %v416
  %v1107 = vunpack.c.l.b16 %v417
  %v1108 = vunpack.c.h.b16 %v417
  %v1109 = vunpack.c.l.b16 %v418
  %v1110 = vunpack.c.h.b16 %v418
  %v1111 = vunpack.c.l.b16 %v419
  %v1112 = vunpack.c.h.b16 %v419
  %v1113 = vunpack.c.l.b16 %v420
  %v1114 = vunpack.c.h.b16 %v420
  %v1115 = vunpack.c.l.b16 %v421
  %v1116 = vunpack.c.h.b16 %v421
  %v1117 = vunpack.c.l.b16 %v422
  %v1118 = vunpack.c.h.b16 %v422
  %v1119 = vunpack.c.l.b16 %v423
  %v1120 = vunpack.c.h.b16 %v423
  %v1121 = vunpack.c.l.b16 %v424
  %v1122 = vunpack.c.h.b16 %v424
  %v1123 = vunpack.c.l.b16 %v425
  %v1124 = vunpack.c.h.b16 %v425
  %v1125 = vunpack.c.l.b16 %v426
  %v1126 = vunpack.c.h.b16 %v426
  %v1127 = vunpack.c.l.b16 %v427
  %v1128 = vunpack.c.h.b16 %v427
  %v1129 = vunpack.c.l.b16 %v428
  %v1130 = vunpack.c.h.b16 %v428
  %v1131 = vunpack.c.l.b16 %v429
  %v1132 = vunpack.c.h.b16 %v429
  %v1133 = vunpack.c.l.b16 %v430
  %v1134 = vunpack.c.h.b16 %v430
  %v1135 = vunpack.c.l.b16 %v431
  %v1136 = vunpack.c.h.b16 %v431
  %v1137 = vunpack.c.l.b16 %v432
  %v1138 = vunpack.c.h.b16 %v432
  %v1139 = vunpack.c.l.b16 %v433
  %v1140 = vunpack.c.h.b16 %v433
  %v1141 = vunpack.c.l.b16 %v434
  %v1142 = vunpack.c.h.b16 %v434
  %v1143 = vunpack.c.l.b16 %v435
  %v1144 = vunpack.c.h.b16 %v435
  %v1145 = vunpack.c.l.b16 %v436
  %v1146 = vunpack.c.h.b16 %v436
  %v1147 = vunpack.c.l.b16 %v437
  %v1148 = vunpack.c.h.b16 %v437
  %v1149 = vunpack.c.l.b16 %v438
  %v1150 = vunpack.c.h.b16 %v438
  %v1151 = vunpack.c.l.b16 %v439
  %v1152 = vunpack.c.h.b16 %v439
  %v1153 = vunpack.c.l.b16 %v440
  %v1154 = vunpack.c.h.b16 %v440
  %v1155 = vunpack.c.l.b16 %v441
  %v1156 = vunpack.c.h.b16 %v441
  %v1157 = vunpack.c.l.b16 %v442
  %v1158 = vunpack.c.h.b16 %v442
  %v1159 = vunpack.c.l.b16 %v443
  %v1160 = vunpack.c.h.b16 %v443
  %v1161 = vunpack.c.l.b16 %v444
  %v1162 = vunpack.c.h.b16 %v444
  %v1163 = vunpack.c.l.b16 %v445
  %v1164 = vunpack.c.h.b16 %v445
  %v1165 = vunpack.c.l.b16 %v446
  %v1166 = vunpack.c.h.b16 %v446
  %v1167 = vunpack.c.l.b16 %v447
  %v1168 = vunpack.c.h.b16 %v447
  %v1169 = vunpack.c.l.b16 %v448
  %v1170 = vunpack.c.h.b16 %v448
  %v1171 = vunpack.c.l.b16 %v449
  %v1172 = vunpack.c.h.b16 %v449
  %v1173 = vunpack.c.l.b16 %v450
  %v1174 = vunpack.c.h.b16 %v450
  %v1175 = vunpack.c.l.b16 %v451
  %v1176 = vunpack.c.h.b16 %v451
  %v1177 = vunpack.c.l.b16 %v452
  %v1178 = vunpack.c.h.b16 %v452
  %v1179 = vunpack.c.l.b16 %v453
  %v1180 = vunpack.c.h.b16 %v453
  %v1181 = vunpack.c.l.b16 %v454
  %v1182 = vunpack.c.h.b16 %v454
  %v1183 = vunpack.c.l.b16 %v455
  %v1184 = vunpack.c.h.b16 %v455
  %v1185 = vunpack.c.l.b16 %v456
  %v1186 = vunpack.c.h.b16 %v456
  %v1187 = vunpack.c.l.b16 %v457
  %v1188 = vunpack.c.h.b16 %v457
  %v1189 = vunpack.c.l.b16 %v458
  %v1190 = vunpack.c.h.b16 %v458
  %v1191 = vunpack.c.l.b16 %v459
  %v1192 = vunpack.c.h.b16 %v459
  %v1193 = vunpack.c.l.b16 %v460
  %v1194 = vunpack.c.h.b16 %v460
  %v1195 = vunpack.c.l.b16 %v461
  %v1196 = vunpack.c.h.b16 %v461
  %v1197 = vunpack.c.l.b16 %v462
  %v1198 = vunpack.c.h.b16 %v462
  %v1199 = vunpack.c.l.b16 %v463
  %v1200 = vunpack.c.h.b16 %v463
  %v1201 = vunpack.c.l.b16 %v464
  %v1202 = vunpack.c.h.b16 %v464
  %v1203 = vunpack.c.l.b16 %v465
  %v1204 = vunpack.c.h.b16 %v465
  %v1205 = vunpack.c.l.b16 %v466
  %v1206 = vunpack.c.h.b16 %v466
  %v1207 = vunpack.c.l.b16 %v467
  %v1208 = vunpack.c.h.b16 %v467
  %v1209 = vunpack.c.l.b16 %v468
  %v1210 = vunpack.c.h.b16 %v468
  %v1211 = vunpack.c.l.b16 %v469
  %v1212 = vunpack.c.h.b16 %v469
  %v1213 = vunpack.c.l.b16 %v470
  %v1214 = vunpack.c.h.b16 %v470
  %v1215 = vunpack.c.l.b16 %v471
  %v1216 = vunpack.c.h.b16 %v471
  %v1217 = vunpack.c.l.b16 %v472
  %v1218 = vunpack.c.h.b16 %v472
  %v1219 = vunpack.c.l.b16 %v473
  %v1220 = vunpack.c.h.b16 %v473
  %v1221 = vunpack.c.l.b16 %v474
  %v1222 = vunpack.c.h.b16 %v474
  %v1223 = vunpack.c.l.b16 %v475
  %v1224 = vunpack.c.h.b16 %v475
  %v1225 = vunpack.c.l.b16 %v476
  %v1226 = vunpack.c.h.b16 %v476
  %v1227 = vunpack.c.l.b16 %v477
  %v1228 = vunpack.c.h.b16 %v477
  %v1229 = vunpack.c.l.b16 %v478
  %v1230 = vunpack.c.h.b16 %v478
  %v1231 = vunpack.c.l.b16 %v479
  %v1232 = vunpack.c.h.b16 %v479
  %v1233 = vunpack.c.l.b16 %v480
  %v1234 = vunpack.c.h.b16 %v480
  %v1235 = vunpack.c.l.b16 %v481
  %v1236 = vunpack.c.h.b16 %v481
  %v1237 = vunpack.c.l.b16 %v482
  %v1238 = vunpack.c.h.b16 %v482
  %v1239 = vunpack.c.l.b16 %v483
  %v1240 = vunpack.c.h.b16 %v483
  %v1241 = vunpack.c.l.b16 %v484
  %v1242 = vunpack.c.h.b16 %v484
  %v1243 = vunpack.c.l.b16 %v485
  %v1244 = vunpack.c.h.b16 %v485
  %v1245 = vunpack.c.l.b16 %v486
  %v1246 = vunpack.c.h.b16 %v486
  %v1247 = vunpack.c.l.b16 %v487
  %v1248 = vunpack.c.h.b16 %v487
  %v1249 = vunpack.c.l.b16 %v488
  %v1250 = vunpack.c.h.b16 %v488
  %v1251 = vunpack.c.l.b16 %v489
  %v1252 = vunpack.c.h.b16 %v489
  %v1253 = vunpack.c.l.b16 %v490
  %v1254 = vunpack.c.h.b16 %v490
  %v1255 = vunpack.c.l.b16 %v491
  %v1256 = vunpack.c.h.b16 %v491
  %v1257 = vunpack.c.l.b16 %v492
  %v1258 = vunpack.c.h.b16 %v492
  %v1259 = vunpack.c.l.b16 %v493
  %v1260 = vunpack.c.h.b16 %v493
  %v1261 = vunpack.c.l.b16 %v494
  %v1262 = vunpack.c.h.b16 %v494
  %v1263 = vpack.c.b16 %v755, %v751
  %v1264 = vpack.c.b16 %v756, %v752
  %v1265 = vpack.c.b16 %v757, %v753
  %v1266 = vpack.c.b16 %v758, %v754
  %v1267 = vpack.c.b16 %v763, %v759
  %v1268 = vpack.c.b16 %v764, %v760
  %v1269 = vpack.c.b16 %v765, %v761
  %v1270 = vpack.c.b16 %v766, %v762
  %v1271 = vpack.c.b16 %v771, %v767
  %v1272 = vpack.c.b16 %v772, %v768
  %v1273 = vpack.c.b16 %v773, %v769
  %v1274 = vpack.c.b16 %v774, %v770
  %v1275 = vpack.c.b16 %v779, %v775
  %v1276 = vpack.c.b16 %v780, %v776
  %v1277 = vpack.c.b16 %v781, %v777
  %v1278 = vpack.c.b16 %v782, %v778
  %v1279 = vpack.c.b16 %v787, %v783
  %v1280 = vpack.c.b16 %v788, %v784
  %v1281 = vpack.c.b16 %v789, %v785
  %v1282 = vpack.c.b16 %v790, %v786
  %v1283 = vpack.c.b16 %v795, %v791
  %v1284 = vpack.c.b16 %v796, %v792
  %v1285 = vpack.c.b16 %v797, %v793
  %v1286 = vpack.c.b16 %v798, %v794
  %v1287 = vpack.c.b16 %v803, %v799
  %v1288 = vpack.c.b16 %v804, %v800
  %v1289 = vpack.c.b16 %v805, %v801
  %v1290 = vpack.c.b16 %v806, %v802
  %v1291 = vpack.c.b16 %v811, %v807
  %v1292 = vpack.c.b16 %v812, %v808
  %v1293 = vpack.c.b16 %v813, %v809
  %v1294 = vpack.c.b16 %v814, %v810
  %v1295 = vpack.c.b16 %v819, %v815
  %v1296 = vpack.c.b16 %v820, %v816
  %v1297 = vpack.c.b16 %v821, %v817
  %v1298 = vpack.c.b16 %v822, %v818
  %v1299 = vpack.c.b16 %v827, %v823
  %v1300 = vpack.c.b16 %v828, %v824
  %v1301 = vpack.c.b16 %v829, %v825
  %v1302 = vpack.c.b16 %v830, %v826
  %v1303 = vpack.c.b16 %v835, %v831
  %v1304 = vpack.c.b16 %v836, %v832
  %v1305 = vpack.c.b16 %v837, %v833
  %v1306 = vpack.c.b16 %v838, %v834
  %v1307 = vpack.c.b16 %v843, %v839
  %v1308 = vpack.c.b16 %v844, %v840
  %v1309 = vpack.c.b16 %v845, %v841
  %v1310 = vpack.c.b16 %v846, %v842
  %v1311 = vpack.c.b16 %v851, %v847
  %v1312 = vpack.c.b16 %v852, %v848
  %v1313 = vpack.c.b16 %v853, %v849
  %v1314 = vpack.c.b16 %v854, %v850
  %v1315 = vpack.c.b16 %v859, %v855
  %v1316 = vpack.c.b16 %v860, %v856
  %v1317 = vpack.c.b16 %v861, %v857
  %v1318 = vpack.c.b16 %v862, %v858
  %v1319 = vpack.c.b16 %v867, %v863
  %v1320 = vpack.c.b16 %v868, %v864
  %v1321 = vpack.c.b16 %v869, %v865
  %v1322 = vpack.c.b16 %v870, %v866
  %v1323 = vpack.c.b16 %v875, %v871
  %v1324 = vpack.c.b16 %v876, %v872
  %v1325 = vpack.c.b16 %v877, %v873
  %v1326 = vpack.c.b16 %v878, %v874
  %v1327 = vpack.c.b16 %v883, %v879
  %v1328 = vpack.c.b16 %v884, %v880
  %v1329 = vpack.c.b16 %v885, %v881
  %v1330 = vpack.c.b16 %v886, %v882
  %v1331 = vpack.c.b16 %v891, %v887
  %v1332 = vpack.c.b16 %v892, %v888
  %v1333 = vpack.c.b16 %v893, %v889
  %v1334 = vpack.c.b16 %v894, %v890
  %v1335 = vpack.c.b16 %v899, %v895
  %v1336 = vpack.c.b16 %v900, %v896
  %v1337 = vpack.c.b16 %v901, %v897
  %v1338 = vpack.c.b16 %v902, %v898
  %v1339 = vpack.c.b16 %v907, %v903
  %v1340 = vpack.c.b16 %v908, %v904
  %v1341 = vpack.c.b16 %v909, %v905
  %v1342 = vpack.c.b16 %v910, %v906
  %v1343 = vpack.c.b16 %v915, %v911
  %v1344 = vpack.c.b16 %v916, %v912
  %v1345 = vpack.c.b16 %v917, %v913
  %v1346 = vpack.c.b16 %v918, %v914
  %v1347 = vpack.c.b16 %v923, %v919
  %v1348 = vpack.c.b16 %v924, %v920
  %v1349 = vpack.c.b16 %v925, %v921
  %v1350 = vpack.c.b16 %v926, %v922
  %v1351 = vpack.c.b16 %v931, %v927
  %v1352 = vpack.c.b16 %v932, %v928
  %v1353 = vpack.c.b16 %v933, %v929
  %v1354 = vpack.c.b16 %v934, %v930
  %v1355 = vpack.c.b16 %v939, %v935
  %v1356 = vpack.c.b16 %v940, %v936
  %v1357 = vpack.c.b16 %v941, %v937
  %v1358 = vpack.c.b16 %v942, %v938
  %v1359 = vpack.c.b16 %v947, %v943
  %v1360 = vpack.c.b16 %v948, %v944
  %v1361 = vpack.c.b16 %v949, %v945
  %v1362 = vpack.c.b16 %v950, %v946
  %v1363 = vpack.c.b16 %v955, %v951
  %v1364 = vpack.c.b16 %v956, %v952
  %v1365 = vpack.c.b16 %v957, %v953
  %v1366 = vpack.c.b16 %v958, %v954
  %v1367 = vpack.c.b16 %v963, %v959
  %v1368 = vpack.c.b16 %v964, %v960
  %v1369 = vpack.c.b16 %v965, %v961
  %v1370 = vpack.c.b16 %v966, %v962
  %v1371 = vpack.c.b16 %v971, %v967
  %v1372 = vpack.c.b16 %v972, %v968
  %v1373 = vpack.c.b16 %v973, %v969
  %v1374 = vpack.c.b16 %v974, %v970
  %v1375 = vpack.c.b16 %v979, %v975
  %v1376 = vpack.c.b16 %v980, %v976
  %v1377 = vpack.c.b16 %v981, %v977
  %v1378 = vpack.c.b16 %v982, %v978
  %v1379 = vpack.c.b16 %v987, %v983
  %v1380 = vpack.c.b16 %v988, %v984
  %v1381 = vpack.c.b16 %v989, %v985
  %v1382 = vpack.c.b16 %v990, %v986
  %v1383 = vpack.c.b16 %v995, %v991
  %v1384 = vpack.c.b16 %v996, %v992
  %v1385 = vpack.c.b16 %v997, %v993
  %v1386 = vpack.c.b16 %v998, %v994
  %v1387 = vpack.c.b16 %v1003, %v999
  %v1388 = vpack.c.b16 %v1004, %v1000
  %v1389 = vpack.c.b16 %v1005, %v1001
  %v1390 = vpack.c.b16 %v1006, %v1002
  %v1391 = vpack.c.b16 %v1011, %v1007
  %v1392 = vpack.c.b16 %v1012, %v1008
  %v1393 = vpack.c.b16 %v1013, %v1009
  %v1394 = vpack.c.b16 %v1014, %v1010
  %v1395 = vpack.c.b16 %v1019, %v1015
  %v1396 = vpack.c.b16 %v1020, %v1016
  %v1397 = vpack.c.b16 %v1021, %v1017
  %v1398 = vpack.c.b16 %v1022, %v1018
  %v1399 = vpack.c.b16 %v1027, %v1023
  %v1400 = vpack.c.b16 %v1028, %v1024
  %v1401 = vpack.c.b16 %v1029, %v1025
  %v1402 = vpack.c.b16 %v1030, %v1026
  %v1403 = vpack.c.b16 %v1035, %v1031
  %v1404 = vpack.c.b16 %v1036, %v1032
  %v1405 = vpack.c.b16 %v1037, %v1033
  %v1406 = vpack.c.b16 %v1038, %v1034
  %v1407 = vpack.c.b16 %v1043, %v1039
  %v1408 = vpack.c.b16 %v1044, %v1040
  %v1409 = vpack.c.b16 %v1045, %v1041
  %v1410 = vpack.c.b16 %v1046, %v1042
  %v1411 = vpack.c.b16 %v1051, %v1047
  %v1412 = vpack.c.b16 %v1052, %v1048
  %v1413 = vpack.c.b16 %v1053, %v1049
  %v1414 = vpack.c.b16 %v1054, %v1050
  %v1415 = vpack.c.b16 %v1059, %v1055
  %v1416 = vpack.c.b16 %v1060, %v1056
  %v1417 = vpack.c.b16 %v1061, %v1057
  %v1418 = vpack.c.b16 %v1062, %v1058
  %v1419 = vpack.c.b16 %v1067, %v1063
  %v1420 = vpack.c.b16 %v1068, %v1064
  %v1421 = vpack.c.b16 %v1069, %v1065
  %v1422 = vpack.c.b16 %v1070, %v1066
  %v1423 = vpack.c.b16 %v1075, %v1071
  %v1424 = vpack.c.b16 %v1076, %v1072
  %v1425 = vpack.c.b16 %v1077, %v1073
  %v1426 = vpack.c.b16 %v1078, %v1074
  %v1427 = vpack.c.b16 %v1083, %v1079
  %v1428 = vpack.c.b16 %v1084, %v1080
  %v1429 = vpack.c.b16 %v1085, %v1081
  %v1430 = vpack.c.b16 %v1086, %v1082
  %v1431 = vpack.c.b16 %v1091, %v1087
  %v1432 = vpack.c.b16 %v1092, %v1088
  %v1433 = vpack.c.b16 %v1093, %v1089
  %v1434 = vpack.c.b16 %v1094, %v1090
  %v1435 = vpack.c.b16 %v1099, %v1095
  %v1436 = vpack.c.b16 %v1100, %v1096
  %v1437 = vpack.c.b16 %v1101, %v1097
  %v1438 = vpack.c.b16 %v1102, %v1098
  %v1439 = vpack.c.b16 %v1107, %v1103
  %v1440 = vpack.c.b16 %v1108, %v1104
  %v1441 = vpack.c.b16 %v1109, %v1105
  %v1442 = vpack.c.b16 %v1110, %v1106
  %v1443 = vpack.c.b16 %v1115, %v1111
  %v1444 = vpack.c.b16 %v1116, %v1112
  %v1445 = vpack.c.b16 %v1117, %v1113
  %v1446 = vpack.c.b16 %v1118, %v1114
  %v1447 = vpack.c.b16 %v1123, %v1119
  %v1448 = vpack.c.b16 %v1124, %v1120
  %v1449 = vpack.c.b16 %v1125, %v1121
  %v1450 = vpack.c.b16 %v1126, %v1122
  %v1451 = vpack.c.b16 %v1131, %v1127
  %v1452 = vpack.c.b16 %v1132, %v1128
  %v1453 = vpack.c.b16 %v1133, %v1129
  %v1454 = vpack.c.b16 %v1134, %v1130
  %v1455 = vpack.c.b16 %v1139, %v1135
  %v1456 = vpack.c.b16 %v1140, %v1136
  %v1457 = vpack.c.b16 %v1141, %v1137
  %v1458 = vpack.c.b16 %v1142, %v1138
  %v1459 = vpack.c.b16 %v1147, %v1143
  %v1460 = vpack.c.b16 %v1148, %v1144
  %v1461 = vpack.c.b16 %v1149, %v1145
  %v1462 = vpack.c.b16 %v1150, %v1146
  %v1463 = vpack.c.b16 %v1155, %v1151
  %v1464 = vpack.c.b16 %v1156, %v1152
  %v1465 = vpack.c.b16 %v1157, %v1153
  %v1466 = vpack.c.b16 %v1158, %v1154
  %v1467 = vpack.c.b16 %v1163, %v1159
  %v1468 = vpack.c.b16 %v1164, %v1160
  %v1469 = vpack.c.b16 %v1165, %v1161
  %v1470 = vpack.c.b16 %v1166, %v1162
  %v1471 = vpack.c.b16 %v1171, %v1167
  %v1472 = vpack.c.b16 %v1172, %v1168
  %v1473 = vpack.c.b16 %v1173, %v1169
  %v1474 = vpack.c.b16 %v1174, %v1170
  %v1475 = vpack.c.b16 %v1179, %v1175
  %v1476 = vpack.c.b16 %v1180, %v1176
  %v1477 = vpack.c.b16 %v1181, %v1177
  %v1478 = vpack.c.b16 %v1182, %v1178
  %v1479 = vpack.c.b16 %v1187, %v1183
  %v1480 = vpack.c.b16 %v1188, %v1184
  %v1481 = vpack.c.b16 %v1189, %v1185
  %v1482 = vpack.c.b16 %v1190, %v1186
  %v1483 = vpack.c.b16 %v1195, %v1191
  %v1484 = vpack.c.b16 %v1196, %v1192
  %v1485 = vpack.c.b16 %v1197, %v1193
  %v1486 = vpack.c.b16 %v1198, %v1194
  %v1487 = vpack.c.b16 %v1203, %v1199
  %v1488 = vpack.c.b16 %v1204, %v1200
  %v1489 = vpack.c.b16 %v1205, %v1201
  %v1490 = vpack.c.b16 %v1206, %v1202
  %v1491 = vpack.c.b16 %v1211, %v1207
  %v1492 = vpack.c.b16 %v1212, %v1208
  %v1493 = vpack.c.b16 %v1213, %v1209
  %v1494 = vpack.c.b16 %v1214, %v1210
  %v1495 = vpack.c.b16 %v1219, %v1215
  %v1496 = vpack.c.b16 %v1220, %v1216
  %v1497 = vpack.c.b16 %v1221, %v1217
  %v1498 = vpack.c.b16 %v1222, %v1218
  %v1499 = vpack.c.b16 %v1227, %v1223
  %v1500 = vpack.c.b16 %v1228, %v1224
  %v1501 = vpack.c.b16 %v1229, %v1225
  %v1502 = vpack.c.b16 %v1230, %v1226
  %v1503 = vpack.c.b16 %v1235, %v1231
  %v1504 = vpack.c.b16 %v1236, %v1232
  %v1505 = vpack.c.b16 %v1237, %v1233
  %v1506 = vpack.c.b16 %v1238, %v1234
  %v1507 = vpack.c.b16 %v1243, %v1239
  %v1508 = vpack.c.b16 %v1244, %v1240
  %v1509 = vpack.c.b16 %v1245, %v1241
  %v1510 = vpack.c.b16 %v1246, %v1242
  %v1511 = vpack.c.b16 %v1251, %v1247
  %v1512 = vpack.c.b16 %v1252, %v1248
  %v1513 = vpack.c.b16 %v1253, %v1249
  %v1514 = vpack.c.b16 %v1254, %v1250
  %v1515 = vpack.c.b16 %v1259, %v1255
  %v1516 = vpack.c.b16 %v1260, %v1256
  %v1517 = vpack.c.b16 %v1261, %v1257
  %v1518 = vpack.c.b16 %v1262, %v1258
  %1775 = vmatprep.subr.bf16.mxu0 %v1264
  %1776 = vmatpush1.bf16.msra.mxu0 %v1263
  %1777 = vmatprep.subr.bf16.mxu0 %v1268
  %1778 = vmatpush1.bf16.msra.mxu0 %v1267
  %1779 = vmatprep.subr.bf16.mxu0 %v1272
  %1780 = vmatpush1.bf16.msra.mxu0 %v1271
  %1781 = vmatprep.subr.bf16.mxu0 %v1276
  %1782 = vmatpush1.bf16.msra.mxu0 %v1275
  %1783 = vmatprep.subr.bf16.mxu0 %v1280
  %1784 = vmatpush1.bf16.msra.mxu0 %v1279
  %1785 = vmatprep.subr.bf16.mxu0 %v1284
  %1786 = vmatpush1.bf16.msra.mxu0 %v1283
  %1787 = vmatprep.subr.bf16.mxu0 %v1288
  %1788 = vmatpush1.bf16.msra.mxu0 %v1287
  %1789 = vmatprep.subr.bf16.mxu0 %v1292
  %1790 = vmatpush1.bf16.msra.mxu0 %v1291
  %1791 = vmatprep.subr.bf16.mxu0 %v1296
  %1792 = vmatpush1.bf16.msra.mxu0 %v1295
  %1793 = vmatprep.subr.bf16.mxu0 %v1300
  %1794 = vmatpush1.bf16.msra.mxu0 %v1299
  %1795 = vmatprep.subr.bf16.mxu0 %v1304
  %1796 = vmatpush1.bf16.msra.mxu0 %v1303
  %1797 = vmatprep.subr.bf16.mxu0 %v1308
  %1798 = vmatpush1.bf16.msra.mxu0 %v1307
  %1799 = vmatprep.subr.bf16.mxu0 %v1312
  %1800 = vmatpush1.bf16.msra.mxu0 %v1311
  %1801 = vmatprep.subr.bf16.mxu0 %v1316
  %1802 = vmatpush1.bf16.msra.mxu0 %v1315
  %1803 = vmatprep.subr.bf16.mxu0 %v1320
  %1804 = vmatpush1.bf16.msra.mxu0 %v1319
  %1805 = vmatprep.subr.bf16.mxu0 %v1324
  %1806 = vmatpush1.bf16.msra.mxu0 %v1323
  %1807 = vmatprep.mubr.bf16.mxu0 %v232
  %1808 = vmatmul.mubr.bf16.gmra.mrb[0].mxu0 %v231
  %v1809 = vpop.f32.mrb[0].mxu0
  %v1810 = vadd.f32 0.0, %v1809
  %v1811 = vpop.f32.mrb[0].mxu0
  %v1812 = vadd.f32 0.0, %v1811
  %v1813 = vpop.f32.mrb[0].mxu0
  %v1814 = vpop.f32.mrb[0].mxu0
  %1815 = vdwg.mxu0
  %1816 = vmatprep.subr.bf16.mxu0 %v1328
  %1817 = vmatpush1.bf16.msra.mxu0 %v1327
  %1818 = vmatprep.subr.bf16.mxu0 %v1332
  %1819 = vmatpush1.bf16.msra.mxu0 %v1331
  %1820 = vmatprep.subr.bf16.mxu0 %v1336
  %1821 = vmatpush1.bf16.msra.mxu0 %v1335
  %1822 = vmatprep.subr.bf16.mxu0 %v1340
  %1823 = vmatpush1.bf16.msra.mxu0 %v1339
  %1824 = vmatprep.subr.bf16.mxu0 %v1344
  %1825 = vmatpush1.bf16.msra.mxu0 %v1343
  %1826 = vmatprep.subr.bf16.mxu0 %v1348
  %1827 = vmatpush1.bf16.msra.mxu0 %v1347
  %1828 = vmatprep.subr.bf16.mxu0 %v1352
  %1829 = vmatpush1.bf16.msra.mxu0 %v1351
  %1830 = vmatprep.subr.bf16.mxu0 %v1356
  %1831 = vmatpush1.bf16.msra.mxu0 %v1355
  %1832 = vmatprep.subr.bf16.mxu0 %v1360
  %1833 = vmatpush1.bf16.msra.mxu0 %v1359
  %1834 = vmatprep.subr.bf16.mxu0 %v1364
  %1835 = vmatpush1.bf16.msra.mxu0 %v1363
  %1836 = vmatprep.subr.bf16.mxu0 %v1368
  %1837 = vmatpush1.bf16.msra.mxu0 %v1367
  %1838 = vmatprep.subr.bf16.mxu0 %v1372
  %1839 = vmatpush1.bf16.msra.mxu0 %v1371
  %1840 = vmatprep.subr.bf16.mxu0 %v1376
  %1841 = vmatpush1.bf16.msra.mxu0 %v1375
  %1842 = vmatprep.subr.bf16.mxu0 %v1380
  %1843 = vmatpush1.bf16.msra.mxu0 %v1379
  %1844 = vmatprep.subr.bf16.mxu0 %v1384
  %1845 = vmatpush1.bf16.msra.mxu0 %v1383
  %1846 = vmatprep.subr.bf16.mxu0 %v1388
  %1847 = vmatpush1.bf16.msra.mxu0 %v1387
  %1848 = vmatprep.mubr.bf16.mxu0 %v234
  %1849 = vmatmul.mubr.bf16.gmra.mrb[0].mxu0 %v233
  %v1850 = vpop.f32.mrb[0].mxu0
  %v1851 = vadd.f32 %v1810, %v1850
  %v1852 = vpop.f32.mrb[0].mxu0
  %v1853 = vadd.f32 %v1812, %v1852
  %v1854 = vpop.f32.mrb[0].mxu0
  %v1855 = vpop.f32.mrb[0].mxu0
  %1856 = vdwg.mxu0
  %1857 = vmatprep.subr.bf16.mxu0 %v1392
  %1858 = vmatpush1.bf16.msra.mxu0 %v1391
  %1859 = vmatprep.subr.bf16.mxu0 %v1396
  %1860 = vmatpush1.bf16.msra.mxu0 %v1395
  %1861 = vmatprep.subr.bf16.mxu0 %v1400
  %1862 = vmatpush1.bf16.msra.mxu0 %v1399
  %1863 = vmatprep.subr.bf16.mxu0 %v1404
  %1864 = vmatpush1.bf16.msra.mxu0 %v1403
  %1865 = vmatprep.subr.bf16.mxu0 %v1408
  %1866 = vmatpush1.bf16.msra.mxu0 %v1407
  %1867 = vmatprep.subr.bf16.mxu0 %v1412
  %1868 = vmatpush1.bf16.msra.mxu0 %v1411
  %1869 = vmatprep.subr.bf16.mxu0 %v1416
  %1870 = vmatpush1.bf16.msra.mxu0 %v1415
  %1871 = vmatprep.subr.bf16.mxu0 %v1420
  %1872 = vmatpush1.bf16.msra.mxu0 %v1419
  %1873 = vmatprep.subr.bf16.mxu0 %v1424
  %1874 = vmatpush1.bf16.msra.mxu0 %v1423
  %1875 = vmatprep.subr.bf16.mxu0 %v1428
  %1876 = vmatpush1.bf16.msra.mxu0 %v1427
  %1877 = vmatprep.subr.bf16.mxu0 %v1432
  %1878 = vmatpush1.bf16.msra.mxu0 %v1431
  %1879 = vmatprep.subr.bf16.mxu0 %v1436
  %1880 = vmatpush1.bf16.msra.mxu0 %v1435
  %1881 = vmatprep.subr.bf16.mxu0 %v1440
  %1882 = vmatpush1.bf16.msra.mxu0 %v1439
  %1883 = vmatprep.subr.bf16.mxu0 %v1444
  %1884 = vmatpush1.bf16.msra.mxu0 %v1443
  %1885 = vmatprep.subr.bf16.mxu0 %v1448
  %1886 = vmatpush1.bf16.msra.mxu0 %v1447
  %1887 = vmatprep.subr.bf16.mxu0 %v1452
  %1888 = vmatpush1.bf16.msra.mxu0 %v1451
  %1889 = vmatprep.mubr.bf16.mxu0 %v236
  %1890 = vmatmul.mubr.bf16.gmra.mrb[0].mxu0 %v235
  %v1891 = vpop.f32.mrb[0].mxu0
  %v1892 = vadd.f32 %v1851, %v1891
  %v1893 = vpop.f32.mrb[0].mxu0
  %v1894 = vadd.f32 %v1853, %v1893
  %v1895 = vpop.f32.mrb[0].mxu0
  %v1896 = vpop.f32.mrb[0].mxu0
  %1897 = vdwg.mxu0
  %1898 = vmatprep.subr.bf16.mxu0 %v1456
  %1899 = vmatpush1.bf16.msra.mxu0 %v1455
  %1900 = vmatprep.subr.bf16.mxu0 %v1460
  %1901 = vmatpush1.bf16.msra.mxu0 %v1459
  %1902 = vmatprep.subr.bf16.mxu0 %v1464
  %1903 = vmatpush1.bf16.msra.mxu0 %v1463
  %1904 = vmatprep.subr.bf16.mxu0 %v1468
  %1905 = vmatpush1.bf16.msra.mxu0 %v1467
  %1906 = vmatprep.subr.bf16.mxu0 %v1472
  %1907 = vmatpush1.bf16.msra.mxu0 %v1471
  %1908 = vmatprep.subr.bf16.mxu0 %v1476
  %1909 = vmatpush1.bf16.msra.mxu0 %v1475
  %1910 = vmatprep.subr.bf16.mxu0 %v1480
  %1911 = vmatpush1.bf16.msra.mxu0 %v1479
  %1912 = vmatprep.subr.bf16.mxu0 %v1484
  %1913 = vmatpush1.bf16.msra.mxu0 %v1483
  %1914 = vmatprep.subr.bf16.mxu0 %v1488
  %1915 = vmatpush1.bf16.msra.mxu0 %v1487
  %1916 = vmatprep.subr.bf16.mxu0 %v1492
  %1917 = vmatpush1.bf16.msra.mxu0 %v1491
  %1918 = vmatprep.subr.bf16.mxu0 %v1496
  %1919 = vmatpush1.bf16.msra.mxu0 %v1495
  %1920 = vmatprep.subr.bf16.mxu0 %v1500
  %1921 = vmatpush1.bf16.msra.mxu0 %v1499
  %1922 = vmatprep.subr.bf16.mxu0 %v1504
  %1923 = vmatpush1.bf16.msra.mxu0 %v1503
  %1924 = vmatprep.subr.bf16.mxu0 %v1508
  %1925 = vmatpush1.bf16.msra.mxu0 %v1507
  %1926 = vmatprep.subr.bf16.mxu0 %v1512
  %1927 = vmatpush1.bf16.msra.mxu0 %v1511
  %1928 = vmatprep.subr.bf16.mxu0 %v1516
  %1929 = vmatpush1.bf16.msra.mxu0 %v1515
  %1930 = vmatprep.mubr.bf16.mxu0 %v238
  %1931 = vmatmul.mubr.bf16.gmra.mrb[0].mxu0 %v237
  %v1932 = vpop.f32.mrb[0].mxu0
  %v1933 = vadd.f32 %v1892, %v1932
  %v1934 = vpop.f32.mrb[0].mxu0
  %v1935 = vadd.f32 %v1894, %v1934
  %v1936 = vpop.f32.mrb[0].mxu0
  %v1937 = vpop.f32.mrb[0].mxu0
  %1938 = vdwg.mxu0
  %1939 = vmatprep.subr.bf16.mxu0 %v1266
  %1940 = vmatpush1.bf16.msra.mxu0 %v1265
  %1941 = vmatprep.subr.bf16.mxu0 %v1270
  %1942 = vmatpush1.bf16.msra.mxu0 %v1269
  %1943 = vmatprep.subr.bf16.mxu0 %v1274
  %1944 = vmatpush1.bf16.msra.mxu0 %v1273
  %1945 = vmatprep.subr.bf16.mxu0 %v1278
  %1946 = vmatpush1.bf16.msra.mxu0 %v1277
  %1947 = vmatprep.subr.bf16.mxu0 %v1282
  %1948 = vmatpush1.bf16.msra.mxu0 %v1281
  %1949 = vmatprep.subr.bf16.mxu0 %v1286
  %1950 = vmatpush1.bf16.msra.mxu0 %v1285
  %1951 = vmatprep.subr.bf16.mxu0 %v1290
  %1952 = vmatpush1.bf16.msra.mxu0 %v1289
  %1953 = vmatprep.subr.bf16.mxu0 %v1294
  %1954 = vmatpush1.bf16.msra.mxu0 %v1293
  %1955 = vmatprep.subr.bf16.mxu0 %v1298
  %1956 = vmatpush1.bf16.msra.mxu0 %v1297
  %1957 = vmatprep.subr.bf16.mxu0 %v1302
  %1958 = vmatpush1.bf16.msra.mxu0 %v1301
  %1959 = vmatprep.subr.bf16.mxu0 %v1306
  %1960 = vmatpush1.bf16.msra.mxu0 %v1305
  %1961 = vmatprep.subr.bf16.mxu0 %v1310
  %1962 = vmatpush1.bf16.msra.mxu0 %v1309
  %1963 = vmatprep.subr.bf16.mxu0 %v1314
  %1964 = vmatpush1.bf16.msra.mxu0 %v1313
  %1965 = vmatprep.subr.bf16.mxu0 %v1318
  %1966 = vmatpush1.bf16.msra.mxu0 %v1317
  %1967 = vmatprep.subr.bf16.mxu0 %v1322
  %1968 = vmatpush1.bf16.msra.mxu0 %v1321
  %1969 = vmatprep.subr.bf16.mxu0 %v1326
  %1970 = vmatpush1.bf16.msra.mxu0 %v1325
  %1971 = vmatprep.mubr.bf16.mxu0 %v232
  %1972 = vmatmul.mubr.bf16.gmra.mrb[0].mxu0 %v231
  %v1973 = vpop.f32.mrb[0].mxu0
  %v1974 = vadd.f32 0.0, %v1973
  %v1975 = vpop.f32.mrb[0].mxu0
  %v1976 = vadd.f32 0.0, %v1975
  %v1977 = vpop.f32.mrb[0].mxu0
  %v1978 = vpop.f32.mrb[0].mxu0
  %1979 = vdwg.mxu0
  %1980 = vmatprep.subr.bf16.mxu0 %v1330
  %1981 = vmatpush1.bf16.msra.mxu0 %v1329
  %1982 = vmatprep.subr.bf16.mxu0 %v1334
  %1983 = vmatpush1.bf16.msra.mxu0 %v1333
  %1984 = vmatprep.subr.bf16.mxu0 %v1338
  %1985 = vmatpush1.bf16.msra.mxu0 %v1337
  %1986 = vmatprep.subr.bf16.mxu0 %v1342
  %1987 = vmatpush1.bf16.msra.mxu0 %v1341
  %1988 = vmatprep.subr.bf16.mxu0 %v1346
  %1989 = vmatpush1.bf16.msra.mxu0 %v1345
  %1990 = vmatprep.subr.bf16.mxu0 %v1350
  %1991 = vmatpush1.bf16.msra.mxu0 %v1349
  %1992 = vmatprep.subr.bf16.mxu0 %v1354
  %1993 = vmatpush1.bf16.msra.mxu0 %v1353
  %1994 = vmatprep.subr.bf16.mxu0 %v1358
  %1995 = vmatpush1.bf16.msra.mxu0 %v1357
  %1996 = vmatprep.subr.bf16.mxu0 %v1362
  %1997 = vmatpush1.bf16.msra.mxu0 %v1361
  %1998 = vmatprep.subr.bf16.mxu0 %v1366
  %1999 = vmatpush1.bf16.msra.mxu0 %v1365
  %2000 = vmatprep.subr.bf16.mxu0 %v1370
  %2001 = vmatpush1.bf16.msra.mxu0 %v1369
  %2002 = vmatprep.subr.bf16.mxu0 %v1374
  %2003 = vmatpush1.bf16.msra.mxu0 %v1373
  %2004 = vmatprep.subr.bf16.mxu0 %v1378
  %2005 = vmatpush1.bf16.msra.mxu0 %v1377
  %2006 = vmatprep.subr.bf16.mxu0 %v1382
  %2007 = vmatpush1.bf16.msra.mxu0 %v1381
  %2008 = vmatprep.subr.bf16.mxu0 %v1386
  %2009 = vmatpush1.bf16.msra.mxu0 %v1385
  %2010 = vmatprep.subr.bf16.mxu0 %v1390
  %2011 = vmatpush1.bf16.msra.mxu0 %v1389
  %2012 = vmatprep.mubr.bf16.mxu0 %v234
  %2013 = vmatmul.mubr.bf16.gmra.mrb[0].mxu0 %v233
  %v2014 = vpop.f32.mrb[0].mxu0
  %v2015 = vadd.f32 %v1974, %v2014
  %v2016 = vpop.f32.mrb[0].mxu0
  %v2017 = vadd.f32 %v1976, %v2016
  %v2018 = vpop.f32.mrb[0].mxu0
  %v2019 = vpop.f32.mrb[0].mxu0
  %2020 = vdwg.mxu0
  %2021 = vmatprep.subr.bf16.mxu0 %v1394
  %2022 = vmatpush1.bf16.msra.mxu0 %v1393
  %2023 = vmatprep.subr.bf16.mxu0 %v1398
  %2024 = vmatpush1.bf16.msra.mxu0 %v1397
  %2025 = vmatprep.subr.bf16.mxu0 %v1402
  %2026 = vmatpush1.bf16.msra.mxu0 %v1401
  %2027 = vmatprep.subr.bf16.mxu0 %v1406
  %2028 = vmatpush1.bf16.msra.mxu0 %v1405
  %2029 = vmatprep.subr.bf16.mxu0 %v1410
  %2030 = vmatpush1.bf16.msra.mxu0 %v1409
  %2031 = vmatprep.subr.bf16.mxu0 %v1414
  %2032 = vmatpush1.bf16.msra.mxu0 %v1413
  %2033 = vmatprep.subr.bf16.mxu0 %v1418
  %2034 = vmatpush1.bf16.msra.mxu0 %v1417
  %2035 = vmatprep.subr.bf16.mxu0 %v1422
  %2036 = vmatpush1.bf16.msra.mxu0 %v1421
  %2037 = vmatprep.subr.bf16.mxu0 %v1426
  %2038 = vmatpush1.bf16.msra.mxu0 %v1425
  %2039 = vmatprep.subr.bf16.mxu0 %v1430
  %2040 = vmatpush1.bf16.msra.mxu0 %v1429
  %2041 = vmatprep.subr.bf16.mxu0 %v1434
  %2042 = vmatpush1.bf16.msra.mxu0 %v1433
  %2043 = vmatprep.subr.bf16.mxu0 %v1438
  %2044 = vmatpush1.bf16.msra.mxu0 %v1437
  %2045 = vmatprep.subr.bf16.mxu0 %v1442
  %2046 = vmatpush1.bf16.msra.mxu0 %v1441
  %2047 = vmatprep.subr.bf16.mxu0 %v1446
  %2048 = vmatpush1.bf16.msra.mxu0 %v1445
  %2049 = vmatprep.subr.bf16.mxu0 %v1450
  %2050 = vmatpush1.bf16.msra.mxu0 %v1449
  %2051 = vmatprep.subr.bf16.mxu0 %v1454
  %2052 = vmatpush1.bf16.msra.mxu0 %v1453
  %2053 = vmatprep.mubr.bf16.mxu0 %v236
  %2054 = vmatmul.mubr.bf16.gmra.mrb[0].mxu0 %v235
  %v2055 = vpop.f32.mrb[0].mxu0
  %v2056 = vadd.f32 %v2015, %v2055
  %v2057 = vpop.f32.mrb[0].mxu0
  %v2058 = vadd.f32 %v2017, %v2057
  %v2059 = vpop.f32.mrb[0].mxu0
  %v2060 = vpop.f32.mrb[0].mxu0
  %2061 = vdwg.mxu0
  %2062 = vmatprep.subr.bf16.mxu0 %v1458
  %2063 = vmatpush1.bf16.msra.mxu0 %v1457
  %2064 = vmatprep.subr.bf16.mxu0 %v1462
  %2065 = vmatpush1.bf16.msra.mxu0 %v1461
  %2066 = vmatprep.subr.bf16.mxu0 %v1466
  %2067 = vmatpush1.bf16.msra.mxu0 %v1465
  %2068 = vmatprep.subr.bf16.mxu0 %v1470
  %2069 = vmatpush1.bf16.msra.mxu0 %v1469
  %2070 = vmatprep.subr.bf16.mxu0 %v1474
  %2071 = vmatpush1.bf16.msra.mxu0 %v1473
  %2072 = vmatprep.subr.bf16.mxu0 %v1478
  %2073 = vmatpush1.bf16.msra.mxu0 %v1477
  %2074 = vmatprep.subr.bf16.mxu0 %v1482
  %2075 = vmatpush1.bf16.msra.mxu0 %v1481
  %2076 = vmatprep.subr.bf16.mxu0 %v1486
  %2077 = vmatpush1.bf16.msra.mxu0 %v1485
  %2078 = vmatprep.subr.bf16.mxu0 %v1490
  %2079 = vmatpush1.bf16.msra.mxu0 %v1489
  %2080 = vmatprep.subr.bf16.mxu0 %v1494
  %2081 = vmatpush1.bf16.msra.mxu0 %v1493
  %2082 = vmatprep.subr.bf16.mxu0 %v1498
  %2083 = vmatpush1.bf16.msra.mxu0 %v1497
  %2084 = vmatprep.subr.bf16.mxu0 %v1502
  %2085 = vmatpush1.bf16.msra.mxu0 %v1501
  %2086 = vmatprep.subr.bf16.mxu0 %v1506
  %2087 = vmatpush1.bf16.msra.mxu0 %v1505
  %2088 = vmatprep.subr.bf16.mxu0 %v1510
  %2089 = vmatpush1.bf16.msra.mxu0 %v1509
  %2090 = vmatprep.subr.bf16.mxu0 %v1514
  %2091 = vmatpush1.bf16.msra.mxu0 %v1513
  %2092 = vmatprep.subr.bf16.mxu0 %v1518
  %2093 = vmatpush1.bf16.msra.mxu0 %v1517
  %2094 = vmatprep.mubr.bf16.mxu0 %v238
  %2095 = vmatmul.mubr.bf16.gmra.mrb[0].mxu0 %v237
  %v2096 = vpop.f32.mrb[0].mxu0
  %v2097 = vadd.f32 %v2056, %v2096
  %v2098 = vpop.f32.mrb[0].mxu0
  %v2099 = vadd.f32 %v2058, %v2098
  %v2100 = vpop.f32.mrb[0].mxu0
  %v2101 = vpop.f32.mrb[0].mxu0
  %2102 = vdwg.mxu0
  %vm2103 = vcmask 1043456
  %v2104 = vsel %vm2103, %v1933, 0.0
  %v2105 = vrot.slane %v2104, 4
  %v2106 = vadd.f32 %v2104, %v2105
  %v2107 = vrot.slane %v2106, 2
  %v2108 = vadd.f32 %v2106, %v2107
  %v2109 = vrot.slane %v2108, 1
  %v2110 = vadd.f32 %v2108, %v2109
  %v2111 = vsel %vm2103, %v1935, 0.0
  %v2112 = vrot.slane %v2111, 4
  %v2113 = vadd.f32 %v2111, %v2112
  %v2114 = vrot.slane %v2113, 2
  %v2115 = vadd.f32 %v2113, %v2114
  %v2116 = vrot.slane %v2115, 1
  %v2117 = vadd.f32 %v2115, %v2116
  %v2118 = vsel %vm2103, %v2097, 0.0
  %v2119 = vrot.slane %v2118, 4
  %v2120 = vadd.f32 %v2118, %v2119
  %v2121 = vrot.slane %v2120, 2
  %v2122 = vadd.f32 %v2120, %v2121
  %v2123 = vrot.slane %v2122, 1
  %v2124 = vadd.f32 %v2122, %v2123
  %v2125 = vsel %vm2103, %v2099, 0.0
  %v2126 = vrot.slane %v2125, 4
  %v2127 = vadd.f32 %v2125, %v2126
  %v2128 = vrot.slane %v2127, 2
  %v2129 = vadd.f32 %v2127, %v2128
  %v2130 = vrot.slane %v2129, 1
  %v2131 = vadd.f32 %v2129, %v2130
  %v2132 = vrcp.pop 4.0
  %v2133 = vmul.f32 %v2110, %v2132
  %v2134 = vmul.f32 %v2117, %v2132
  %v2135 = vmul.f32 %v2124, %v2132
  %v2136 = vmul.f32 %v2131, %v2132
  %v2137 = vmul.f32 %v1933, %v1933
  %v2138 = vmul.f32 %v1935, %v1935
  %v2139 = vmul.f32 %v2097, %v2097
  %v2140 = vmul.f32 %v2099, %v2099
  %v2141 = vsel %vm2103, %v2137, 0.0
  %v2142 = vrot.slane %v2141, 4
  %v2143 = vadd.f32 %v2141, %v2142
  %v2144 = vrot.slane %v2143, 2
  %v2145 = vadd.f32 %v2143, %v2144
  %v2146 = vrot.slane %v2145, 1
  %v2147 = vadd.f32 %v2145, %v2146
  %v2148 = vsel %vm2103, %v2138, 0.0
  %v2149 = vrot.slane %v2148, 4
  %v2150 = vadd.f32 %v2148, %v2149
  %v2151 = vrot.slane %v2150, 2
  %v2152 = vadd.f32 %v2150, %v2151
  %v2153 = vrot.slane %v2152, 1
  %v2154 = vadd.f32 %v2152, %v2153
  %v2155 = vsel %vm2103, %v2139, 0.0
  %v2156 = vrot.slane %v2155, 4
  %v2157 = vadd.f32 %v2155, %v2156
  %v2158 = vrot.slane %v2157, 2
  %v2159 = vadd.f32 %v2157, %v2158
  %v2160 = vrot.slane %v2159, 1
  %v2161 = vadd.f32 %v2159, %v2160
  %v2162 = vsel %vm2103, %v2140, 0.0
  %v2163 = vrot.slane %v2162, 4
  %v2164 = vadd.f32 %v2162, %v2163
  %v2165 = vrot.slane %v2164, 2
  %v2166 = vadd.f32 %v2164, %v2165
  %v2167 = vrot.slane %v2166, 1
  %v2168 = vadd.f32 %v2166, %v2167
  %v2169 = vmul.f32 %v2147, %v2132
  %v2170 = vmul.f32 %v2154, %v2132
  %v2171 = vmul.f32 %v2161, %v2132
  %v2172 = vmul.f32 %v2168, %v2132
  %v2173 = vmul.f32 %v2133, %v2133
  %v2174 = vmul.f32 %v2134, %v2134
  %v2175 = vmul.f32 %v2135, %v2135
  %v2176 = vmul.f32 %v2136, %v2136
  %v2177 = vsub.f32 %v2169, %v2173
  %v2178 = vsub.f32 %v2170, %v2174
  %v2179 = vsub.f32 %v2171, %v2175
  %v2180 = vsub.f32 %v2172, %v2176
  %v2181 = vmax.f32 %v2177, 0.0
  %v2182 = vmax.f32 %v2178, 0.0
  %v2183 = vmax.f32 %v2179, 0.0
  %v2184 = vmax.f32 %v2180, 0.0
  %v2185 = vld [vmem:[%s5] sm:$0xf]
  %v2186 = vadd.f32 %v2181, 1e-05
  %v2187 = vadd.f32 %v2182, 1e-05
  %v2188 = vadd.f32 %v2183, 1e-05
  %v2189 = vadd.f32 %v2184, 1e-05
  %v2190 = vrsqrt.pop %v2186
  %v2191 = vrsqrt.pop %v2187
  %v2192 = vrsqrt.pop %v2188
  %v2193 = vrsqrt.pop %v2189
  %v2198 = vcombine.low %v2190, %v2191
  %v2199 = vcombine.low %v2192, %v2193
  %v2201 = vunpack.c.l.s4 1966171168
  %v2202 = vunpack.c.0.s8 %v2201
  %v2203 = vlaneseq
  %v2204 = vshrl.u32 %v2203, 7
  %v2205 = vsub.s32 %v2202, %v2204
  %v2206 = vrot.slane %v2198, %v2205
  %v2208 = vunpack.c.l.s4 1966171168
  %v2209 = vunpack.c.0.s8 %v2208
  %v2210 = vlaneseq
  %v2211 = vshrl.u32 %v2210, 7
  %v2212 = vsub.s32 %v2209, %v2211
  %v2213 = vrot.slane %v2199, %v2212
  %v2214 = vcombine.low %v2206, %v2213
  %v2216 = vunpack.c.l.s4 1966171168
  %v2217 = vunpack.c.0.s8 %v2216
  %v2218 = vlaneseq
  %v2219 = vshrl.u32 %v2218, 7
  %v2220 = vsub.s32 %v2217, %v2219
  %v2221 = vrot.slane %v2214, %v2220
  %v2223 = vmul.f32 %v2185, %v2221
  %v2224 = vld [vmem:[%s6] sm:$0xf]
  %v2226 = vlaneseq
  %v2227 = vshrl.u32 %v2226, 7
  %v2228 = vsub.s32 0, %v2227
  %v2229 = vrot.slane %v2223, %v2228
  %v2230 = vlaneseq
  %v2231 = vshrl.u32 %v2230, 7
  %v2232 = vsub.s32 1, %v2231
  %v2233 = vrot.slane %v2223, %v2232
  %v2234 = vlaneseq
  %v2235 = vshrl.u32 %v2234, 7
  %v2236 = vsub.s32 2, %v2235
  %v2237 = vrot.slane %v2223, %v2236
  %v2238 = vlaneseq
  %v2239 = vshrl.u32 %v2238, 7
  %v2240 = vsub.s32 3, %v2239
  %v2241 = vrot.slane %v2223, %v2240
  %v2246 = vmul.f32 %v2133, %v2229
  %v2247 = vmul.f32 %v2134, %v2233
  %v2248 = vmul.f32 %v2135, %v2237
  %v2249 = vmul.f32 %v2136, %v2241
  %v2254 = vcombine.low %v2246, %v2247
  %v2255 = vcombine.low %v2248, %v2249
  %v2257 = vunpack.c.l.s4 1966171168
  %v2258 = vunpack.c.0.s8 %v2257
  %v2259 = vlaneseq
  %v2260 = vshrl.u32 %v2259, 7
  %v2261 = vsub.s32 %v2258, %v2260
  %v2262 = vrot.slane %v2254, %v2261
  %v2264 = vunpack.c.l.s4 1966171168
  %v2265 = vunpack.c.0.s8 %v2264
  %v2266 = vlaneseq
  %v2267 = vshrl.u32 %v2266, 7
  %v2268 = vsub.s32 %v2265, %v2267
  %v2269 = vrot.slane %v2255, %v2268
  %v2270 = vcombine.low %v2262, %v2269
  %v2272 = vunpack.c.l.s4 1966171168
  %v2273 = vunpack.c.0.s8 %v2272
  %v2274 = vlaneseq
  %v2275 = vshrl.u32 %v2274, 7
  %v2276 = vsub.s32 %v2273, %v2275
  %v2277 = vrot.slane %v2270, %v2276
  %v2279 = vsub.f32 %v2224, %v2277
  %v2280 = vmul.f32 %v1933, %v2229
  %v2281 = vmul.f32 %v1935, %v2233
  %v2282 = vmul.f32 %v2097, %v2237
  %v2283 = vmul.f32 %v2099, %v2241
  %v2285 = vlaneseq
  %v2286 = vshrl.u32 %v2285, 7
  %v2287 = vsub.s32 0, %v2286
  %v2288 = vrot.slane %v2279, %v2287
  %v2289 = vlaneseq
  %v2290 = vshrl.u32 %v2289, 7
  %v2291 = vsub.s32 1, %v2290
  %v2292 = vrot.slane %v2279, %v2291
  %v2293 = vlaneseq
  %v2294 = vshrl.u32 %v2293, 7
  %v2295 = vsub.s32 2, %v2294
  %v2296 = vrot.slane %v2279, %v2295
  %v2297 = vlaneseq
  %v2298 = vshrl.u32 %v2297, 7
  %v2299 = vsub.s32 3, %v2298
  %v2300 = vrot.slane %v2279, %v2299
  %v2305 = vadd.f32 %v2280, %v2288
  %v2306 = vadd.f32 %v2281, %v2292
  %v2307 = vadd.f32 %v2282, %v2296
  %v2308 = vadd.f32 %v2283, %v2300
  %v2309 = vmax.f32 %v2305, 0.0
  %v2310 = vmax.f32 %v2306, 0.0
  %v2311 = vmax.f32 %v2307, 0.0
  %v2312 = vmax.f32 %v2308, 0.0
  %v2313 = vpack.c.bf16 %v2309, %v2309
  %v2314 = vpack.c.bf16 %v2310, %v2310
  %v2315 = vpack.c.bf16 %v2311, %v2311
  %v2316 = vpack.c.bf16 %v2312, %v2312
  %v2317 = vld [vmem:[%s7] sm:$0xff]
  %v2318 = vld [vmem:[%s7 + $0x8] sm:$0xff]
  %v2319 = vld [vmem:[%s7 + $0x10] sm:$0xff]
  %v2320 = vld [vmem:[%s7 + $0x18] sm:$0xff]
  %v2321 = vld [vmem:[%s7 + $0x20] sm:$0xff]
  %v2322 = vld [vmem:[%s7 + $0x28] sm:$0xff]
  %v2323 = vld [vmem:[%s7 + $0x30] sm:$0xff]
  %v2324 = vld [vmem:[%s7 + $0x38] sm:$0xff]
  %v2325 = vld [vmem:[%s7 + $0x40] sm:$0xff]
  %v2326 = vld [vmem:[%s7 + $0x48] sm:$0xff]
  %v2327 = vld [vmem:[%s7 + $0x50] sm:$0xff]
  %v2328 = vld [vmem:[%s7 + $0x58] sm:$0xff]
  %v2329 = vld [vmem:[%s7 + $0x60] sm:$0xff]
  %v2330 = vld [vmem:[%s7 + $0x68] sm:$0xff]
  %v2331 = vld [vmem:[%s7 + $0x70] sm:$0xff]
  %v2332 = vld [vmem:[%s7 + $0x78] sm:$0xff]
  %v2333 = vld [vmem:[%s7 + $0x80] sm:$0xff]
  %v2334 = vld [vmem:[%s7 + $0x88] sm:$0xff]
  %v2335 = vld [vmem:[%s7 + $0x90] sm:$0xff]
  %v2336 = vld [vmem:[%s7 + $0x98] sm:$0xff]
  %v2337 = vld [vmem:[%s7 + $0xa0] sm:$0xff]
  %v2338 = vld [vmem:[%s7 + $0xa8] sm:$0xff]
  %v2339 = vld [vmem:[%s7 + $0xb0] sm:$0xff]
  %v2340 = vld [vmem:[%s7 + $0xb8] sm:$0xff]
  %v2341 = vld [vmem:[%s7 + $0xc0] sm:$0xff]
  %v2342 = vld [vmem:[%s7 + $0xc8] sm:$0xff]
  %v2343 = vld [vmem:[%s7 + $0xd0] sm:$0xff]
  %v2344 = vld [vmem:[%s7 + $0xd8] sm:$0xff]
  %v2345 = vld [vmem:[%s7 + $0xe0] sm:$0xff]
  %v2346 = vld [vmem:[%s7 + $0xe8] sm:$0xff]
  %v2347 = vld [vmem:[%s7 + $0xf0] sm:$0xff]
  %v2348 = vld [vmem:[%s7 + $0xf8] sm:$0xff]
  %v2349 = vld [vmem:[%s7 + $0x100] sm:$0xff]
  %v2350 = vld [vmem:[%s7 + $0x108] sm:$0xff]
  %v2351 = vld [vmem:[%s7 + $0x110] sm:$0xff]
  %v2352 = vld [vmem:[%s7 + $0x118] sm:$0xff]
  %v2353 = vld [vmem:[%s7 + $0x120] sm:$0xff]
  %v2354 = vld [vmem:[%s7 + $0x128] sm:$0xff]
  %v2355 = vld [vmem:[%s7 + $0x130] sm:$0xff]
  %v2356 = vld [vmem:[%s7 + $0x138] sm:$0xff]
  %v2357 = vld [vmem:[%s7 + $0x140] sm:$0xff]
  %v2358 = vld [vmem:[%s7 + $0x148] sm:$0xff]
  %v2359 = vld [vmem:[%s7 + $0x150] sm:$0xff]
  %v2360 = vld [vmem:[%s7 + $0x158] sm:$0xff]
  %v2361 = vld [vmem:[%s7 + $0x160] sm:$0xff]
  %v2362 = vld [vmem:[%s7 + $0x168] sm:$0xff]
  %v2363 = vld [vmem:[%s7 + $0x170] sm:$0xff]
  %v2364 = vld [vmem:[%s7 + $0x178] sm:$0xff]
  %v2365 = vld [vmem:[%s7 + $0x180] sm:$0xff]
  %v2366 = vld [vmem:[%s7 + $0x188] sm:$0xff]
  %v2367 = vld [vmem:[%s7 + $0x190] sm:$0xff]
  %v2368 = vld [vmem:[%s7 + $0x198] sm:$0xff]
  %v2369 = vld [vmem:[%s7 + $0x1a0] sm:$0xff]
  %v2370 = vld [vmem:[%s7 + $0x1a8] sm:$0xff]
  %v2371 = vld [vmem:[%s7 + $0x1b0] sm:$0xff]
  %v2372 = vld [vmem:[%s7 + $0x1b8] sm:$0xff]
  %v2373 = vld [vmem:[%s7 + $0x1c0] sm:$0xff]
  %v2374 = vld [vmem:[%s7 + $0x1c8] sm:$0xff]
  %v2375 = vld [vmem:[%s7 + $0x1d0] sm:$0xff]
  %v2376 = vld [vmem:[%s7 + $0x1d8] sm:$0xff]
  %v2377 = vld [vmem:[%s7 + $0x1e0] sm:$0xff]
  %v2378 = vld [vmem:[%s7 + $0x1e8] sm:$0xff]
  %v2379 = vld [vmem:[%s7 + $0x1f0] sm:$0xff]
  %v2380 = vld [vmem:[%s7 + $0x1f8] sm:$0xff]
  %v2445 = vunpack.c.l.b16 %v2317
  %v2446 = vunpack.c.h.b16 %v2317
  %v2447 = vunpack.c.l.b16 %v2318
  %v2448 = vunpack.c.h.b16 %v2318
  %v2449 = vunpack.c.l.b16 %v2319
  %v2450 = vunpack.c.h.b16 %v2319
  %v2451 = vunpack.c.l.b16 %v2320
  %v2452 = vunpack.c.h.b16 %v2320
  %v2453 = vunpack.c.l.b16 %v2321
  %v2454 = vunpack.c.h.b16 %v2321
  %v2455 = vunpack.c.l.b16 %v2322
  %v2456 = vunpack.c.h.b16 %v2322
  %v2457 = vunpack.c.l.b16 %v2323
  %v2458 = vunpack.c.h.b16 %v2323
  %v2459 = vunpack.c.l.b16 %v2324
  %v2460 = vunpack.c.h.b16 %v2324
  %v2461 = vunpack.c.l.b16 %v2325
  %v2462 = vunpack.c.h.b16 %v2325
  %v2463 = vunpack.c.l.b16 %v2326
  %v2464 = vunpack.c.h.b16 %v2326
  %v2465 = vunpack.c.l.b16 %v2327
  %v2466 = vunpack.c.h.b16 %v2327
  %v2467 = vunpack.c.l.b16 %v2328
  %v2468 = vunpack.c.h.b16 %v2328
  %v2469 = vunpack.c.l.b16 %v2329
  %v2470 = vunpack.c.h.b16 %v2329
  %v2471 = vunpack.c.l.b16 %v2330
  %v2472 = vunpack.c.h.b16 %v2330
  %v2473 = vunpack.c.l.b16 %v2331
  %v2474 = vunpack.c.h.b16 %v2331
  %v2475 = vunpack.c.l.b16 %v2332
  %v2476 = vunpack.c.h.b16 %v2332
  %v2477 = vunpack.c.l.b16 %v2333
  %v2478 = vunpack.c.h.b16 %v2333
  %v2479 = vunpack.c.l.b16 %v2334
  %v2480 = vunpack.c.h.b16 %v2334
  %v2481 = vunpack.c.l.b16 %v2335
  %v2482 = vunpack.c.h.b16 %v2335
  %v2483 = vunpack.c.l.b16 %v2336
  %v2484 = vunpack.c.h.b16 %v2336
  %v2485 = vunpack.c.l.b16 %v2337
  %v2486 = vunpack.c.h.b16 %v2337
  %v2487 = vunpack.c.l.b16 %v2338
  %v2488 = vunpack.c.h.b16 %v2338
  %v2489 = vunpack.c.l.b16 %v2339
  %v2490 = vunpack.c.h.b16 %v2339
  %v2491 = vunpack.c.l.b16 %v2340
  %v2492 = vunpack.c.h.b16 %v2340
  %v2493 = vunpack.c.l.b16 %v2341
  %v2494 = vunpack.c.h.b16 %v2341
  %v2495 = vunpack.c.l.b16 %v2342
  %v2496 = vunpack.c.h.b16 %v2342
  %v2497 = vunpack.c.l.b16 %v2343
  %v2498 = vunpack.c.h.b16 %v2343
  %v2499 = vunpack.c.l.b16 %v2344
  %v2500 = vunpack.c.h.b16 %v2344
  %v2501 = vunpack.c.l.b16 %v2345
  %v2502 = vunpack.c.h.b16 %v2345
  %v2503 = vunpack.c.l.b16 %v2346
  %v2504 = vunpack.c.h.b16 %v2346
  %v2505 = vunpack.c.l.b16 %v2347
  %v2506 = vunpack.c.h.b16 %v2347
  %v2507 = vunpack.c.l.b16 %v2348
  %v2508 = vunpack.c.h.b16 %v2348
  %v2509 = vunpack.c.l.b16 %v2349
  %v2510 = vunpack.c.h.b16 %v2349
  %v2511 = vunpack.c.l.b16 %v2350
  %v2512 = vunpack.c.h.b16 %v2350
  %v2513 = vunpack.c.l.b16 %v2351
  %v2514 = vunpack.c.h.b16 %v2351
  %v2515 = vunpack.c.l.b16 %v2352
  %v2516 = vunpack.c.h.b16 %v2352
  %v2517 = vunpack.c.l.b16 %v2353
  %v2518 = vunpack.c.h.b16 %v2353
  %v2519 = vunpack.c.l.b16 %v2354
  %v2520 = vunpack.c.h.b16 %v2354
  %v2521 = vunpack.c.l.b16 %v2355
  %v2522 = vunpack.c.h.b16 %v2355
  %v2523 = vunpack.c.l.b16 %v2356
  %v2524 = vunpack.c.h.b16 %v2356
  %v2525 = vunpack.c.l.b16 %v2357
  %v2526 = vunpack.c.h.b16 %v2357
  %v2527 = vunpack.c.l.b16 %v2358
  %v2528 = vunpack.c.h.b16 %v2358
  %v2529 = vunpack.c.l.b16 %v2359
  %v2530 = vunpack.c.h.b16 %v2359
  %v2531 = vunpack.c.l.b16 %v2360
  %v2532 = vunpack.c.h.b16 %v2360
  %v2533 = vunpack.c.l.b16 %v2361
  %v2534 = vunpack.c.h.b16 %v2361
  %v2535 = vunpack.c.l.b16 %v2362
  %v2536 = vunpack.c.h.b16 %v2362
  %v2537 = vunpack.c.l.b16 %v2363
  %v2538 = vunpack.c.h.b16 %v2363
  %v2539 = vunpack.c.l.b16 %v2364
  %v2540 = vunpack.c.h.b16 %v2364
  %v2541 = vunpack.c.l.b16 %v2365
  %v2542 = vunpack.c.h.b16 %v2365
  %v2543 = vunpack.c.l.b16 %v2366
  %v2544 = vunpack.c.h.b16 %v2366
  %v2545 = vunpack.c.l.b16 %v2367
  %v2546 = vunpack.c.h.b16 %v2367
  %v2547 = vunpack.c.l.b16 %v2368
  %v2548 = vunpack.c.h.b16 %v2368
  %v2549 = vunpack.c.l.b16 %v2369
  %v2550 = vunpack.c.h.b16 %v2369
  %v2551 = vunpack.c.l.b16 %v2370
  %v2552 = vunpack.c.h.b16 %v2370
  %v2553 = vunpack.c.l.b16 %v2371
  %v2554 = vunpack.c.h.b16 %v2371
  %v2555 = vunpack.c.l.b16 %v2372
  %v2556 = vunpack.c.h.b16 %v2372
  %v2557 = vunpack.c.l.b16 %v2373
  %v2558 = vunpack.c.h.b16 %v2373
  %v2559 = vunpack.c.l.b16 %v2374
  %v2560 = vunpack.c.h.b16 %v2374
  %v2561 = vunpack.c.l.b16 %v2375
  %v2562 = vunpack.c.h.b16 %v2375
  %v2563 = vunpack.c.l.b16 %v2376
  %v2564 = vunpack.c.h.b16 %v2376
  %v2565 = vunpack.c.l.b16 %v2377
  %v2566 = vunpack.c.h.b16 %v2377
  %v2567 = vunpack.c.l.b16 %v2378
  %v2568 = vunpack.c.h.b16 %v2378
  %v2569 = vunpack.c.l.b16 %v2379
  %v2570 = vunpack.c.h.b16 %v2379
  %v2571 = vunpack.c.l.b16 %v2380
  %v2572 = vunpack.c.h.b16 %v2380
  %v2573 = vpack.c.b16 %v2447, %v2445
  %v2574 = vpack.c.b16 %v2448, %v2446
  %v2575 = vpack.c.b16 %v2451, %v2449
  %v2576 = vpack.c.b16 %v2452, %v2450
  %v2577 = vpack.c.b16 %v2455, %v2453
  %v2578 = vpack.c.b16 %v2456, %v2454
  %v2579 = vpack.c.b16 %v2459, %v2457
  %v2580 = vpack.c.b16 %v2460, %v2458
  %v2581 = vpack.c.b16 %v2463, %v2461
  %v2582 = vpack.c.b16 %v2464, %v2462
  %v2583 = vpack.c.b16 %v2467, %v2465
  %v2584 = vpack.c.b16 %v2468, %v2466
  %v2585 = vpack.c.b16 %v2471, %v2469
  %v2586 = vpack.c.b16 %v2472, %v2470
  %v2587 = vpack.c.b16 %v2475, %v2473
  %v2588 = vpack.c.b16 %v2476, %v2474
  %v2589 = vpack.c.b16 %v2479, %v2477
  %v2590 = vpack.c.b16 %v2480, %v2478
  %v2591 = vpack.c.b16 %v2483, %v2481
  %v2592 = vpack.c.b16 %v2484, %v2482
  %v2593 = vpack.c.b16 %v2487, %v2485
  %v2594 = vpack.c.b16 %v2488, %v2486
  %v2595 = vpack.c.b16 %v2491, %v2489
  %v2596 = vpack.c.b16 %v2492, %v2490
  %v2597 = vpack.c.b16 %v2495, %v2493
  %v2598 = vpack.c.b16 %v2496, %v2494
  %v2599 = vpack.c.b16 %v2499, %v2497
  %v2600 = vpack.c.b16 %v2500, %v2498
  %v2601 = vpack.c.b16 %v2503, %v2501
  %v2602 = vpack.c.b16 %v2504, %v2502
  %v2603 = vpack.c.b16 %v2507, %v2505
  %v2604 = vpack.c.b16 %v2508, %v2506
  %v2605 = vpack.c.b16 %v2511, %v2509
  %v2606 = vpack.c.b16 %v2512, %v2510
  %v2607 = vpack.c.b16 %v2515, %v2513
  %v2608 = vpack.c.b16 %v2516, %v2514
  %v2609 = vpack.c.b16 %v2519, %v2517
  %v2610 = vpack.c.b16 %v2520, %v2518
  %v2611 = vpack.c.b16 %v2523, %v2521
  %v2612 = vpack.c.b16 %v2524, %v2522
  %v2613 = vpack.c.b16 %v2527, %v2525
  %v2614 = vpack.c.b16 %v2528, %v2526
  %v2615 = vpack.c.b16 %v2531, %v2529
  %v2616 = vpack.c.b16 %v2532, %v2530
  %v2617 = vpack.c.b16 %v2535, %v2533
  %v2618 = vpack.c.b16 %v2536, %v2534
  %v2619 = vpack.c.b16 %v2539, %v2537
  %v2620 = vpack.c.b16 %v2540, %v2538
  %v2621 = vpack.c.b16 %v2543, %v2541
  %v2622 = vpack.c.b16 %v2544, %v2542
  %v2623 = vpack.c.b16 %v2547, %v2545
  %v2624 = vpack.c.b16 %v2548, %v2546
  %v2625 = vpack.c.b16 %v2551, %v2549
  %v2626 = vpack.c.b16 %v2552, %v2550
  %v2627 = vpack.c.b16 %v2555, %v2553
  %v2628 = vpack.c.b16 %v2556, %v2554
  %v2629 = vpack.c.b16 %v2559, %v2557
  %v2630 = vpack.c.b16 %v2560, %v2558
  %v2631 = vpack.c.b16 %v2563, %v2561
  %v2632 = vpack.c.b16 %v2564, %v2562
  %v2633 = vpack.c.b16 %v2567, %v2565
  %v2634 = vpack.c.b16 %v2568, %v2566
  %v2635 = vpack.c.b16 %v2571, %v2569
  %v2636 = vpack.c.b16 %v2572, %v2570
  %2701 = vmatprep.subr.bf16.mxu0 %v2574
  %2702 = vmatpush1.bf16.msra.mxu0 %v2573
  %2703 = vmatprep.subr.bf16.mxu0 %v2576
  %2704 = vmatpush1.bf16.msra.mxu0 %v2575
  %2705 = vmatprep.subr.bf16.mxu0 %v2578
  %2706 = vmatpush1.bf16.msra.mxu0 %v2577
  %2707 = vmatprep.subr.bf16.mxu0 %v2580
  %2708 = vmatpush1.bf16.msra.mxu0 %v2579
  %2709 = vmatprep.subr.bf16.mxu0 %v2582
  %2710 = vmatpush1.bf16.msra.mxu0 %v2581
  %2711 = vmatprep.subr.bf16.mxu0 %v2584
  %2712 = vmatpush1.bf16.msra.mxu0 %v2583
  %2713 = vmatprep.subr.bf16.mxu0 %v2586
  %2714 = vmatpush1.bf16.msra.mxu0 %v2585
  %2715 = vmatprep.subr.bf16.mxu0 %v2588
  %2716 = vmatpush1.bf16.msra.mxu0 %v2587
  %2717 = vmatprep.subr.bf16.mxu0 %v2590
  %2718 = vmatpush1.bf16.msra.mxu0 %v2589
  %2719 = vmatprep.subr.bf16.mxu0 %v2592
  %2720 = vmatpush1.bf16.msra.mxu0 %v2591
  %2721 = vmatprep.subr.bf16.mxu0 %v2594
  %2722 = vmatpush1.bf16.msra.mxu0 %v2593
  %2723 = vmatprep.subr.bf16.mxu0 %v2596
  %2724 = vmatpush1.bf16.msra.mxu0 %v2595
  %2725 = vmatprep.subr.bf16.mxu0 %v2598
  %2726 = vmatpush1.bf16.msra.mxu0 %v2597
  %2727 = vmatprep.subr.bf16.mxu0 %v2600
  %2728 = vmatpush1.bf16.msra.mxu0 %v2599
  %2729 = vmatprep.subr.bf16.mxu0 %v2602
  %2730 = vmatpush1.bf16.msra.mxu0 %v2601
  %2731 = vmatprep.subr.bf16.mxu0 %v2604
  %2732 = vmatpush1.bf16.msra.mxu0 %v2603
  %2733 = vmatprep.mubr.bf16.mxu0 %v2314
  %2734 = vmatmul.mubr.bf16.gmra.mrb[0].mxu0 %v2313
  %v2735 = vpop.f32.mrb[0].mxu0
  %v2736 = vadd.f32 0.0, %v2735
  %v2737 = vpop.f32.mrb[0].mxu0
  %v2738 = vadd.f32 0.0, %v2737
  %v2739 = vpop.f32.mrb[0].mxu0
  %v2740 = vpop.f32.mrb[0].mxu0
  %2741 = vdwg.mxu0
  %2742 = vmatprep.subr.bf16.mxu0 %v2606
  %2743 = vmatpush1.bf16.msra.mxu0 %v2605
  %2744 = vmatprep.subr.bf16.mxu0 %v2608
  %2745 = vmatpush1.bf16.msra.mxu0 %v2607
  %2746 = vmatprep.subr.bf16.mxu0 %v2610
  %2747 = vmatpush1.bf16.msra.mxu0 %v2609
  %2748 = vmatprep.subr.bf16.mxu0 %v2612
  %2749 = vmatpush1.bf16.msra.mxu0 %v2611
  %2750 = vmatprep.subr.bf16.mxu0 %v2614
  %2751 = vmatpush1.bf16.msra.mxu0 %v2613
  %2752 = vmatprep.subr.bf16.mxu0 %v2616
  %2753 = vmatpush1.bf16.msra.mxu0 %v2615
  %2754 = vmatprep.subr.bf16.mxu0 %v2618
  %2755 = vmatpush1.bf16.msra.mxu0 %v2617
  %2756 = vmatprep.subr.bf16.mxu0 %v2620
  %2757 = vmatpush1.bf16.msra.mxu0 %v2619
  %2758 = vmatprep.subr.bf16.mxu0 %v2622
  %2759 = vmatpush1.bf16.msra.mxu0 %v2621
  %2760 = vmatprep.subr.bf16.mxu0 %v2624
  %2761 = vmatpush1.bf16.msra.mxu0 %v2623
  %2762 = vmatprep.subr.bf16.mxu0 %v2626
  %2763 = vmatpush1.bf16.msra.mxu0 %v2625
  %2764 = vmatprep.subr.bf16.mxu0 %v2628
  %2765 = vmatpush1.bf16.msra.mxu0 %v2627
  %2766 = vmatprep.subr.bf16.mxu0 %v2630
  %2767 = vmatpush1.bf16.msra.mxu0 %v2629
  %2768 = vmatprep.subr.bf16.mxu0 %v2632
  %2769 = vmatpush1.bf16.msra.mxu0 %v2631
  %2770 = vmatprep.subr.bf16.mxu0 %v2634
  %2771 = vmatpush1.bf16.msra.mxu0 %v2633
  %2772 = vmatprep.subr.bf16.mxu0 %v2636
  %2773 = vmatpush1.bf16.msra.mxu0 %v2635
  %2774 = vmatprep.mubr.bf16.mxu0 %v2316
  %2775 = vmatmul.mubr.bf16.gmra.mrb[0].mxu0 %v2315
  %v2776 = vpop.f32.mrb[0].mxu0
  %v2777 = vadd.f32 %v2736, %v2776
  %v2778 = vpop.f32.mrb[0].mxu0
  %v2779 = vadd.f32 %v2738, %v2778
  %v2780 = vpop.f32.mrb[0].mxu0
  %v2781 = vpop.f32.mrb[0].mxu0
  %2782 = vdwg.mxu0
  %v2783 = vsel %vm2103, %v2777, 0.0
  %v2784 = vrot.slane %v2783, 4
  %v2785 = vadd.f32 %v2783, %v2784
  %v2786 = vrot.slane %v2785, 2
  %v2787 = vadd.f32 %v2785, %v2786
  %v2788 = vrot.slane %v2787, 1
  %v2789 = vadd.f32 %v2787, %v2788
  %v2790 = vsel %vm2103, %v2779, 0.0
  %v2791 = vrot.slane %v2790, 4
  %v2792 = vadd.f32 %v2790, %v2791
  %v2793 = vrot.slane %v2792, 2
  %v2794 = vadd.f32 %v2792, %v2793
  %v2795 = vrot.slane %v2794, 1
  %v2796 = vadd.f32 %v2794, %v2795
  %v2797 = vmul.f32 %v2789, %v2132
  %v2798 = vmul.f32 %v2796, %v2132
  %v2799 = vmul.f32 %v2777, %v2777
  %v2800 = vmul.f32 %v2779, %v2779
  %v2801 = vsel %vm2103, %v2799, 0.0
  %v2802 = vrot.slane %v2801, 4
  %v2803 = vadd.f32 %v2801, %v2802
  %v2804 = vrot.slane %v2803, 2
  %v2805 = vadd.f32 %v2803, %v2804
  %v2806 = vrot.slane %v2805, 1
  %v2807 = vadd.f32 %v2805, %v2806
  %v2808 = vsel %vm2103, %v2800, 0.0
  %v2809 = vrot.slane %v2808, 4
  %v2810 = vadd.f32 %v2808, %v2809
  %v2811 = vrot.slane %v2810, 2
  %v2812 = vadd.f32 %v2810, %v2811
  %v2813 = vrot.slane %v2812, 1
  %v2814 = vadd.f32 %v2812, %v2813
  %v2815 = vmul.f32 %v2807, %v2132
  %v2816 = vmul.f32 %v2814, %v2132
  %v2817 = vmul.f32 %v2797, %v2797
  %v2818 = vmul.f32 %v2798, %v2798
  %v2819 = vsub.f32 %v2815, %v2817
  %v2820 = vsub.f32 %v2816, %v2818
  %v2821 = vmax.f32 %v2819, 0.0
  %v2822 = vmax.f32 %v2820, 0.0
  %v2823 = vld [vmem:[%s8] sm:$0x3]
  %v2824 = vadd.f32 %v2821, 1e-05
  %v2825 = vadd.f32 %v2822, 1e-05
  %v2826 = vrsqrt.pop %v2824
  %v2827 = vrsqrt.pop %v2825
  %v2830 = vcombine.low %v2826, %v2827
  %v2832 = vunpack.c.l.s4 1966171168
  %v2833 = vunpack.c.0.s8 %v2832
  %v2834 = vlaneseq
  %v2835 = vshrl.u32 %v2834, 7
  %v2836 = vsub.s32 %v2833, %v2835
  %v2837 = vrot.slane %v2830, %v2836
  %v2839 = vunpack.c.l.s4 1966171168
  %v2840 = vunpack.c.0.s8 %v2839
  %v2841 = vlaneseq
  %v2842 = vshrl.u32 %v2841, 7
  %v2843 = vsub.s32 %v2840, %v2842
  %v2844 = vrot.slane %v2837, %v2843
  %v2846 = vmul.f32 %v2823, %v2844
  %v2847 = vld [vmem:[%s9] sm:$0x3]
  %v2849 = vlaneseq
  %v2850 = vshrl.u32 %v2849, 7
  %v2851 = vsub.s32 0, %v2850
  %v2852 = vrot.slane %v2846, %v2851
  %v2853 = vlaneseq
  %v2854 = vshrl.u32 %v2853, 7
  %v2855 = vsub.s32 1, %v2854
  %v2856 = vrot.slane %v2846, %v2855
  %v2859 = vmul.f32 %v2797, %v2852
  %v2860 = vmul.f32 %v2798, %v2856
  %v2863 = vcombine.low %v2859, %v2860
  %v2865 = vunpack.c.l.s4 1966171168
  %v2866 = vunpack.c.0.s8 %v2865
  %v2867 = vlaneseq
  %v2868 = vshrl.u32 %v2867, 7
  %v2869 = vsub.s32 %v2866, %v2868
  %v2870 = vrot.slane %v2863, %v2869
  %v2872 = vunpack.c.l.s4 1966171168
  %v2873 = vunpack.c.0.s8 %v2872
  %v2874 = vlaneseq
  %v2875 = vshrl.u32 %v2874, 7
  %v2876 = vsub.s32 %v2873, %v2875
  %v2877 = vrot.slane %v2870, %v2876
  %v2879 = vsub.f32 %v2847, %v2877
  %v2880 = vmul.f32 %v2777, %v2852
  %v2881 = vmul.f32 %v2779, %v2856
  %v2883 = vlaneseq
  %v2884 = vshrl.u32 %v2883, 7
  %v2885 = vsub.s32 0, %v2884
  %v2886 = vrot.slane %v2879, %v2885
  %v2887 = vlaneseq
  %v2888 = vshrl.u32 %v2887, 7
  %v2889 = vsub.s32 1, %v2888
  %v2890 = vrot.slane %v2879, %v2889
  %v2893 = vadd.f32 %v2880, %v2886
  %v2894 = vadd.f32 %v2881, %v2890
  %v2895 = vmax.f32 %v2893, 0.0
  %v2896 = vmax.f32 %v2894, 0.0
  %v2897 = vld [vmem:[%s10] sm:$0xff]
  %v2898 = vld [vmem:[%s10 + $0x8] sm:$0xff]
  %v2899 = vld [vmem:[%s10 + $0x10] sm:$0xff]
  %v2900 = vld [vmem:[%s10 + $0x18] sm:$0xff]
  %v2901 = vld [vmem:[%s10 + $0x20] sm:$0xff]
  %v2902 = vld [vmem:[%s10 + $0x28] sm:$0xff]
  %v2903 = vld [vmem:[%s10 + $0x30] sm:$0xff]
  %v2904 = vld [vmem:[%s10 + $0x38] sm:$0xff]
  %v2905 = vld [vmem:[%s10 + $0x40] sm:$0xff]
  %v2906 = vld [vmem:[%s10 + $0x48] sm:$0xff]
  %v2907 = vld [vmem:[%s10 + $0x50] sm:$0xff]
  %v2908 = vld [vmem:[%s10 + $0x58] sm:$0xff]
  %v2909 = vld [vmem:[%s10 + $0x60] sm:$0xff]
  %v2910 = vld [vmem:[%s10 + $0x68] sm:$0xff]
  %v2911 = vld [vmem:[%s10 + $0x70] sm:$0xff]
  %v2912 = vld [vmem:[%s10 + $0x78] sm:$0xff]
  %v2913 = vld [vmem:[%s10 + $0x80] sm:$0xff]
  %v2914 = vld [vmem:[%s10 + $0x88] sm:$0xff]
  %v2915 = vld [vmem:[%s10 + $0x90] sm:$0xff]
  %v2916 = vld [vmem:[%s10 + $0x98] sm:$0xff]
  %v2917 = vld [vmem:[%s10 + $0xa0] sm:$0xff]
  %v2918 = vld [vmem:[%s10 + $0xa8] sm:$0xff]
  %v2919 = vld [vmem:[%s10 + $0xb0] sm:$0xff]
  %v2920 = vld [vmem:[%s10 + $0xb8] sm:$0xff]
  %v2921 = vld [vmem:[%s10 + $0xc0] sm:$0xff]
  %v2922 = vld [vmem:[%s10 + $0xc8] sm:$0xff]
  %v2923 = vld [vmem:[%s10 + $0xd0] sm:$0xff]
  %v2924 = vld [vmem:[%s10 + $0xd8] sm:$0xff]
  %v2925 = vld [vmem:[%s10 + $0xe0] sm:$0xff]
  %v2926 = vld [vmem:[%s10 + $0xe8] sm:$0xff]
  %v2927 = vld [vmem:[%s10 + $0xf0] sm:$0xff]
  %v2928 = vld [vmem:[%s10 + $0xf8] sm:$0xff]
  %v2929 = vld [vmem:[%s11] sm:$0x1]
  %v2931 = vlaneseq
  %v2932 = vshrl.u32 %v2931, 7
  %v2933 = vsub.s32 0, %v2932
  %v2934 = vrot.slane %v2929, %v2933
  %2936 = vmatprep.subr.mxu0 0.0
  %2937 = vmatpush1.msra.mxu0 %v2897
  %2938 = vmatprep.subr.mxu0 0.0
  %2939 = vmatpush1.msra.mxu0 %v2898
  %2940 = vmatprep.subr.mxu0 0.0
  %2941 = vmatpush1.msra.mxu0 %v2899
  %2942 = vmatprep.subr.mxu0 0.0
  %2943 = vmatpush1.msra.mxu0 %v2900
  %2944 = vmatprep.subr.mxu0 0.0
  %2945 = vmatpush1.msra.mxu0 %v2901
  %2946 = vmatprep.subr.mxu0 0.0
  %2947 = vmatpush1.msra.mxu0 %v2902
  %2948 = vmatprep.subr.mxu0 0.0
  %2949 = vmatpush1.msra.mxu0 %v2903
  %2950 = vmatprep.subr.mxu0 0.0
  %2951 = vmatpush1.msra.mxu0 %v2904
  %2952 = vmatprep.subr.mxu0 0.0
  %2953 = vmatpush1.msra.mxu0 %v2905
  %2954 = vmatprep.subr.mxu0 0.0
  %2955 = vmatpush1.msra.mxu0 %v2906
  %2956 = vmatprep.subr.mxu0 0.0
  %2957 = vmatpush1.msra.mxu0 %v2907
  %2958 = vmatprep.subr.mxu0 0.0
  %2959 = vmatpush1.msra.mxu0 %v2908
  %2960 = vmatprep.subr.mxu0 0.0
  %2961 = vmatpush1.msra.mxu0 %v2909
  %2962 = vmatprep.subr.mxu0 0.0
  %2963 = vmatpush1.msra.mxu0 %v2910
  %2964 = vmatprep.subr.mxu0 0.0
  %2965 = vmatpush1.msra.mxu0 %v2911
  %2966 = vmatprep.subr.mxu0 0.0
  %2967 = vmatpush1.msra.mxu0 %v2912
  %2968 = vmatprep.subr.mxu0 0.0
  %2969 = vmatpush1.msra.mxu0 %v2913
  %2970 = vmatprep.subr.mxu0 0.0
  %2971 = vmatpush1.msra.mxu0 %v2914
  %2972 = vmatprep.subr.mxu0 0.0
  %2973 = vmatpush1.msra.mxu0 %v2915
  %2974 = vmatprep.subr.mxu0 0.0
  %2975 = vmatpush1.msra.mxu0 %v2916
  %2976 = vmatprep.subr.mxu0 0.0
  %2977 = vmatpush1.msra.mxu0 %v2917
  %2978 = vmatprep.subr.mxu0 0.0
  %2979 = vmatpush1.msra.mxu0 %v2918
  %2980 = vmatprep.subr.mxu0 0.0
  %2981 = vmatpush1.msra.mxu0 %v2919
  %2982 = vmatprep.subr.mxu0 0.0
  %2983 = vmatpush1.msra.mxu0 %v2920
  %2984 = vmatprep.subr.mxu0 0.0
  %2985 = vmatpush1.msra.mxu0 %v2921
  %2986 = vmatprep.subr.mxu0 0.0
  %2987 = vmatpush1.msra.mxu0 %v2922
  %2988 = vmatprep.subr.mxu0 0.0
  %2989 = vmatpush1.msra.mxu0 %v2923
  %2990 = vmatprep.subr.mxu0 0.0
  %2991 = vmatpush1.msra.mxu0 %v2924
  %2992 = vmatprep.subr.mxu0 0.0
  %2993 = vmatpush1.msra.mxu0 %v2925
  %2994 = vmatprep.subr.mxu0 0.0
  %2995 = vmatpush1.msra.mxu0 %v2926
  %2996 = vmatprep.subr.mxu0 0.0
  %2997 = vmatpush1.msra.mxu0 %v2927
  %2998 = vmatprep.subr.mxu0 0.0
  %2999 = vmatpush1.msra.mxu0 %v2928
  %3000 = vmatprep.mubr.f32.mxu0 %v2896
  %3001 = vmatmul.mubr.f32.gmra.mrb[0].mxu0 %v2895
  %v3002 = vpop.f32.mrb[0].mxu0
  %v3003 = vadd.f32 %v2934, %v3002
  %v3004 = vpop.f32.mrb[0].mxu0
  %3005 = vdwg.mxu0
  %vm3006 = vcmask 125952
  %3007 = vst.msk [vmem:[%s12] sm:$0xf] %vm3006, %v3003
  // Predicated region
  $region50: #{tnet_forward.7} parent=0 // pred_check
    _
  $region51: #{tnet_forward.7} parent=0 // pred_check_branch
    %3009 = sbr.rel (0) target = $region53
  $region52: #{tnet_forward.7} parent=0 // pred_region
    _
  $region53: #{tnet_forward.7} parent=0 // pred_fallthru
    _
  // Predicated region
  $region54: #{tnet_forward.7} parent=0 // pred_check
    _
  $region55: #{tnet_forward.7} parent=0 // pred_check_branch
    %3011 = sbr.rel (0) target = $region57
  $region56: #{tnet_forward.7} parent=0 // pred_region
    _
  $region57: #{tnet_forward.7} parent=0 // pred_fallthru
    _

</llo_original>
